<compile_context>
chip_gen: v5e
topology: v5e:2x2
jax: 0.10.0
libtpu: 0.0.40
codegen_flags: <defaults>
</compile_context>

<pallas_src>
import functools

import jax
import jax.numpy as jnp
import numpy as np
from jax.experimental import pallas as pl
from jax.experimental.pallas import tpu as pltpu

_BN_EPS = 1e-5


# ----------------------------------------------------------------------------
# pltpu.roll rotation-direction probe (hardware truth, guarded).
# ----------------------------------------------------------------------------
def _roll_probe_kernel(x_ref, o_ref):
    o_ref[...] = pltpu.roll(x_ref[...], shift=1, axis=1)


@functools.lru_cache(maxsize=None)
def _roll_matches_jnp() -> bool:
    """True -> pltpu.roll(x, s, ax) == jnp.roll(x, s, ax); False -> opposite."""
    try:
        x = jnp.arange(8 * 128, dtype=jnp.float32).reshape(8, 128)
        y = pl.pallas_call(
            _roll_probe_kernel,
            out_shape=jax.ShapeDtypeStruct((8, 128), jnp.float32),
        )(x)
        return bool(jax.device_get(y)[0, 1] == 0.0)
    except Exception:                      # AOT / CPU-only trace environments
        return True                        # current Mosaic == jnp.roll convention


# ----------------------------------------------------------------------------
# The fused EAM kernel (one grid step == one block of `bb` images).
# Layout: channel-major (C, bb*H*W); the batched pixel axis sits on lanes.
# ----------------------------------------------------------------------------
def _eam_kernel(x1_ref, x4_ref, w_ref, b_ref, mask_ref, o_ref,
                cat_ref, y4s_ref, *, width, p_img, p4_img, bb, roll_is_jnp):
    f32, bf16 = jnp.float32, jnp.bfloat16
    lanes = bb * p_img                       # batched lane width (mult. of 256)

    def bdot(a, b):                          # bf16 MXU matmul, f32 accumulation
        return jnp.dot(a.astype(bf16), b.astype(bf16),
                       preferred_element_type=f32)

    # ---- unpack the two constant slabs (each DMA'd once) -------------------
    w_r1 = w_ref[0:8, 0:8]                   # 1x1 conv  8 ->  8 (BN folded)
    w_r4 = w_ref[8:40, 0:64]                 # 1x1 conv 64 -> 32 (BN folded)
    w_c1 = w_ref[40:56, 0:360]               # 3x3 conv 40 -> 16, im2col layout
    w_c2 = w_ref[56:72, 0:144]               # 3x3 conv 16 -> 16, im2col layout
    up_bf = w_ref[72:136, 0:256].astype(bf16)  # (64,256) bilinear matrix
    b_r1 = b_ref[0:8]
    b_r4 = b_ref[8:40]
    b_c1 = b_ref[40:56]
    b_c2 = b_ref[56:72]
    w_p = b_ref[72:88]                       # final 1x1 conv weight, (16,1)
    b_p = b_ref[88:89]                       # final bias, (1,1)

    def im2col_3x3(x):
        """(C, lanes) -> (9C, lanes): 8 lane-rolls + boundary masks, (ky,kx) order.

        The tap masks zero every position whose 3x3 source pixel falls outside
        its own image -- exactly the positions where the circular roll wraps
        across a row / image boundary, so lane-axis batching stays correct."""
        slabs = []
        tap = 0
        for dy in (-1, 0, 1):
            for dx in (-1, 0, 1):
                if dy == 0 and dx == 0:
                    slabs.append(x)                        # centre tap
                else:
                    src_off = dy * width + dx              # flat read offset
                    shift = (-src_off if roll_is_jnp else src_off) % lanes
                    slabs.append(pltpu.roll(x, shift=shift, axis=1)
                                 * mask_ref[tap:tap + 1, :])
                tap += 1
        return jnp.concatenate(slabs, axis=0)

    # reduce1: 1x1 conv(8->8) + folded BN + ReLU  -> rows 32:40 of `cat`
    cat_ref[32:40, :] = jnp.maximum(bdot(w_r1, x1_ref[...]) + b_r1, 0.0)

    # reduce4: 1x1 conv(64->32) + folded BN + ReLU on the low-res maps
    y4s_ref[...] = jnp.maximum(bdot(w_r4, x4_ref[...]) + b_r4, 0.0)

    # bilinear 2x upsample (align_corners=False) as a constant-matrix matmul,
    # done per image so images never mix; written straight into `cat`.
    for bi in range(bb):
        y4b = y4s_ref[:, bi * p4_img:(bi + 1) * p4_img]          # (32, 64)
        cat_ref[0:32, bi * p_img:(bi + 1) * p_img] = jnp.dot(
            y4b.astype(bf16), up_bf, preferred_element_type=f32)

    cat = cat_ref[...]                                            # (40, lanes)

    # block[0]: 3x3 conv(40->16) + BN + ReLU as one fat matmul (16,360)@(360,lanes)
    h = jnp.maximum(bdot(w_c1, im2col_3x3(cat)) + b_c1, 0.0)
    # block[1]: 3x3 conv(16->16) + BN + ReLU                  (16,144)@(144,lanes)
    h = jnp.maximum(bdot(w_c2, im2col_3x3(h)) + b_c2, 0.0)
    # block[2]: 1x1 conv(16->1) + bias: VPU multiply + sublane reduce -> lane-dense
    o_ref[...] = (jnp.sum(h * w_p, axis=0, keepdims=True) + b_p).astype(o_ref.dtype)


# ----------------------------------------------------------------------------
# Trace-time constants & BN folding.
# ----------------------------------------------------------------------------
def _src_coords(out_size, in_size):
    """PyTorch align_corners=False source coordinates for 1-D interpolation."""
    i = jnp.arange(out_size, dtype=jnp.float32)
    src = jnp.maximum((i + 0.5) * (in_size / out_size) - 0.5, 0.0)
    i0 = jnp.minimum(jnp.floor(src).astype(jnp.int32), in_size - 1)
    i1 = jnp.minimum(i0 + 1, in_size - 1)
    return i0, i1, src - i0.astype(jnp.float32)


def _interp_matrix_1d(out_size, in_size):
    i0, i1, frac = _src_coords(out_size, in_size)
    rows = jnp.arange(in_size)[:, None]
    return ((rows == i0[None, :]) * (1.0 - frac)[None, :]
            + (rows == i1[None, :]) * frac[None, :]).astype(jnp.float32)


def _upsample_matrix(in_hw, out_hw):
    """(in_h*in_w, out_h*out_w) bilinear matrix for row-major flattened maps."""
    return jnp.kron(_interp_matrix_1d(out_hw[0], in_hw[0]),
                    _interp_matrix_1d(out_hw[1], in_hw[1]))


def _tap_masks(h, w):
    """(9, h*w) zero-padding masks for the 3x3 taps, (ky, kx) order."""
    p = jnp.arange(h * w)
    ii, jj = p // w, p % w
    rows = []
    for dy in (-1, 0, 1):
        for dx in (-1, 0, 1):
            ok = (ii + dy >= 0) & (ii + dy < h) & (jj + dx >= 0) & (jj + dx < w)
            rows.append(ok.astype(jnp.float32))
    return jnp.stack(rows)


def _fold_bn(w2d, conv_bias, bn):
    """Fold inference BatchNorm into a (Cout, K) weight and (Cout, 1) bias."""
    gamma, beta, mean, var = bn
    s = gamma * jax.lax.rsqrt(var + _BN_EPS)
    b = beta - mean * s
    if conv_bias is not None:
        b = b + conv_bias * s
    return w2d * s[:, None], b[:, None]


# ----------------------------------------------------------------------------
# Fused forward (wrapper).
# ----------------------------------------------------------------------------
def make_eam_forward(max_block=8):
    # max_block can be raised on v6e (128 MiB VMEM); 8 is safe on v5e/v7x.
    max_block = max(2, 2 * (max_block // 2))        # even, >= 2
    roll_is_jnp = _roll_matches_jnp()

    @jax.jit
    def eam_forward(x4_nchw, x1_nchw, params):
        n, c4, h4, w4 = x4_nchw.shape
        _, c1, h, w = x1_nchw.shape
        p4, p1 = h4 * w4, h * w

        # ---- batch blocking: bb images per grid step on the lane axis ------
        half = -(-n // 2)                           # keep >= 2 grid blocks
        bb = min(max_block, max(2, half + (half % 2)))
        nblk = -(-n // bb)
        n_pad = nblk * bb

        # channel-major, batch folded into the lane axis: (C, n_pad * P), bf16
        # (one fused XLA pad+transpose+cast pass over tiny inputs; the bf16
        #  cast halves the kernel's input DMA bytes).
        def to_lanes(x, c, p):
            x = jnp.pad(x, ((0, n_pad - n), (0, 0), (0, 0), (0, 0)))
            return (x.reshape(n_pad, c, p).transpose(1, 0, 2)
                    .reshape(c, n_pad * p).astype(jnp.bfloat16))

        x1f = to_lanes(x1_nchw, c1, p1)
        x4f = to_lanes(x4_nchw, c4, p4)

        # ---- trace-time constants ------------------------------------------
        up = _upsample_matrix((h4, w4), (h, w))            # (p4, p1)
        masks = jnp.tile(_tap_masks(h, w), (1, bb))        # (9, bb*p1)

        # ---- fold BN + pack the constants into TWO arrays --------------------
        w_r1, b_r1 = _fold_bn(params["r1_w"], params["r1_b"], params["r1_bn"])
        w_r4, b_r4 = _fold_bn(params["r4_w"], params["r4_b"], params["r4_bn"])

        def im2col_weight(w_oihw):
            co, ci = w_oihw.shape[0], w_oihw.shape[1]
            return jnp.transpose(w_oihw, (0, 2, 3, 1)).reshape(co, 9 * ci)

        w_c1, b_c1 = _fold_bn(im2col_weight(params["b1_w"]), None, params["b1_bn"])
        w_c2, b_c2 = _fold_bn(im2col_weight(params["b2_w"]), None, params["b2_bn"])

        wpack = jnp.zeros((136, 360), jnp.float32)
        wpack = wpack.at[0:8, 0:8].set(w_r1)
        wpack = wpack.at[8:40, 0:64].set(w_r4)
        wpack = wpack.at[40:56, 0:360].set(w_c1)
        wpack = wpack.at[56:72, 0:144].set(w_c2)
        wpack = wpack.at[72:136, 0:256].set(up)

        bpack = jnp.concatenate(
            [b_r1, b_r4, b_c1, b_c2,
             jnp.transpose(params["b3_w"]),                # (16,1) final weight
             params["b3_b"].reshape(1, 1)], axis=0)        # (89, 1)

        lane_blk1, lane_blk4 = bb * p1, bb * p4

        out = pl.pallas_call(
            functools.partial(_eam_kernel, width=w, p_img=p1, p4_img=p4,
                              bb=bb, roll_is_jnp=roll_is_jnp),
            out_shape=jax.ShapeDtypeStruct((1, n_pad * p1), jnp.float32),
            grid=(nblk,),
            in_specs=[
                pl.BlockSpec((c1, lane_blk1), lambda i: (0, i)),
                pl.BlockSpec((c4, lane_blk4), lambda i: (0, i)),
                pl.BlockSpec(wpack.shape, lambda i: (0, 0)),
                pl.BlockSpec(bpack.shape, lambda i: (0, 0)),
                pl.BlockSpec(masks.shape, lambda i: (0, 0)),
            ],
            out_specs=pl.BlockSpec((1, lane_blk1), lambda i: (0, i)),
            scratch_shapes=[
                pltpu.VMEM((40, lane_blk1), jnp.float32),   # cat(x4_up, x1)
                pltpu.VMEM((32, lane_blk4), jnp.float32),   # reduced x4 (8x8)
            ],
            compiler_params=pltpu.CompilerParams(
                dimension_semantics=("parallel",),
                vmem_limit_bytes=32 * 1024 * 1024),
        )(x1f, x4f, wpack, bpack, masks)

        out = out.reshape(1, n_pad, h, w).transpose(1, 0, 2, 3)[:n]
        return out

    return eam_forward


# ----------------------------------------------------------------------------
# Pure-JAX/XLA reference (NCHW, f32) for correctness checking.
# ----------------------------------------------------------------------------
def _bn_relu_ref(x, bn, relu=True):
    gamma, beta, mean, var = bn
    s = gamma * jax.lax.rsqrt(var + _BN_EPS)
    y = (x - mean[None, :, None, None]) * s[None, :, None, None] \
        + beta[None, :, None, None]
    return jnp.maximum(y, 0.0) if relu else y


def _conv_ref(x, w_oihw, bias=None, padding=0):
    y = jax.lax.conv_general_dilated(
        x, w_oihw, window_strides=(1, 1),
        padding=[(padding, padding), (padding, padding)],
        dimension_numbers=("NCHW", "OIHW", "NCHW"),
        precision=jax.lax.Precision.HIGHEST)
    if bias is not None:
        y = y + bias[None, :, None, None]
    return y


def _bilinear_ref(x, out_h, out_w):
    """F.interpolate(mode='bilinear', align_corners=False) on NCHW."""
    _, _, in_h, in_w = x.shape
    y0, y1, wy = _src_coords(out_h, in_h)
    x0, x1, wx = _src_coords(out_w, in_w)
    rows = (x[:, :, y0, :] * (1.0 - wy)[None, None, :, None]
            + x[:, :, y1, :] * wy[None, None, :, None])
    return rows[:, :, :, x0] * (1.0 - wx) + rows[:, :, :, x1] * wx


def eam_reference(x4, x1, p):
    y1 = _bn_relu_ref(_conv_ref(x1, p["r1_w"][:, :, None, None], p["r1_b"]),
                      p["r1_bn"])
    y4 = _bn_relu_ref(_conv_ref(x4, p["r4_w"][:, :, None, None], p["r4_b"]),
                      p["r4_bn"])
    y4 = _bilinear_ref(y4, x1.shape[2], x1.shape[3])
    h = jnp.concatenate([y4, y1], axis=1)
    h = _bn_relu_ref(_conv_ref(h, p["b1_w"], padding=1), p["b1_bn"])
    h = _bn_relu_ref(_conv_ref(h, p["b2_w"], padding=1), p["b2_bn"])
    return _conv_ref(h, p["b3_w"][:, :, None, None], p["b3_b"])


# ----------------------------------------------------------------------------
# Deterministic synthetic parameters (torch-like layouts).
# ----------------------------------------------------------------------------
def make_params(key):
    ks = iter(jax.random.split(key, 32))

    def bn(c):
        return (1.0 + 0.1 * jax.random.normal(next(ks), (c,)),
                0.1 * jax.random.normal(next(ks), (c,)),
                0.1 * jax.random.normal(next(ks), (c,)),
                0.5 + jnp.abs(jax.random.normal(next(ks), (c,))))

    p = {}
    p["r1_w"] = 0.2 * jax.random.normal(next(ks), (8, 8))          # (Cout, Cin)
    p["r1_b"] = 0.1 * jax.random.normal(next(ks), (8,))
    p["r1_bn"] = bn(8)
    p["r4_w"] = 0.1 * jax.random.normal(next(ks), (32, 64))
    p["r4_b"] = 0.1 * jax.random.normal(next(ks), (32,))
    p["r4_bn"] = bn(32)
    p["b1_w"] = 0.1 * jax.random.normal(next(ks), (16, 40, 3, 3))   # OIHW
    p["b1_bn"] = bn(16)
    p["b2_w"] = 0.1 * jax.random.normal(next(ks), (16, 16, 3, 3))
    p["b2_bn"] = bn(16)
    p["b3_w"] = 0.2 * jax.random.normal(next(ks), (1, 16))
    p["b3_b"] = 0.1 * jax.random.normal(next(ks), (1,))
    return p


if __name__ == "__main__":
    key = jax.random.PRNGKey(0)
    k4, k1, kp = jax.random.split(key, 3)

    # x4: deep features (N, 64, 8, 8); x1: shallow features (N, 8, 16, 16).
    # N=8 -> block of 4 images per grid step, 2 grid blocks (both v7x TCs busy).
    n = 8
    x4 = jax.random.normal(k4, (n, 64, 8, 8), jnp.float32)
    x1 = jax.random.normal(k1, (n, 8, 16, 16), jnp.float32)
    params = make_params(kp)

    eam_forward = make_eam_forward()
    out = jax.block_until_ready(eam_forward(x4, x1, params))
    assert out.shape == (n, 1, 16, 16), out.shape

    ref = jax.block_until_ready(jax.jit(eam_reference)(x4, x1, params))
    np.testing.assert_allclose(np.asarray(out), np.asarray(ref),
                               rtol=2e-2, atol=2e-2)
    print("KERNEL_OK")
</pallas_src>

<mosaic_0001>
module attributes {stable_mosaic.version = 11 : i64} {
  func.func @_roll_probe_kernel(%arg0: memref<8x128xf32, #tpu.memory_space<vmem>>, %arg1: memref<8x128xf32, #tpu.memory_space<vmem>>) attributes {dimension_semantics = [], scalar_prefetch = 0 : i64, scratch_operands = 0 : i64, tpu.core_type = #tpu.core_type<tc>} {
    %c0 = arith.constant 0 : index
    %c0_0 = arith.constant 0 : index
    %0 = vector.load %arg0[%c0, %c0_0] : memref<8x128xf32, #tpu.memory_space<vmem>>, vector<8x128xf32>
    %c1_i32 = arith.constant 1 : i32
    %1 = tpu.dynamic_rotate %0 by %c1_i32 dim 1 : vector<8x128xf32>, i32 -> vector<8x128xf32>
    %c0_1 = arith.constant 0 : index
    %c0_2 = arith.constant 0 : index
    %2 = vector.load %arg1[%c0_1, %c0_2] : memref<8x128xf32, #tpu.memory_space<vmem>>, vector<8x128xf32>
    tpu.vector_store %arg1[%c0_1, %c0_2], %1 {strides = array<i32>} : memref<8x128xf32, #tpu.memory_space<vmem>>, vector<8x128xf32>,
    return
  }
}

module attributes {stable_mosaic.version = 11 : i64} {
  func.func @_eam_kernel(%arg0: i32, %arg1: memref<8x1024xbf16, #tpu.memory_space<vmem>>, %arg2: memref<64x256xbf16, #tpu.memory_space<vmem>>, %arg3: memref<136x360xf32, #tpu.memory_space<vmem>>, %arg4: memref<89x1xf32, #tpu.memory_space<vmem>>, %arg5: memref<9x1024xf32, #tpu.memory_space<vmem>>, %arg6: memref<1x1024xf32, #tpu.memory_space<vmem>>, %arg7: memref<40x1024xf32, #tpu.memory_space<vmem>>, %arg8: memref<32x256xf32, #tpu.memory_space<vmem>>) attributes {dimension_semantics = [#tpu.dimension_semantics<parallel>], iteration_bounds = array<i64: 2>, scalar_prefetch = 0 : i64, scratch_operands = 2 : i64, tpu.core_type = #tpu.core_type<tc>, window_params = [{transform_indices = @transform_0, window_bounds = array<i64: 8, 1024>}, {transform_indices = @transform_1, window_bounds = array<i64: 64, 256>}, {pipeline_mode = #tpu.pipeline_mode<synchronous>, transform_indices = @transform_2, window_bounds = array<i64: 136, 360>}, {pipeline_mode = #tpu.pipeline_mode<synchronous>, transform_indices = @transform_3, window_bounds = array<i64: 89, 1>}, {pipeline_mode = #tpu.pipeline_mode<synchronous>, transform_indices = @transform_4, window_bounds = array<i64: 9, 1024>}, {transform_indices = @transform_5, window_bounds = array<i64: 1, 1024>}]} {
    %c0 = arith.constant 0 : index
    %c0_0 = arith.constant 0 : index
    %0 = vector.load %arg3[%c0, %c0_0] : memref<136x360xf32, #tpu.memory_space<vmem>>, vector<8x8xf32>
    %c8 = arith.constant 8 : index
    %c0_1 = arith.constant 0 : index
    %1 = vector.load %arg3[%c8, %c0_1] : memref<136x360xf32, #tpu.memory_space<vmem>>, vector<32x64xf32>
    %c40 = arith.constant 40 : index
    %c0_2 = arith.constant 0 : index
    %2 = vector.load %arg3[%c40, %c0_2] : memref<136x360xf32, #tpu.memory_space<vmem>>, vector<16x360xf32>
    %c56 = arith.constant 56 : index
    %c0_3 = arith.constant 0 : index
    %3 = vector.load %arg3[%c56, %c0_3] : memref<136x360xf32, #tpu.memory_space<vmem>>, vector<16x144xf32>
    %c72 = arith.constant 72 : index
    %c0_4 = arith.constant 0 : index
    %4 = vector.load %arg3[%c72, %c0_4] : memref<136x360xf32, #tpu.memory_space<vmem>>, vector<64x256xf32>
    %5 = arith.truncf %4 : vector<64x256xf32> to vector<64x256xbf16>
    %c0_5 = arith.constant 0 : index
    %c0_6 = arith.constant 0 : index
    %6 = vector.load %arg4[%c0_5, %c0_6] : memref<89x1xf32, #tpu.memory_space<vmem>>, vector<8x1xf32>
    %c8_7 = arith.constant 8 : index
    %c0_8 = arith.constant 0 : index
    %7 = vector.load %arg4[%c8_7, %c0_8] : memref<89x1xf32, #tpu.memory_space<vmem>>, vector<32x1xf32>
    %c40_9 = arith.constant 40 : index
    %c0_10 = arith.constant 0 : index
    %8 = vector.load %arg4[%c40_9, %c0_10] : memref<89x1xf32, #tpu.memory_space<vmem>>, vector<16x1xf32>
    %c56_11 = arith.constant 56 : index
    %c0_12 = arith.constant 0 : index
    %9 = vector.load %arg4[%c56_11, %c0_12] : memref<89x1xf32, #tpu.memory_space<vmem>>, vector<16x1xf32>
    %c72_13 = arith.constant 72 : index
    %c0_14 = arith.constant 0 : index
    %10 = vector.load %arg4[%c72_13, %c0_14] : memref<89x1xf32, #tpu.memory_space<vmem>>, vector<16x1xf32>
    %c88 = arith.constant 88 : index
    %c0_15 = arith.constant 0 : index
    %11 = vector.load %arg4[%c88, %c0_15] : memref<89x1xf32, #tpu.memory_space<vmem>>, vector<1x1xf32>
    %c0_16 = arith.constant 0 : index
    %c0_17 = arith.constant 0 : index
    %12 = vector.load %arg1[%c0_16, %c0_17] : memref<8x1024xbf16, #tpu.memory_space<vmem>>, vector<8x1024xbf16>
    %13 = arith.truncf %0 : vector<8x8xf32> to vector<8x8xbf16>
    %cst = arith.constant dense<0.000000e+00> : vector<8x1024xf32>
    %14 = tpu.matmul %13, %12, %cst {dimension_numbers = #tpu.dot_dimension_numbers<[1], [0], [0], [1], [0, 0, 1, 1], [], []>} : vector<8x8xbf16>, vector<8x1024xbf16>, vector<8x1024xf32> -> vector<8x1024xf32>
    %15 = vector.broadcast %6 : vector<8x1xf32> to vector<8x1024xf32>
    %16 = arith.addf %14, %15 : vector<8x1024xf32>
    %cst_18 = arith.constant 0.000000e+00 : f32
    %17 = vector.broadcast %cst_18 : f32 to vector<8x1024xf32>
    %18 = arith.maximumf %16, %17 : vector<8x1024xf32>
    %c32 = arith.constant 32 : index
    %c0_19 = arith.constant 0 : index
    %19 = vector.load %arg7[%c32, %c0_19] : memref<40x1024xf32, #tpu.memory_space<vmem>>, vector<8x1024xf32>
    tpu.vector_store %arg7[%c32, %c0_19], %18 {strides = array<i32>} : memref<40x1024xf32, #tpu.memory_space<vmem>>, vector<8x1024xf32>,
    %c0_20 = arith.constant 0 : index
    %c0_21 = arith.constant 0 : index
    %20 = vector.load %arg2[%c0_20, %c0_21] : memref<64x256xbf16, #tpu.memory_space<vmem>>, vector<64x256xbf16>
    %21 = arith.truncf %1 : vector<32x64xf32> to vector<32x64xbf16>
    %cst_22 = arith.constant dense<0.000000e+00> : vector<32x256xf32>
    %22 = tpu.matmul %21, %20, %cst_22 {dimension_numbers = #tpu.dot_dimension_numbers<[1], [0], [0], [1], [0, 0, 1, 1], [], []>} : vector<32x64xbf16>, vector<64x256xbf16>, vector<32x256xf32> -> vector<32x256xf32>
    %23 = vector.broadcast %7 : vector<32x1xf32> to vector<32x256xf32>
    %24 = arith.addf %22, %23 : vector<32x256xf32>
    %cst_23 = arith.constant 0.000000e+00 : f32
    %25 = vector.broadcast %cst_23 : f32 to vector<32x256xf32>
    %26 = arith.maximumf %24, %25 : vector<32x256xf32>
    %c0_24 = arith.constant 0 : index
    %c0_25 = arith.constant 0 : index
    %27 = vector.load %arg8[%c0_24, %c0_25] : memref<32x256xf32, #tpu.memory_space<vmem>>, vector<32x256xf32>
    tpu.vector_store %arg8[%c0_24, %c0_25], %26 {strides = array<i32>} : memref<32x256xf32, #tpu.memory_space<vmem>>, vector<32x256xf32>,
    %c0_26 = arith.constant 0 : index
    %c0_27 = arith.constant 0 : index
    %28 = vector.load %arg8[%c0_26, %c0_27] : memref<32x256xf32, #tpu.memory_space<vmem>>, vector<32x64xf32>
    %29 = arith.truncf %28 : vector<32x64xf32> to vector<32x64xbf16>
    %cst_28 = arith.constant dense<0.000000e+00> : vector<32x256xf32>
    %30 = tpu.matmul %29, %5, %cst_28 {dimension_numbers = #tpu.dot_dimension_numbers<[1], [0], [0], [1], [0, 0, 1, 1], [], []>} : vector<32x64xbf16>, vector<64x256xbf16>, vector<32x256xf32> -> vector<32x256xf32>
    %c0_29 = arith.constant 0 : index
    %c0_30 = arith.constant 0 : index
    %31 = vector.load %arg7[%c0_29, %c0_30] : memref<40x1024xf32, #tpu.memory_space<vmem>>, vector<32x256xf32>
    tpu.vector_store %arg7[%c0_29, %c0_30], %30 {strides = array<i32>} : memref<40x1024xf32, #tpu.memory_space<vmem>>, vector<32x256xf32>,
    %c0_31 = arith.constant 0 : index
    %c64 = arith.constant 64 : index
    %32 = vector.load %arg8[%c0_31, %c64] : memref<32x256xf32, #tpu.memory_space<vmem>>, vector<32x64xf32>
    %33 = arith.truncf %32 : vector<32x64xf32> to vector<32x64xbf16>
    %cst_32 = arith.constant dense<0.000000e+00> : vector<32x256xf32>
    %34 = tpu.matmul %33, %5, %cst_32 {dimension_numbers = #tpu.dot_dimension_numbers<[1], [0], [0], [1], [0, 0, 1, 1], [], []>} : vector<32x64xbf16>, vector<64x256xbf16>, vector<32x256xf32> -> vector<32x256xf32>
    %c0_33 = arith.constant 0 : index
    %c256 = arith.constant 256 : index
    %35 = vector.load %arg7[%c0_33, %c256] : memref<40x1024xf32, #tpu.memory_space<vmem>>, vector<32x256xf32>
    tpu.vector_store %arg7[%c0_33, %c256], %34 {strides = array<i32>} : memref<40x1024xf32, #tpu.memory_space<vmem>>, vector<32x256xf32>,
    %c0_34 = arith.constant 0 : index
    %c128 = arith.constant 128 : index
    %36 = vector.load %arg8[%c0_34, %c128] : memref<32x256xf32, #tpu.memory_space<vmem>>, vector<32x64xf32>
    %37 = arith.truncf %36 : vector<32x64xf32> to vector<32x64xbf16>
    %cst_35 = arith.constant dense<0.000000e+00> : vector<32x256xf32>
    %38 = tpu.matmul %37, %5, %cst_35 {dimension_numbers = #tpu.dot_dimension_numbers<[1], [0], [0], [1], [0, 0, 1, 1], [], []>} : vector<32x64xbf16>, vector<64x256xbf16>, vector<32x256xf32> -> vector<32x256xf32>
    %c0_36 = arith.constant 0 : index
    %c512 = arith.constant 512 : index
    %39 = vector.load %arg7[%c0_36, %c512] : memref<40x1024xf32, #tpu.memory_space<vmem>>, vector<32x256xf32>
    tpu.vector_store %arg7[%c0_36, %c512], %38 {strides = array<i32>} : memref<40x1024xf32, #tpu.memory_space<vmem>>, vector<32x256xf32>,
    %c0_37 = arith.constant 0 : index
    %c192 = arith.constant 192 : index
    %40 = vector.load %arg8[%c0_37, %c192] : memref<32x256xf32, #tpu.memory_space<vmem>>, vector<32x64xf32>
    %41 = arith.truncf %40 : vector<32x64xf32> to vector<32x64xbf16>
    %cst_38 = arith.constant dense<0.000000e+00> : vector<32x256xf32>
    %42 = tpu.matmul %41, %5, %cst_38 {dimension_numbers = #tpu.dot_dimension_numbers<[1], [0], [0], [1], [0, 0, 1, 1], [], []>} : vector<32x64xbf16>, vector<64x256xbf16>, vector<32x256xf32> -> vector<32x256xf32>
    %c0_39 = arith.constant 0 : index
    %c768 = arith.constant 768 : index
    %43 = vector.load %arg7[%c0_39, %c768] : memref<40x1024xf32, #tpu.memory_space<vmem>>, vector<32x256xf32>
    tpu.vector_store %arg7[%c0_39, %c768], %42 {strides = array<i32>} : memref<40x1024xf32, #tpu.memory_space<vmem>>, vector<32x256xf32>,
    %c0_40 = arith.constant 0 : index
    %c0_41 = arith.constant 0 : index
    %44 = vector.load %arg7[%c0_40, %c0_41] : memref<40x1024xf32, #tpu.memory_space<vmem>>, vector<40x1024xf32>
    %c17_i32 = arith.constant 17 : i32
    %45 = tpu.dynamic_rotate %44 by %c17_i32 dim 1 : vector<40x1024xf32>, i32 -> vector<40x1024xf32>
    %c0_42 = arith.constant 0 : index
    %c0_43 = arith.constant 0 : index
    %46 = vector.load %arg5[%c0_42, %c0_43] : memref<9x1024xf32, #tpu.memory_space<vmem>>, vector<1x1024xf32>
    %47 = vector.broadcast %46 : vector<1x1024xf32> to vector<40x1024xf32>
    %48 = arith.mulf %45, %47 : vector<40x1024xf32>
    %c16_i32 = arith.constant 16 : i32
    %49 = tpu.dynamic_rotate %44 by %c16_i32 dim 1 : vector<40x1024xf32>, i32 -> vector<40x1024xf32>
    %c1 = arith.constant 1 : index
    %c0_44 = arith.constant 0 : index
    %50 = vector.load %arg5[%c1, %c0_44] : memref<9x1024xf32, #tpu.memory_space<vmem>>, vector<1x1024xf32>
    %51 = vector.broadcast %50 : vector<1x1024xf32> to vector<40x1024xf32>
    %52 = arith.mulf %49, %51 : vector<40x1024xf32>
    %c15_i32 = arith.constant 15 : i32
    %53 = tpu.dynamic_rotate %44 by %c15_i32 dim 1 : vector<40x1024xf32>, i32 -> vector<40x1024xf32>
    %c2 = arith.constant 2 : index
    %c0_45 = arith.constant 0 : index
    %54 = vector.load %arg5[%c2, %c0_45] : memref<9x1024xf32, #tpu.memory_space<vmem>>, vector<1x1024xf32>
    %55 = vector.broadcast %54 : vector<1x1024xf32> to vector<40x1024xf32>
    %56 = arith.mulf %53, %55 : vector<40x1024xf32>
    %c1_i32 = arith.constant 1 : i32
    %57 = tpu.dynamic_rotate %44 by %c1_i32 dim 1 : vector<40x1024xf32>, i32 -> vector<40x1024xf32>
    %c3 = arith.constant 3 : index
    %c0_46 = arith.constant 0 : index
    %58 = vector.load %arg5[%c3, %c0_46] : memref<9x1024xf32, #tpu.memory_space<vmem>>, vector<1x1024xf32>
    %59 = vector.broadcast %58 : vector<1x1024xf32> to vector<40x1024xf32>
    %60 = arith.mulf %57, %59 : vector<40x1024xf32>
    %c1023_i32 = arith.constant 1023 : i32
    %61 = tpu.dynamic_rotate %44 by %c1023_i32 dim 1 : vector<40x1024xf32>, i32 -> vector<40x1024xf32>
    %c5 = arith.constant 5 : index
    %c0_47 = arith.constant 0 : index
    %62 = vector.load %arg5[%c5, %c0_47] : memref<9x1024xf32, #tpu.memory_space<vmem>>, vector<1x1024xf32>
    %63 = vector.broadcast %62 : vector<1x1024xf32> to vector<40x1024xf32>
    %64 = arith.mulf %61, %63 : vector<40x1024xf32>
    %c1009_i32 = arith.constant 1009 : i32
    %65 = tpu.dynamic_rotate %44 by %c1009_i32 dim 1 : vector<40x1024xf32>, i32 -> vector<40x1024xf32>
    %c6 = arith.constant 6 : index
    %c0_48 = arith.constant 0 : index
    %66 = vector.load %arg5[%c6, %c0_48] : memref<9x1024xf32, #tpu.memory_space<vmem>>, vector<1x1024xf32>
    %67 = vector.broadcast %66 : vector<1x1024xf32> to vector<40x1024xf32>
    %68 = arith.mulf %65, %67 : vector<40x1024xf32>
    %c1008_i32 = arith.constant 1008 : i32
    %69 = tpu.dynamic_rotate %44 by %c1008_i32 dim 1 : vector<40x1024xf32>, i32 -> vector<40x1024xf32>
    %c7 = arith.constant 7 : index
    %c0_49 = arith.constant 0 : index
    %70 = vector.load %arg5[%c7, %c0_49] : memref<9x1024xf32, #tpu.memory_space<vmem>>, vector<1x1024xf32>
    %71 = vector.broadcast %70 : vector<1x1024xf32> to vector<40x1024xf32>
    %72 = arith.mulf %69, %71 : vector<40x1024xf32>
    %c1007_i32 = arith.constant 1007 : i32
    %73 = tpu.dynamic_rotate %44 by %c1007_i32 dim 1 : vector<40x1024xf32>, i32 -> vector<40x1024xf32>
    %c8_50 = arith.constant 8 : index
    %c0_51 = arith.constant 0 : index
    %74 = vector.load %arg5[%c8_50, %c0_51] : memref<9x1024xf32, #tpu.memory_space<vmem>>, vector<1x1024xf32>
    %75 = vector.broadcast %74 : vector<1x1024xf32> to vector<40x1024xf32>
    %76 = arith.mulf %73, %75 : vector<40x1024xf32>
    %77 = tpu.concatenate %48, %52, %56, %60, %44, %64, %68, %72, %76 in 0 : vector<40x1024xf32>, vector<40x1024xf32>, vector<40x1024xf32>, vector<40x1024xf32>, vector<40x1024xf32>, vector<40x1024xf32>, vector<40x1024xf32>, vector<40x1024xf32>, vector<40x1024xf32> -> vector<360x1024xf32>
    %78 = arith.truncf %2 : vector<16x360xf32> to vector<16x360xbf16>
    %79 = arith.truncf %77 : vector<360x1024xf32> to vector<360x1024xbf16>
    %cst_52 = arith.constant dense<0.000000e+00> : vector<16x1024xf32>
    %80 = tpu.matmul %78, %79, %cst_52 {dimension_numbers = #tpu.dot_dimension_numbers<[1], [0], [0], [1], [0, 0, 1, 1], [], []>} : vector<16x360xbf16>, vector<360x1024xbf16>, vector<16x1024xf32> -> vector<16x1024xf32>
    %81 = vector.broadcast %8 : vector<16x1xf32> to vector<16x1024xf32>
    %82 = arith.addf %80, %81 : vector<16x1024xf32>
    %cst_53 = arith.constant 0.000000e+00 : f32
    %83 = vector.broadcast %cst_53 : f32 to vector<16x1024xf32>
    %84 = arith.maximumf %82, %83 : vector<16x1024xf32>
    %c17_i32_54 = arith.constant 17 : i32
    %85 = tpu.dynamic_rotate %84 by %c17_i32_54 dim 1 : vector<16x1024xf32>, i32 -> vector<16x1024xf32>
    %c0_55 = arith.constant 0 : index
    %c0_56 = arith.constant 0 : index
    %86 = vector.load %arg5[%c0_55, %c0_56] : memref<9x1024xf32, #tpu.memory_space<vmem>>, vector<1x1024xf32>
    %87 = vector.broadcast %86 : vector<1x1024xf32> to vector<16x1024xf32>
    %88 = arith.mulf %85, %87 : vector<16x1024xf32>
    %c16_i32_57 = arith.constant 16 : i32
    %89 = tpu.dynamic_rotate %84 by %c16_i32_57 dim 1 : vector<16x1024xf32>, i32 -> vector<16x1024xf32>
    %c1_58 = arith.constant 1 : index
    %c0_59 = arith.constant 0 : index
    %90 = vector.load %arg5[%c1_58, %c0_59] : memref<9x1024xf32, #tpu.memory_space<vmem>>, vector<1x1024xf32>
    %91 = vector.broadcast %90 : vector<1x1024xf32> to vector<16x1024xf32>
    %92 = arith.mulf %89, %91 : vector<16x1024xf32>
    %c15_i32_60 = arith.constant 15 : i32
    %93 = tpu.dynamic_rotate %84 by %c15_i32_60 dim 1 : vector<16x1024xf32>, i32 -> vector<16x1024xf32>
    %c2_61 = arith.constant 2 : index
    %c0_62 = arith.constant 0 : index
    %94 = vector.load %arg5[%c2_61, %c0_62] : memref<9x1024xf32, #tpu.memory_space<vmem>>, vector<1x1024xf32>
    %95 = vector.broadcast %94 : vector<1x1024xf32> to vector<16x1024xf32>
    %96 = arith.mulf %93, %95 : vector<16x1024xf32>
    %c1_i32_63 = arith.constant 1 : i32
    %97 = tpu.dynamic_rotate %84 by %c1_i32_63 dim 1 : vector<16x1024xf32>, i32 -> vector<16x1024xf32>
    %c3_64 = arith.constant 3 : index
    %c0_65 = arith.constant 0 : index
    %98 = vector.load %arg5[%c3_64, %c0_65] : memref<9x1024xf32, #tpu.memory_space<vmem>>, vector<1x1024xf32>
    %99 = vector.broadcast %98 : vector<1x1024xf32> to vector<16x1024xf32>
    %100 = arith.mulf %97, %99 : vector<16x1024xf32>
    %c1023_i32_66 = arith.constant 1023 : i32
    %101 = tpu.dynamic_rotate %84 by %c1023_i32_66 dim 1 : vector<16x1024xf32>, i32 -> vector<16x1024xf32>
    %c5_67 = arith.constant 5 : index
    %c0_68 = arith.constant 0 : index
    %102 = vector.load %arg5[%c5_67, %c0_68] : memref<9x1024xf32, #tpu.memory_space<vmem>>, vector<1x1024xf32>
    %103 = vector.broadcast %102 : vector<1x1024xf32> to vector<16x1024xf32>
    %104 = arith.mulf %101, %103 : vector<16x1024xf32>
    %c1009_i32_69 = arith.constant 1009 : i32
    %105 = tpu.dynamic_rotate %84 by %c1009_i32_69 dim 1 : vector<16x1024xf32>, i32 -> vector<16x1024xf32>
    %c6_70 = arith.constant 6 : index
    %c0_71 = arith.constant 0 : index
    %106 = vector.load %arg5[%c6_70, %c0_71] : memref<9x1024xf32, #tpu.memory_space<vmem>>, vector<1x1024xf32>
    %107 = vector.broadcast %106 : vector<1x1024xf32> to vector<16x1024xf32>
    %108 = arith.mulf %105, %107 : vector<16x1024xf32>
    %c1008_i32_72 = arith.constant 1008 : i32
    %109 = tpu.dynamic_rotate %84 by %c1008_i32_72 dim 1 : vector<16x1024xf32>, i32 -> vector<16x1024xf32>
    %c7_73 = arith.constant 7 : index
    %c0_74 = arith.constant 0 : index
    %110 = vector.load %arg5[%c7_73, %c0_74] : memref<9x1024xf32, #tpu.memory_space<vmem>>, vector<1x1024xf32>
    %111 = vector.broadcast %110 : vector<1x1024xf32> to vector<16x1024xf32>
    %112 = arith.mulf %109, %111 : vector<16x1024xf32>
    %c1007_i32_75 = arith.constant 1007 : i32
    %113 = tpu.dynamic_rotate %84 by %c1007_i32_75 dim 1 : vector<16x1024xf32>, i32 -> vector<16x1024xf32>
    %c8_76 = arith.constant 8 : index
    %c0_77 = arith.constant 0 : index
    %114 = vector.load %arg5[%c8_76, %c0_77] : memref<9x1024xf32, #tpu.memory_space<vmem>>, vector<1x1024xf32>
    %115 = vector.broadcast %114 : vector<1x1024xf32> to vector<16x1024xf32>
    %116 = arith.mulf %113, %115 : vector<16x1024xf32>
    %117 = tpu.concatenate %88, %92, %96, %100, %84, %104, %108, %112, %116 in 0 : vector<16x1024xf32>, vector<16x1024xf32>, vector<16x1024xf32>, vector<16x1024xf32>, vector<16x1024xf32>, vector<16x1024xf32>, vector<16x1024xf32>, vector<16x1024xf32>, vector<16x1024xf32> -> vector<144x1024xf32>
    %118 = arith.truncf %3 : vector<16x144xf32> to vector<16x144xbf16>
    %119 = arith.truncf %117 : vector<144x1024xf32> to vector<144x1024xbf16>
    %cst_78 = arith.constant dense<0.000000e+00> : vector<16x1024xf32>
    %120 = tpu.matmul %118, %119, %cst_78 {dimension_numbers = #tpu.dot_dimension_numbers<[1], [0], [0], [1], [0, 0, 1, 1], [], []>} : vector<16x144xbf16>, vector<144x1024xbf16>, vector<16x1024xf32> -> vector<16x1024xf32>
    %121 = vector.broadcast %9 : vector<16x1xf32> to vector<16x1024xf32>
    %122 = arith.addf %120, %121 : vector<16x1024xf32>
    %cst_79 = arith.constant 0.000000e+00 : f32
    %123 = vector.broadcast %cst_79 : f32 to vector<16x1024xf32>
    %124 = arith.maximumf %122, %123 : vector<16x1024xf32>
    %125 = vector.broadcast %10 : vector<16x1xf32> to vector<16x1024xf32>
    %126 = arith.mulf %124, %125 : vector<16x1024xf32>
    %cst_80 = arith.constant dense<0.000000e+00> : vector<1024xf32>
    %127 = vector.multi_reduction <add>, %126, %cst_80 [0] : vector<16x1024xf32> to vector<1024xf32>
    %128 = vector.shape_cast %127 : vector<1024xf32> to vector<1x1024xf32>
    %129 = vector.broadcast %11 : vector<1x1xf32> to vector<1x1024xf32>
    %130 = arith.addf %128, %129 : vector<1x1024xf32>
    %c0_81 = arith.constant 0 : index
    %c0_82 = arith.constant 0 : index
    %131 = vector.load %arg6[%c0_81, %c0_82] : memref<1x1024xf32, #tpu.memory_space<vmem>>, vector<1x1024xf32>
    tpu.vector_store %arg6[%c0_81, %c0_82], %130 {strides = array<i32>} : memref<1x1024xf32, #tpu.memory_space<vmem>>, vector<1x1024xf32>,
    return
  }
  func.func @transform_0(%arg0: i32) -> (i32, i32) {
    %c0_i32 = arith.constant 0 : i32
    %c0_i32_0 = arith.constant 0 : i32
    return %c0_i32, %arg0 : i32, i32
  }
  func.func @transform_1(%arg0: i32) -> (i32, i32) {
    %c0_i32 = arith.constant 0 : i32
    %c0_i32_0 = arith.constant 0 : i32
    return %c0_i32, %arg0 : i32, i32
  }
  func.func @transform_2(%arg0: i32) -> (i32, i32) {
    %c0_i32 = arith.constant 0 : i32
    %c0_i32_0 = arith.constant 0 : i32
    %c0_i32_1 = arith.constant 0 : i32
    return %c0_i32, %c0_i32_0 : i32, i32
  }
  func.func @transform_3(%arg0: i32) -> (i32, i32) {
    %c0_i32 = arith.constant 0 : i32
    %c0_i32_0 = arith.constant 0 : i32
    %c0_i32_1 = arith.constant 0 : i32
    return %c0_i32, %c0_i32_0 : i32, i32
  }
  func.func @transform_4(%arg0: i32) -> (i32, i32) {
    %c0_i32 = arith.constant 0 : i32
    %c0_i32_0 = arith.constant 0 : i32
    %c0_i32_1 = arith.constant 0 : i32
    return %c0_i32, %c0_i32_0 : i32, i32
  }
  func.func @transform_5(%arg0: i32) -> (i32, i32) {
    %c0_i32 = arith.constant 0 : i32
    %c0_i32_0 = arith.constant 0 : i32
    return %c0_i32, %arg0 : i32, i32
  }
}

</mosaic_0001>

<llo_original>
// kernel: tpu_custom_call.1
$region0: #{tpu_custom_call.1}
  #allocation0 [shape = 'u32[]', space=smem, size = 0x4, offset = 0x4, fixed_abs, tag = 'smem constant byte address 0x4 - core index']
  #allocation1 [shape = 'u32[72,128]{1,0:T(1,128)}', space=vmem, size = 0x9000, scoped, tag = 'internal scratch']
  %s0 = inlined_call_operand.hbm [shape: f32[8,128], index: 0, kind: input, shape index: {}]
  %s1 = inlined_call_operand.hbm [shape: f32[8,128], index: 1, kind: output, shape index: {}]
  %s2 = sld [smem:[#allocation0]]
  $region18: #{tpu_custom_call.1} parent=0
    _
  %s4 = ssub.s32 1, %s2
  %s5 = scalar_select 0, %s4, %s2
  $region1: #{tpu_custom_call.1} parent=0
    #allocation2 [shape = 'u8[4096]{0}', space=vmem, size = 0x1000, scoped, tag = 'input window, operand 0, single buffered']
    #allocation3 [shape = 's32[1]{0}', space=sflag, size = 0x4, scoped, tag = 'scoped memory for tpu_custom_call.1']
    #allocation4 [shape = 's32[1]{0}', space=sflag, size = 0x4, scoped, tag = 'scoped memory for tpu_custom_call.1']
    #allocation5 [shape = 'u8[4096]{0}', space=vmem, size = 0x1000, scoped, tag = 'output window, operand 0, single buffered']
    %6 = vsyncpa [#allocation3], 0
    %7 = vsyncpa [#allocation4], 0
    // Predicated region
    $region2: #{tpu_custom_call.1} parent=1 // pred_check
      _
    $region3: #{tpu_custom_call.1} parent=1 // pred_check_branch
      %9 = sbr.rel (0) target = $region5
    $region4: #{tpu_custom_call.1} parent=1 // pred_region
      %11 = vsyncadd [#allocation3], 0
      %s13 = sshll.u32 %s0, 4
      %s14 = int_to_ptr.hbm [resolvable:$true] %s13
      %s15 = sshll.u32 [#allocation2], 4
      %s16 = int_to_ptr.vmem [resolvable:$true] %s15
      %18 = dma.hbm_to_vmem [thread:$0]  %s14, 128, %s16, [#allocation3]
    $region5: #{tpu_custom_call.1} parent=1 // pred_fallthru
      _
    // Predicated region
    $region6: #{tpu_custom_call.1} parent=1 // pred_check
      _
    $region7: #{tpu_custom_call.1} parent=1 // pred_check_branch
      %20 = sbr.rel (0) target = $region9
    $region8: #{tpu_custom_call.1} parent=1 // pred_region
      %22 = dma.done [#allocation3], 128
    $region9: #{tpu_custom_call.1} parent=1 // pred_fallthru
      _
    %v23 = vld [vmem:[#allocation2] sm:$0xff]
    %24 = vrot.lane.b32.xlu0 %v23, 1
    %v25 = vpop.permute.xlu0 %24
    %26 = vst [vmem:[#allocation5] sm:$0xff] %v25
    // Predicated region
    $region10: #{tpu_custom_call.1} parent=1 // pred_check
      _
    $region11: #{tpu_custom_call.1} parent=1 // pred_check_branch
      %28 = sbr.rel (0) target = $region13
    $region12: #{tpu_custom_call.1} parent=1 // pred_region
      %30 = vsyncadd [#allocation4], 0
      %s32 = sshll.u32 [#allocation5], 4
      %s33 = int_to_ptr.vmem [resolvable:$true] %s32
      %s34 = sshll.u32 %s1, 4
      %s35 = int_to_ptr.hbm [resolvable:$true] %s34
      %37 = dma.vmem_to_hbm [thread:$0]  %s33, 128, %s35, [#allocation4]
    $region13: #{tpu_custom_call.1} parent=1 // pred_fallthru
      _
    // Predicated region
    $region14: #{tpu_custom_call.1} parent=1 // pred_check
      _
    $region15: #{tpu_custom_call.1} parent=1 // pred_check_branch
      %39 = sbr.rel (0) target = $region17
    $region16: #{tpu_custom_call.1} parent=1 // pred_region
      %41 = dma.done [#allocation4], 128
    $region17: #{tpu_custom_call.1} parent=1 // pred_fallthru
      _
    %42 = vsyncpa [#allocation3], 1
    %43 = vsyncpa [#allocation4], 1

// kernel: eam_forward.1
$region0: #{eam_forward.1}
  #allocation0 [shape = 'u32[]', space=smem, size = 0x4, offset = 0x4, fixed_abs, tag = 'smem constant byte address 0x4 - core index']
  #allocation1 [shape = 'u32[72,128]{1,0:T(1,128)}', space=vmem, size = 0x9000, scoped, tag = 'internal scratch']
  #allocation2 [shape = 'f32[40,1024]{1,0:T(8,128)}', space=vmem, size = 0x28000, scoped, tag = 'scratch operand']
  #allocation3 [shape = 'f32[32,256]{1,0:T(8,128)}', space=vmem, size = 0x8000, scoped, tag = 'scratch operand']
  %s0 = inlined_call_operand.vmem [shape: bf16[8,2048], index: 0, kind: input, shape index: {}]
  %s1 = inlined_call_operand.vmem [shape: bf16[64,512], index: 1, kind: input, shape index: {}]
  %s2 = inlined_call_operand.vmem [shape: f32[136,360], index: 2, kind: input, shape index: {}]
  %s3 = inlined_call_operand.vmem [shape: f32[89,1], index: 3, kind: input, shape index: {}]
  %s4 = inlined_call_operand.vmem [shape: f32[9,1024], index: 4, kind: input, shape index: {}]
  %s5 = inlined_call_operand.vmem [shape: f32[1,2048], index: 5, kind: output, shape index: {}]
  %s6 = sld [smem:[#allocation0]]
  $region91: #{eam_forward.1} parent=0
    _
  %s8 = ssub.s32 1, %s6
  %s9 = scalar_select 0, %s8, %s6
  $region1: #{eam_forward.1} parent=0
    #allocation4 [shape = 'u8[65536]{0}', space=vmem, size = 0x10000, scoped, tag = 'input window, operand 1']
    loop: start=0, step=1, limit=4
    $region2: #{eam_forward.1} parent=1 // loop_pre_header
      _
    $region3: #{eam_forward.1} parent=1 // loop_header
      %s11 = sphi 0, %s15
      %p12 = scmp.ge.s32.totalorder %s11, 4
      %s21 = sphi 0, %s23
      %s24 = sphi 0, %s21
      %s25 = sphi 0, %s24
      %s41 = sphi 0, %s25
      %s47 = sphi 0, %s49
      %s50 = sphi 0, %s47
      %s51 = sphi 0, %s50
      %s67 = sphi 0, %s51
      %s71 = sphi 0, %s71
      %s73 = sphi 0, %s71
      %s74 = sphi 0, %s73
      %s88 = sphi 0, %s74
      %s92 = sphi 0, %s92
      %s94 = sphi 0, %s92
      %s95 = sphi 0, %s94
      %s109 = sphi 0, %s95
      %s113 = sphi 0, %s113
      %s115 = sphi 0, %s113
      %s116 = sphi 0, %s115
      %s130 = sphi 0, %s116
      %s136 = sphi 0, %s138
      %s139 = sphi 0, %s136
      %s140 = sphi 0, %s139
      %s156 = sphi 0, %s140
    $region4: #{eam_forward.1} parent=1 // loop_header_branch
      %14 = sbr.rel (%p12) target = $region8
    $region5: #{eam_forward.1} parent=1 // loop_body
      %s16 = ssub.s32 %s11, 1
      %s17 = ssub.s32 %s11, 2
      %s18 = sadd.s32 %s11, 1
      %s19 = ssub.s32 %s11, %s18
      %p20 = scmp.eq.s32.totalorder %s19, 0
      %s22 = sadd.s32 %s21, 1
      %s23 = scalar_select %p20, %s21, %s22
      %p26 = pneg %p20
      %p27 = scmp.eq.s32.totalorder %s11, 1
      %p28 = por %p26, %p27
      %p29 = scmp.ne.s32.totalorder %s21, %s24
      %p30 = scmp.eq.s32.totalorder %s11, 0
      %p31 = por %p29, %p30
      %p32 = scmp.ne.s32.totalorder %s21, %s24
      %p33 = scmp.eq.s32.totalorder %s16, 1
      %p34 = por %p32, %p33
      %p35 = scmp.ne.s32.totalorder %s24, %s25
      %p36 = scmp.eq.s32.totalorder %s16, 0
      %p37 = por %p35, %p36
      %p38 = scmp.ne.s32.totalorder %s24, %s25
      %p39 = scmp.eq.s32.totalorder %s17, 1
      %p40 = por %p38, %p39
      %p42 = scmp.ne.s32.totalorder %s25, %s41
      %p43 = scmp.eq.s32.totalorder %s17, 0
      %p44 = por %p42, %p43
      %s45 = ssub.s32 %s11, %s18
      %p46 = scmp.eq.s32.totalorder %s45, 0
      %s48 = sadd.s32 %s47, 1
      %s49 = scalar_select %p46, %s47, %s48
      %p52 = pneg %p46
      %p53 = scmp.eq.s32.totalorder %s11, 1
      %p54 = por %p52, %p53
      %p55 = scmp.ne.s32.totalorder %s47, %s50
      %p56 = scmp.eq.s32.totalorder %s11, 0
      %p57 = por %p55, %p56
      %p58 = scmp.ne.s32.totalorder %s47, %s50
      %p59 = scmp.eq.s32.totalorder %s16, 1
      %p60 = por %p58, %p59
      %p61 = scmp.ne.s32.totalorder %s50, %s51
      %p62 = scmp.eq.s32.totalorder %s16, 0
      %p63 = por %p61, %p62
      %p64 = scmp.ne.s32.totalorder %s50, %s51
      %p65 = scmp.eq.s32.totalorder %s17, 1
      %p66 = por %p64, %p65
      %p68 = scmp.ne.s32.totalorder %s51, %s67
      %p69 = scmp.eq.s32.totalorder %s17, 0
      %p70 = por %p68, %p69
      %s72 = sadd.s32 %s71, 1
      %p75 = scmp.eq.s32.totalorder %s11, 1
      %p76 = scmp.ne.s32.totalorder %s71, %s73
      %p77 = scmp.eq.s32.totalorder %s11, 0
      %p78 = por %p76, %p77
      %p79 = scmp.ne.s32.totalorder %s71, %s73
      %p80 = scmp.eq.s32.totalorder %s16, 1
      %p81 = por %p79, %p80
      %p82 = scmp.ne.s32.totalorder %s73, %s74
      %p83 = scmp.eq.s32.totalorder %s16, 0
      %p84 = por %p82, %p83
      %p85 = scmp.ne.s32.totalorder %s73, %s74
      %p86 = scmp.eq.s32.totalorder %s17, 1
      %p87 = por %p85, %p86
      %p89 = scmp.ne.s32.totalorder %s74, %s88
      %p90 = scmp.eq.s32.totalorder %s17, 0
      %p91 = por %p89, %p90
      %s93 = sadd.s32 %s92, 1
      %p96 = scmp.eq.s32.totalorder %s11, 1
      %p97 = scmp.ne.s32.totalorder %s92, %s94
      %p98 = scmp.eq.s32.totalorder %s11, 0
      %p99 = por %p97, %p98
      %p100 = scmp.ne.s32.totalorder %s92, %s94
      %p101 = scmp.eq.s32.totalorder %s16, 1
      %p102 = por %p100, %p101
      %p103 = scmp.ne.s32.totalorder %s94, %s95
      %p104 = scmp.eq.s32.totalorder %s16, 0
      %p105 = por %p103, %p104
      %p106 = scmp.ne.s32.totalorder %s94, %s95
      %p107 = scmp.eq.s32.totalorder %s17, 1
      %p108 = por %p106, %p107
      %p110 = scmp.ne.s32.totalorder %s95, %s109
      %p111 = scmp.eq.s32.totalorder %s17, 0
      %p112 = por %p110, %p111
      %s114 = sadd.s32 %s113, 1
      %p117 = scmp.eq.s32.totalorder %s11, 1
      %p118 = scmp.ne.s32.totalorder %s113, %s115
      %p119 = scmp.eq.s32.totalorder %s11, 0
      %p120 = por %p118, %p119
      %p121 = scmp.ne.s32.totalorder %s113, %s115
      %p122 = scmp.eq.s32.totalorder %s16, 1
      %p123 = por %p121, %p122
      %p124 = scmp.ne.s32.totalorder %s115, %s116
      %p125 = scmp.eq.s32.totalorder %s16, 0
      %p126 = por %p124, %p125
      %p127 = scmp.ne.s32.totalorder %s115, %s116
      %p128 = scmp.eq.s32.totalorder %s17, 1
      %p129 = por %p127, %p128
      %p131 = scmp.ne.s32.totalorder %s116, %s130
      %p132 = scmp.eq.s32.totalorder %s17, 0
      %p133 = por %p131, %p132
      %s134 = ssub.s32 %s11, %s18
      %p135 = scmp.eq.s32.totalorder %s134, 0
      %s137 = sadd.s32 %s136, 1
      %s138 = scalar_select %p135, %s136, %s137
      %p141 = pneg %p135
      %p142 = scmp.eq.s32.totalorder %s11, 1
      %p143 = por %p141, %p142
      %p144 = scmp.ne.s32.totalorder %s136, %s139
      %p145 = scmp.eq.s32.totalorder %s11, 0
      %p146 = por %p144, %p145
      %p147 = scmp.ne.s32.totalorder %s136, %s139
      %p148 = scmp.eq.s32.totalorder %s16, 1
      %p149 = por %p147, %p148
      %p150 = scmp.ne.s32.totalorder %s139, %s140
      %p151 = scmp.eq.s32.totalorder %s16, 0
      %p152 = por %p150, %p151
      %p153 = scmp.ne.s32.totalorder %s139, %s140
      %p154 = scmp.eq.s32.totalorder %s17, 1
      %p155 = por %p153, %p154
      %p157 = scmp.ne.s32.totalorder %s140, %s156
      %p158 = scmp.eq.s32.totalorder %s17, 0
      %p159 = por %p157, %p158
      %p160 = scmp.le.s32.totalorder 1, %s11
      %p161 = scmp.lt.s32.totalorder %s11, 3
      %p162 = pnand %p160, %p161
      %p163 = pneg %p162
      // Predicated region
      $region9: #{eam_forward.1} parent=5 // pred_check
        _
      $region10: #{eam_forward.1} parent=5 // pred_check_branch
        %165 = sbr.rel (%p162) target = $region12
      $region11: #{eam_forward.1} parent=5 // pred_region
        %s166 = ssub.s32 %s11, 1
        // Predicated region
        $region13: #{eam_forward.1} parent=11 // pred_check
          %p167 = pneg %p84
        $region14: #{eam_forward.1} parent=11 // pred_check_branch
          %169 = sbr.rel (%p167) target = $region16
        $region15: #{eam_forward.1} parent=11 // pred_region
          _
        $region16: #{eam_forward.1} parent=11 // pred_fallthru
          _
        // Predicated region
        $region17: #{eam_forward.1} parent=11 // pred_check
          %p170 = pneg %p105
        $region18: #{eam_forward.1} parent=11 // pred_check_branch
          %172 = sbr.rel (%p170) target = $region20
        $region19: #{eam_forward.1} parent=11 // pred_region
          _
        $region20: #{eam_forward.1} parent=11 // pred_fallthru
          _
        // Predicated region
        $region21: #{eam_forward.1} parent=11 // pred_check
          %p173 = pneg %p126
        $region22: #{eam_forward.1} parent=11 // pred_check_branch
          %175 = sbr.rel (%p173) target = $region24
        $region23: #{eam_forward.1} parent=11 // pred_region
          _
        $region24: #{eam_forward.1} parent=11 // pred_fallthru
          _
      $region12: #{eam_forward.1} parent=5 // pred_fallthru
        _
      %p176 = scmp.lt.s32.totalorder %s11, 2
      // Predicated region
      $region25: #{eam_forward.1} parent=5 // pred_check
        %p177 = pneg %p176
      $region26: #{eam_forward.1} parent=5 // pred_check_branch
        %179 = sbr.rel (%p177) target = $region28
      $region27: #{eam_forward.1} parent=5 // pred_region
        // Predicated region
        $region29: #{eam_forward.1} parent=27 // pred_check
          %p180 = pneg %p31
        $region30: #{eam_forward.1} parent=27 // pred_check_branch
          %182 = sbr.rel (%p180) target = $region32
        $region31: #{eam_forward.1} parent=27 // pred_region
          %s183 = smul.u32 8, %s11
          %p184 = scmp.lt.s32.totalorder %s183, 15
          %s185 = scalar_select %p184, %s183, 15
          %s186 = smul.addr %s185, 4
          %s187 = scalar_lea.vmem %s0, %s186
          %s188 = smul.u32 8, %s11
        $region32: #{eam_forward.1} parent=27 // pred_fallthru
          _
        // Predicated region
        $region33: #{eam_forward.1} parent=27 // pred_check
          %p189 = pneg %p57
        $region34: #{eam_forward.1} parent=27 // pred_check_branch
          %191 = sbr.rel (%p189) target = $region36
        $region35: #{eam_forward.1} parent=27 // pred_region
          %s192 = sand.u32 %s47, 1
          %s193 = sand.u32 %s47, 1
          %s194 = smul.addr %s193, 64
          %s195 = scalar_lea.vmem [#allocation4], %s194
          %s196 = smul.u32 2, %s11
          %s197 = smul.addr %s196, 4
          %s198 = scalar_lea.vmem %s1, %s197
          // Predicated region
          $region37: #{eam_forward.1} parent=35 // pred_check
            _
          $region38: #{eam_forward.1} parent=35 // pred_check_branch
            %200 = sbr.rel (0) target = $region40
          $region39: #{eam_forward.1} parent=35 // pred_region
            // Predicated region
            $region41: #{eam_forward.1} parent=39 // pred_check
              _
            $region42: #{eam_forward.1} parent=39 // pred_check_branch
              %202 = sbr.rel (0) target = $region44
            $region43: #{eam_forward.1} parent=39 // pred_region
              // Predicated region
              $region56: #{eam_forward.1} parent=43 // pred_check
                _
              $region57: #{eam_forward.1} parent=43 // pred_check_branch
                %232 = sbr.rel (0) target = $region59
              $region58: #{eam_forward.1} parent=43 // pred_region
                loop: start=0, step=1, limit=1
                $region60: #{eam_forward.1} parent=58 // loop_pre_header
                  _
                $region61: #{eam_forward.1} parent=58 // loop_header
                  %s234 = sphi 0, %s238
                  %p235 = scmp.ge.s32.totalorder %s234, 1
                  %s239 = sphi %s198, %s198
                  %s240 = sphi %s195, %s195
                $region62: #{eam_forward.1} parent=58 // loop_header_branch
                  %237 = sbr.rel (%p235) target = $region66
                $region63: #{eam_forward.1} parent=58 // loop_body
                  %v241 = vld [vmem:[%s239] sm:$0xff]
                  %242 = vst [vmem:[%s240] sm:$0xff] %v241
                  %v243 = vld [vmem:[%s239 + $0x10] sm:$0xff]
                  %244 = vst [vmem:[%s240 + $0x8] sm:$0xff] %v243
                  %v245 = vld [vmem:[%s239 + $0x20] sm:$0xff]
                  %246 = vst [vmem:[%s240 + $0x10] sm:$0xff] %v245
                  %v247 = vld [vmem:[%s239 + $0x30] sm:$0xff]
                  %248 = vst [vmem:[%s240 + $0x18] sm:$0xff] %v247
                  %v249 = vld [vmem:[%s239 + $0x40] sm:$0xff]
                  %250 = vst [vmem:[%s240 + $0x20] sm:$0xff] %v249
                  %v251 = vld [vmem:[%s239 + $0x50] sm:$0xff]
                  %252 = vst [vmem:[%s240 + $0x28] sm:$0xff] %v251
                  %v253 = vld [vmem:[%s239 + $0x60] sm:$0xff]
                  %254 = vst [vmem:[%s240 + $0x30] sm:$0xff] %v253
                  %v255 = vld [vmem:[%s239 + $0x70] sm:$0xff]
                  %256 = vst [vmem:[%s240 + $0x38] sm:$0xff] %v255
                $region64: #{eam_forward.1} parent=58 // loop_footer
                  %s238 = sadd.s32 1, %s234
                $region65: #{eam_forward.1} parent=58 // loop_footer_branch
                  %233 = sbr.rel target = $region61
                $region66: #{eam_forward.1} parent=58 // loop_exit
                  _
              $region59: #{eam_forward.1} parent=43 // pred_fallthru
                _
              // Predicated region
              $region67: #{eam_forward.1} parent=43 // pred_check
                _
              $region68: #{eam_forward.1} parent=43 // pred_check_branch
                %258 = sbr.rel target = $region70
              $region69: #{eam_forward.1} parent=43 // pred_region
                _
              $region70: #{eam_forward.1} parent=43 // pred_fallthru
                _
            $region44: #{eam_forward.1} parent=39 // pred_fallthru
              _
            // Predicated region
            $region45: #{eam_forward.1} parent=39 // pred_check
              _
            $region46: #{eam_forward.1} parent=39 // pred_check_branch
              %204 = sbr.rel target = $region48
            $region47: #{eam_forward.1} parent=39 // pred_region
              %s206 = ssub.s32 256, 1
              loop: start=0, step=1, limit=1
              $region49: #{eam_forward.1} parent=47 // loop_pre_header
                _
              $region50: #{eam_forward.1} parent=47 // loop_header
                %s208 = sphi 0, %s212
                %p209 = scmp.ge.s32.totalorder %s208, 1
                %s213 = sphi %s198, %s198
                %s214 = sphi %s195, %s195
              $region51: #{eam_forward.1} parent=47 // loop_header_branch
                %211 = sbr.rel (%p209) target = $region55
              $region52: #{eam_forward.1} parent=47 // loop_body
                %v215 = vld [vmem:[%s213] sm:%s206]
                %216 = vst [vmem:[%s214] sm:%s206] %v215
                %v217 = vld [vmem:[%s213 + $0x10] sm:%s206]
                %218 = vst [vmem:[%s214 + $0x8] sm:%s206] %v217
                %v219 = vld [vmem:[%s213 + $0x20] sm:%s206]
                %220 = vst [vmem:[%s214 + $0x10] sm:%s206] %v219
                %v221 = vld [vmem:[%s213 + $0x30] sm:%s206]
                %222 = vst [vmem:[%s214 + $0x18] sm:%s206] %v221
                %v223 = vld [vmem:[%s213 + $0x40] sm:%s206]
                %224 = vst [vmem:[%s214 + $0x20] sm:%s206] %v223
                %v225 = vld [vmem:[%s213 + $0x50] sm:%s206]
                %226 = vst [vmem:[%s214 + $0x28] sm:%s206] %v225
                %v227 = vld [vmem:[%s213 + $0x60] sm:%s206]
                %228 = vst [vmem:[%s214 + $0x30] sm:%s206] %v227
                %v229 = vld [vmem:[%s213 + $0x70] sm:%s206]
                %230 = vst [vmem:[%s214 + $0x38] sm:%s206] %v229
              $region53: #{eam_forward.1} parent=47 // loop_footer
                %s212 = sadd.s32 1, %s208
              $region54: #{eam_forward.1} parent=47 // loop_footer_branch
                %207 = sbr.rel target = $region50
              $region55: #{eam_forward.1} parent=47 // loop_exit
                _
            $region48: #{eam_forward.1} parent=39 // pred_fallthru
              _
          $region40: #{eam_forward.1} parent=35 // pred_fallthru
            _
          %259 = vnop
        $region36: #{eam_forward.1} parent=27 // pred_fallthru
          _
      $region28: #{eam_forward.1} parent=5 // pred_fallthru
        _
      %p260 = scmp.le.s32.totalorder 1, %s11
      %p261 = scmp.lt.s32.totalorder %s11, 3
      %p262 = pnand %p260, %p261
      %p263 = pneg %p262
      // Predicated region
      $region71: #{eam_forward.1} parent=5 // pred_check
        _
      $region72: #{eam_forward.1} parent=5 // pred_check_branch
        %265 = sbr.rel (%p262) target = $region74
      $region73: #{eam_forward.1} parent=5 // pred_region
        %s266 = ssub.s32 %s11, 1
        %s267 = sand.u32 %s50, 1
        %s268 = sand.u32 %s50, 1
        %s269 = smul.addr %s268, 64
        %s270 = scalar_lea.vmem [#allocation4], %s269
        // Predicated region
        $region75: #{eam_forward.1} parent=73 // pred_check
          %p271 = pneg %p63
        $region76: #{eam_forward.1} parent=73 // pred_check_branch
          %273 = sbr.rel (%p271) target = $region78
        $region77: #{eam_forward.1} parent=73 // pred_region
          _
        $region78: #{eam_forward.1} parent=73 // pred_fallthru
          _
        %s274 = smul.u32 8, %s16
        %p275 = scmp.lt.s32.totalorder %s274, 15
        %s276 = scalar_select %p275, %s274, 15
        %s277 = smul.addr %s276, 4
        %s278 = scalar_lea.vmem %s0, %s277
        %p279 = pneg %p37
        %p280 = pneg %p34
        %s281 = sand.u32 %s50, 1
        %s282 = sand.u32 %s50, 1
        %s283 = smul.addr %s282, 64
        %s284 = scalar_lea.vmem [#allocation4], %s283
        %p285 = pneg %p63
        %p286 = pneg %p60
        %p287 = pneg %p84
        %p288 = pneg %p81
        %p289 = pneg %p105
        %p290 = pneg %p102
        %p291 = pneg %p126
        %p292 = pneg %p123
        %p293 = pneg %p152
        %p294 = pneg %p149
        %s295 = smul.u32 8, %s16
        %p296 = scmp.lt.s32.totalorder %s295, 15
        %s297 = scalar_select %p296, %s295, 15
        %s298 = scalar_lea.vmem %s5, %s297
        %s299 = smul.u32 8, %s16
        %p300 = scmp.lt.s32.totalorder %s299, 15
        %s301 = scalar_select %p300, %s299, 15
        %s302 = smul.addr %s301, 4
        %s303 = scalar_lea.vmem %s0, %s302
        %s304 = smul.u32 8, %s16
        %s305 = smul.u32 2, %s16
        %s306 = smul.u32 8, %s16
        %p307 = scmp.lt.s32.totalorder %s306, 15
        %s308 = scalar_select %p307, %s306, 15
        %s309 = scalar_lea.vmem %s5, %s308
        %s310 = smul.u32 8, %s16
        %v312 = vld [vmem:[%s2] sm:$0xff]
        %v313 = vld [vmem:[%s2 + $0x18] sm:$0xff]
        %v314 = vld [vmem:[%s2 + $0x30] sm:$0xff]
        %v315 = vld [vmem:[%s2 + $0x48] sm:$0xff]
        %v316 = vld [vmem:[%s2 + $0x60] sm:$0xff]
        %v317 = vld [vmem:[%s2 + $0x78] sm:$0xff]
        %v318 = vld [vmem:[%s2 + $0x80] sm:$0xff]
        %v319 = vld [vmem:[%s2 + $0x88] sm:$0xff]
        %v320 = vld [vmem:[%s2 + $0x90] sm:$0xff]
        %v321 = vld [vmem:[%s2 + $0x98] sm:$0xff]
        %v322 = vld [vmem:[%s2 + $0xa0] sm:$0xff]
        %v323 = vld [vmem:[%s2 + $0xa8] sm:$0xff]
        %v324 = vld [vmem:[%s2 + $0xb0] sm:$0xff]
        %v325 = vld [vmem:[%s2 + $0xc0] sm:$0xff]
        %v326 = vld [vmem:[%s2 + $0xc8] sm:$0xff]
        %v327 = vld [vmem:[%s2 + $0xd8] sm:$0xff]
        %v328 = vld [vmem:[%s2 + $0xe0] sm:$0xff]
        %v329 = vld [vmem:[%s2 + $0xf0] sm:$0xff]
        %v330 = vld [vmem:[%s2 + $0xf8] sm:$0xff]
        %v331 = vld [vmem:[%s2 + $0x108] sm:$0xff]
        %v332 = vld [vmem:[%s2 + $0x110] sm:$0xff]
        %v333 = vld [vmem:[%s2 + $0x120] sm:$0xff]
        %v334 = vld [vmem:[%s2 + $0x128] sm:$0xff]
        %v335 = vld [vmem:[%s2 + $0x138] sm:$0xff]
        %v336 = vld [vmem:[%s2 + $0x140] sm:$0xff]
        %v337 = vld [vmem:[%s2 + $0x150] sm:$0xff]
        %v338 = vld [vmem:[%s2 + $0x158] sm:$0xff]
        %v339 = vld [vmem:[%s2 + $0x168] sm:$0xff]
        %v340 = vld [vmem:[%s2 + $0x170] sm:$0xff]
        %v341 = vld [vmem:[%s2 + $0x180] sm:$0xff]
        %v342 = vld [vmem:[%s2 + $0x188] sm:$0xff]
        %v343 = vpack.c.bf16 %v329, %v327
        %v344 = vpack.c.bf16 %v330, %v328
        %v345 = vpack.c.bf16 %v333, %v331
        %v346 = vpack.c.bf16 %v334, %v332
        %v347 = vpack.c.bf16 %v337, %v335
        %v348 = vpack.c.bf16 %v338, %v336
        %v349 = vpack.c.bf16 %v341, %v339
        %v350 = vpack.c.bf16 %v342, %v340
        %v351 = vld [vmem:[%s3] sm:$0xff]
        %v352 = vld [vmem:[%s3 + $0x8] sm:$0xff]
        %v353 = vld [vmem:[%s3 + $0x10] sm:$0xff]
        %v354 = vld [vmem:[%s3 + $0x18] sm:$0xff]
        %v355 = vld [vmem:[%s3 + $0x20] sm:$0xff]
        %v356 = vld [vmem:[%s3 + $0x28] sm:$0xff]
        %v357 = vld [vmem:[%s3 + $0x30] sm:$0xff]
        %v358 = vld [vmem:[%s3 + $0x38] sm:$0xff]
        %v359 = vld [vmem:[%s3 + $0x40] sm:$0xff]
        %v360 = vld [vmem:[%s3 + $0x48] sm:$0xff]
        %v361 = vld [vmem:[%s3 + $0x50] sm:$0xff]
        %v362 = vld [vmem:[%s3 + $0x58] sm:$0x1]
        %v363 = vld [vmem:[%s303] sm:$0xff]
        %v364 = vld [vmem:[%s303 + $0x8] sm:$0xff]
        %v365 = vld [vmem:[%s303 + $0x10] sm:$0xff]
        %v366 = vld [vmem:[%s303 + $0x18] sm:$0xff]
        %v367 = vpack.c.bf16 %v312, %v312
        %369 = vset.pattern.permute.xlu0 0
        %370 = vperm.xlu0 %369, %v351
        %v371 = vpop.permute.xlu0 %370
        %v377 = vunpack.c.l.b16 %v363
        %v378 = vunpack.c.h.b16 %v363
        %v379 = vunpack.c.l.b16 %v364
        %v380 = vunpack.c.h.b16 %v364
        %v381 = vunpack.c.l.b16 %v365
        %v382 = vunpack.c.h.b16 %v365
        %v383 = vunpack.c.l.b16 %v366
        %v384 = vunpack.c.h.b16 %v366
        %v385 = vpack.c.b16 %v377, %v377
        %v386 = vpack.c.b16 %v378, %v378
        %v387 = vpack.c.b16 %v379, %v379
        %v388 = vpack.c.b16 %v380, %v380
        %v389 = vpack.c.b16 %v381, %v381
        %v390 = vpack.c.b16 %v382, %v382
        %v391 = vpack.c.b16 %v383, %v383
        %v392 = vpack.c.b16 %v384, %v384
        %vm393 = vcmask 64512
        %v395 = vsel %vm393, %v367, 0
        %vm397 = vcmask 1043456
        %v399 = vsel %vm397, %v385, 0
        %v402 = vsel %vm397, %v386, 0
        %v405 = vsel %vm397, %v387, 0
        %v408 = vsel %vm397, %v388, 0
        %v411 = vsel %vm397, %v389, 0
        %v414 = vsel %vm397, %v390, 0
        %v417 = vsel %vm397, %v391, 0
        %v420 = vsel %vm397, %v392, 0
        %422 = vmatpush.bf16.msra.mxu0 0
        %423 = vmatpush.bf16.msra.mxu0 0
        %424 = vmatpush.bf16.msra.mxu0 0
        %425 = vmatpush.bf16.msra.mxu0 0
        %426 = vmatpush.bf16.msra.mxu0 0
        %427 = vmatpush.bf16.msra.mxu0 0
        %428 = vmatpush.bf16.msra.mxu0 0
        %429 = vmatpush.bf16.msra.mxu0 %v399
        %430 = vmatmul.bf16.gmra.mxu0 %v395
        %v431 = vpop.f32.mrf.mxu0
        %v432 = vadd.f32 %v371, %v431
        %v433 = vpop.f32.mrf.mxu0
        %434 = vdwg.mxu0
        %435 = vmatpush.bf16.msra.mxu0 0
        %436 = vmatpush.bf16.msra.mxu0 0
        %437 = vmatpush.bf16.msra.mxu0 0
        %438 = vmatpush.bf16.msra.mxu0 0
        %439 = vmatpush.bf16.msra.mxu0 0
        %440 = vmatpush.bf16.msra.mxu0 0
        %441 = vmatpush.bf16.msra.mxu0 0
        %442 = vmatpush.bf16.msra.mxu0 %v402
        %443 = vmatmul.bf16.gmra.mxu0 %v395
        %v444 = vpop.f32.mrf.mxu0
        %v445 = vadd.f32 %v371, %v444
        %v446 = vpop.f32.mrf.mxu0
        %447 = vdwg.mxu0
        %448 = vmatpush.bf16.msra.mxu0 0
        %449 = vmatpush.bf16.msra.mxu0 0
        %450 = vmatpush.bf16.msra.mxu0 0
        %451 = vmatpush.bf16.msra.mxu0 0
        %452 = vmatpush.bf16.msra.mxu0 0
        %453 = vmatpush.bf16.msra.mxu0 0
        %454 = vmatpush.bf16.msra.mxu0 0
        %455 = vmatpush.bf16.msra.mxu0 %v405
        %456 = vmatmul.bf16.gmra.mxu0 %v395
        %v457 = vpop.f32.mrf.mxu0
        %v458 = vadd.f32 %v371, %v457
        %v459 = vpop.f32.mrf.mxu0
        %460 = vdwg.mxu0
        %461 = vmatpush.bf16.msra.mxu0 0
        %462 = vmatpush.bf16.msra.mxu0 0
        %463 = vmatpush.bf16.msra.mxu0 0
        %464 = vmatpush.bf16.msra.mxu0 0
        %465 = vmatpush.bf16.msra.mxu0 0
        %466 = vmatpush.bf16.msra.mxu0 0
        %467 = vmatpush.bf16.msra.mxu0 0
        %468 = vmatpush.bf16.msra.mxu0 %v408
        %469 = vmatmul.bf16.gmra.mxu0 %v395
        %v470 = vpop.f32.mrf.mxu0
        %v471 = vadd.f32 %v371, %v470
        %v472 = vpop.f32.mrf.mxu0
        %473 = vdwg.mxu0
        %474 = vmatpush.bf16.msra.mxu0 0
        %475 = vmatpush.bf16.msra.mxu0 0
        %476 = vmatpush.bf16.msra.mxu0 0
        %477 = vmatpush.bf16.msra.mxu0 0
        %478 = vmatpush.bf16.msra.mxu0 0
        %479 = vmatpush.bf16.msra.mxu0 0
        %480 = vmatpush.bf16.msra.mxu0 0
        %481 = vmatpush.bf16.msra.mxu0 %v411
        %482 = vmatmul.bf16.gmra.mxu0 %v395
        %v483 = vpop.f32.mrf.mxu0
        %v484 = vadd.f32 %v371, %v483
        %v485 = vpop.f32.mrf.mxu0
        %486 = vdwg.mxu0
        %487 = vmatpush.bf16.msra.mxu0 0
        %488 = vmatpush.bf16.msra.mxu0 0
        %489 = vmatpush.bf16.msra.mxu0 0
        %490 = vmatpush.bf16.msra.mxu0 0
        %491 = vmatpush.bf16.msra.mxu0 0
        %492 = vmatpush.bf16.msra.mxu0 0
        %493 = vmatpush.bf16.msra.mxu0 0
        %494 = vmatpush.bf16.msra.mxu0 %v414
        %495 = vmatmul.bf16.gmra.mxu0 %v395
        %v496 = vpop.f32.mrf.mxu0
        %v497 = vadd.f32 %v371, %v496
        %v498 = vpop.f32.mrf.mxu0
        %499 = vdwg.mxu0
        %500 = vmatpush.bf16.msra.mxu0 0
        %501 = vmatpush.bf16.msra.mxu0 0
        %502 = vmatpush.bf16.msra.mxu0 0
        %503 = vmatpush.bf16.msra.mxu0 0
        %504 = vmatpush.bf16.msra.mxu0 0
        %505 = vmatpush.bf16.msra.mxu0 0
        %506 = vmatpush.bf16.msra.mxu0 0
        %507 = vmatpush.bf16.msra.mxu0 %v417
        %508 = vmatmul.bf16.gmra.mxu0 %v395
        %v509 = vpop.f32.mrf.mxu0
        %v510 = vadd.f32 %v371, %v509
        %v511 = vpop.f32.mrf.mxu0
        %512 = vdwg.mxu0
        %513 = vmatpush.bf16.msra.mxu0 0
        %514 = vmatpush.bf16.msra.mxu0 0
        %515 = vmatpush.bf16.msra.mxu0 0
        %516 = vmatpush.bf16.msra.mxu0 0
        %517 = vmatpush.bf16.msra.mxu0 0
        %518 = vmatpush.bf16.msra.mxu0 0
        %519 = vmatpush.bf16.msra.mxu0 0
        %520 = vmatpush.bf16.msra.mxu0 %v420
        %521 = vmatmul.bf16.gmra.mxu0 %v395
        %v522 = vpop.f32.mrf.mxu0
        %v523 = vadd.f32 %v371, %v522
        %v524 = vpop.f32.mrf.mxu0
        %525 = vdwg.mxu0
        %v526 = vmax.f32 %v432, 0.0
        %v527 = vmax.f32 %v445, 0.0
        %v528 = vmax.f32 %v458, 0.0
        %v529 = vmax.f32 %v471, 0.0
        %v530 = vmax.f32 %v484, 0.0
        %v531 = vmax.f32 %v497, 0.0
        %v532 = vmax.f32 %v510, 0.0
        %v533 = vmax.f32 %v523, 0.0
        %534 = vst [vmem:[#allocation2 + $0x100] sm:$0xff] %v526
        %535 = vst [vmem:[#allocation2 + $0x108] sm:$0xff] %v527
        %536 = vst [vmem:[#allocation2 + $0x110] sm:$0xff] %v528
        %537 = vst [vmem:[#allocation2 + $0x118] sm:$0xff] %v529
        %538 = vst [vmem:[#allocation2 + $0x120] sm:$0xff] %v530
        %539 = vst [vmem:[#allocation2 + $0x128] sm:$0xff] %v531
        %540 = vst [vmem:[#allocation2 + $0x130] sm:$0xff] %v532
        %541 = vst [vmem:[#allocation2 + $0x138] sm:$0xff] %v533
        %v542 = vld [vmem:[%s270] sm:$0xff]
        %v543 = vld [vmem:[%s270 + $0x8] sm:$0xff]
        %v544 = vld [vmem:[%s270 + $0x10] sm:$0xff]
        %v545 = vld [vmem:[%s270 + $0x18] sm:$0xff]
        %v546 = vld [vmem:[%s270 + $0x20] sm:$0xff]
        %v547 = vld [vmem:[%s270 + $0x28] sm:$0xff]
        %v548 = vld [vmem:[%s270 + $0x30] sm:$0xff]
        %v549 = vld [vmem:[%s270 + $0x38] sm:$0xff]
        %v550 = vpack.c.bf16 %v314, %v313
        %v551 = vpack.c.bf16 %v316, %v315
        %553 = vset.pattern.permute.xlu0 0
        %554 = vperm.xlu0 %553, %v352
        %v555 = vpop.permute.xlu0 %554
        %558 = vset.pattern.permute.xlu0 0
        %559 = vperm.xlu0 %558, %v353
        %v560 = vpop.permute.xlu0 %559
        %563 = vset.pattern.permute.xlu0 0
        %564 = vperm.xlu0 %563, %v354
        %v565 = vpop.permute.xlu0 %564
        %568 = vset.pattern.permute.xlu0 0
        %569 = vperm.xlu0 %568, %v355
        %v570 = vpop.permute.xlu0 %569
        %v580 = vunpack.c.l.b16 %v542
        %v581 = vunpack.c.h.b16 %v542
        %v582 = vunpack.c.l.b16 %v543
        %v583 = vunpack.c.h.b16 %v543
        %v584 = vunpack.c.l.b16 %v544
        %v585 = vunpack.c.h.b16 %v544
        %v586 = vunpack.c.l.b16 %v545
        %v587 = vunpack.c.h.b16 %v545
        %v588 = vunpack.c.l.b16 %v546
        %v589 = vunpack.c.h.b16 %v546
        %v590 = vunpack.c.l.b16 %v547
        %v591 = vunpack.c.h.b16 %v547
        %v592 = vunpack.c.l.b16 %v548
        %v593 = vunpack.c.h.b16 %v548
        %v594 = vunpack.c.l.b16 %v549
        %v595 = vunpack.c.h.b16 %v549
        %v596 = vpack.c.b16 %v582, %v580
        %v597 = vpack.c.b16 %v583, %v581
        %v598 = vpack.c.b16 %v586, %v584
        %v599 = vpack.c.b16 %v587, %v585
        %v600 = vpack.c.b16 %v590, %v588
        %v601 = vpack.c.b16 %v591, %v589
        %v602 = vpack.c.b16 %v594, %v592
        %v603 = vpack.c.b16 %v595, %v593
        %vm612 = vcmask 523264
        %v614 = vsel %vm612, %v550, 0
        %v617 = vsel %vm612, %v551, 0
        %619 = vmatpush.bf16.msra.mxu0 0
        %620 = vmatpush.bf16.msra.mxu0 0
        %621 = vmatpush.bf16.msra.mxu0 0
        %622 = vmatpush.bf16.msra.mxu0 0
        %623 = vmatpush.bf16.msra.mxu0 %v602
        %624 = vmatpush.bf16.msra.mxu0 %v600
        %625 = vmatpush.bf16.msra.mxu0 %v598
        %626 = vmatpush.bf16.msra.mxu0 %v596
        %627 = vmatmul.bf16.gmra.mxu0 %v614
        %v628 = vpop.f32.mrf.mxu0
        %v629 = vadd.f32 %v555, %v628
        %v630 = vpop.f32.mrf.mxu0
        %v631 = vadd.f32 %v560, %v630
        %632 = vmatmul.bf16.gmra.mxu0 %v617
        %v633 = vpop.f32.mrf.mxu0
        %v634 = vadd.f32 %v565, %v633
        %v635 = vpop.f32.mrf.mxu0
        %v636 = vadd.f32 %v570, %v635
        %637 = vdwg.mxu0
        %638 = vmatpush.bf16.msra.mxu0 0
        %639 = vmatpush.bf16.msra.mxu0 0
        %640 = vmatpush.bf16.msra.mxu0 0
        %641 = vmatpush.bf16.msra.mxu0 0
        %642 = vmatpush.bf16.msra.mxu0 %v603
        %643 = vmatpush.bf16.msra.mxu0 %v601
        %644 = vmatpush.bf16.msra.mxu0 %v599
        %645 = vmatpush.bf16.msra.mxu0 %v597
        %646 = vmatmul.bf16.gmra.mxu0 %v614
        %v647 = vpop.f32.mrf.mxu0
        %v648 = vadd.f32 %v555, %v647
        %v649 = vpop.f32.mrf.mxu0
        %v650 = vadd.f32 %v560, %v649
        %651 = vmatmul.bf16.gmra.mxu0 %v617
        %v652 = vpop.f32.mrf.mxu0
        %v653 = vadd.f32 %v565, %v652
        %v654 = vpop.f32.mrf.mxu0
        %v655 = vadd.f32 %v570, %v654
        %656 = vdwg.mxu0
        %v657 = vmax.f32 %v629, 0.0
        %v658 = vmax.f32 %v648, 0.0
        %v659 = vmax.f32 %v631, 0.0
        %v660 = vmax.f32 %v650, 0.0
        %v661 = vmax.f32 %v634, 0.0
        %v662 = vmax.f32 %v653, 0.0
        %v663 = vmax.f32 %v636, 0.0
        %v664 = vmax.f32 %v655, 0.0
        %665 = vst [vmem:[#allocation3] sm:$0xff] %v657
        %666 = vst [vmem:[#allocation3 + $0x8] sm:$0xff] %v658
        %667 = vst [vmem:[#allocation3 + $0x10] sm:$0xff] %v659
        %668 = vst [vmem:[#allocation3 + $0x18] sm:$0xff] %v660
        %669 = vst [vmem:[#allocation3 + $0x20] sm:$0xff] %v661
        %670 = vst [vmem:[#allocation3 + $0x28] sm:$0xff] %v662
        %671 = vst [vmem:[#allocation3 + $0x30] sm:$0xff] %v663
        %672 = vst [vmem:[#allocation3 + $0x38] sm:$0xff] %v664
        %v673 = vld [vmem:[#allocation3] sm:$0xff]
        %v674 = vld [vmem:[#allocation3 + $0x10] sm:$0xff]
        %v675 = vld [vmem:[#allocation3 + $0x20] sm:$0xff]
        %v676 = vld [vmem:[#allocation3 + $0x30] sm:$0xff]
        %v677 = vpack.c.bf16 %v674, %v673
        %v678 = vpack.c.bf16 %v676, %v675
        %v680 = vsel %vm612, %v677, 0
        %v683 = vsel %vm612, %v678, 0
        %685 = vmatpush.bf16.msra.mxu0 0
        %686 = vmatpush.bf16.msra.mxu0 0
        %687 = vmatpush.bf16.msra.mxu0 0
        %688 = vmatpush.bf16.msra.mxu0 0
        %689 = vmatpush.bf16.msra.mxu0 %v349
        %690 = vmatpush.bf16.msra.mxu0 %v347
        %691 = vmatpush.bf16.msra.mxu0 %v345
        %692 = vmatpush.bf16.msra.mxu0 %v343
        %693 = vmatmul.bf16.gmra.mxu0 %v680
        %v694 = vpop.f32.mrf.mxu0
        %v695 = vadd.f32 0.0, %v694
        %v696 = vpop.f32.mrf.mxu0
        %v697 = vadd.f32 0.0, %v696
        %698 = vmatmul.bf16.gmra.mxu0 %v683
        %v699 = vpop.f32.mrf.mxu0
        %v700 = vadd.f32 0.0, %v699
        %v701 = vpop.f32.mrf.mxu0
        %v702 = vadd.f32 0.0, %v701
        %703 = vdwg.mxu0
        %704 = vmatpush.bf16.msra.mxu0 0
        %705 = vmatpush.bf16.msra.mxu0 0
        %706 = vmatpush.bf16.msra.mxu0 0
        %707 = vmatpush.bf16.msra.mxu0 0
        %708 = vmatpush.bf16.msra.mxu0 %v350
        %709 = vmatpush.bf16.msra.mxu0 %v348
        %710 = vmatpush.bf16.msra.mxu0 %v346
        %711 = vmatpush.bf16.msra.mxu0 %v344
        %712 = vmatmul.bf16.gmra.mxu0 %v680
        %v713 = vpop.f32.mrf.mxu0
        %v714 = vadd.f32 0.0, %v713
        %v715 = vpop.f32.mrf.mxu0
        %v716 = vadd.f32 0.0, %v715
        %717 = vmatmul.bf16.gmra.mxu0 %v683
        %v718 = vpop.f32.mrf.mxu0
        %v719 = vadd.f32 0.0, %v718
        %v720 = vpop.f32.mrf.mxu0
        %v721 = vadd.f32 0.0, %v720
        %722 = vdwg.mxu0
        %723 = vst [vmem:[#allocation2] sm:$0xff] %v695
        %724 = vst [vmem:[#allocation2 + $0x8] sm:$0xff] %v714
        %725 = vst [vmem:[#allocation2 + $0x40] sm:$0xff] %v697
        %726 = vst [vmem:[#allocation2 + $0x48] sm:$0xff] %v716
        %727 = vst [vmem:[#allocation2 + $0x80] sm:$0xff] %v700
        %728 = vst [vmem:[#allocation2 + $0x88] sm:$0xff] %v719
        %729 = vst [vmem:[#allocation2 + $0xc0] sm:$0xff] %v702
        %730 = vst [vmem:[#allocation2 + $0xc8] sm:$0xff] %v721
        %v731 = vld [vmem:[#allocation3] sm:$0xff]
        %v732 = vld [vmem:[#allocation3 + $0x10] sm:$0xff]
        %v733 = vld [vmem:[#allocation3 + $0x20] sm:$0xff]
        %v734 = vld [vmem:[#allocation3 + $0x30] sm:$0xff]
        %v735 = vpack.c.bf16 %v732, %v731
        %v736 = vpack.c.bf16 %v734, %v733
        %739 = vrot.lane.b32.xlu0 %v735, 64
        %v740 = vpop.permute.xlu0 %739
        %741 = vrot.lane.b32.xlu0 %v736, 64
        %v742 = vpop.permute.xlu0 %741
        %v744 = vsel %vm612, %v740, 0
        %v747 = vsel %vm612, %v742, 0
        %749 = vmatpush.bf16.msra.mxu0 0
        %750 = vmatpush.bf16.msra.mxu0 0
        %751 = vmatpush.bf16.msra.mxu0 0
        %752 = vmatpush.bf16.msra.mxu0 0
        %753 = vmatpush.bf16.msra.mxu0 %v349
        %754 = vmatpush.bf16.msra.mxu0 %v347
        %755 = vmatpush.bf16.msra.mxu0 %v345
        %756 = vmatpush.bf16.msra.mxu0 %v343
        %757 = vmatmul.bf16.gmra.mxu0 %v744
        %v758 = vpop.f32.mrf.mxu0
        %v759 = vadd.f32 0.0, %v758
        %v760 = vpop.f32.mrf.mxu0
        %v761 = vadd.f32 0.0, %v760
        %762 = vmatmul.bf16.gmra.mxu0 %v747
        %v763 = vpop.f32.mrf.mxu0
        %v764 = vadd.f32 0.0, %v763
        %v765 = vpop.f32.mrf.mxu0
        %v766 = vadd.f32 0.0, %v765
        %767 = vdwg.mxu0
        %768 = vmatpush.bf16.msra.mxu0 0
        %769 = vmatpush.bf16.msra.mxu0 0
        %770 = vmatpush.bf16.msra.mxu0 0
        %771 = vmatpush.bf16.msra.mxu0 0
        %772 = vmatpush.bf16.msra.mxu0 %v350
        %773 = vmatpush.bf16.msra.mxu0 %v348
        %774 = vmatpush.bf16.msra.mxu0 %v346
        %775 = vmatpush.bf16.msra.mxu0 %v344
        %776 = vmatmul.bf16.gmra.mxu0 %v744
        %v777 = vpop.f32.mrf.mxu0
        %v778 = vadd.f32 0.0, %v777
        %v779 = vpop.f32.mrf.mxu0
        %v780 = vadd.f32 0.0, %v779
        %781 = vmatmul.bf16.gmra.mxu0 %v747
        %v782 = vpop.f32.mrf.mxu0
        %v783 = vadd.f32 0.0, %v782
        %v784 = vpop.f32.mrf.mxu0
        %v785 = vadd.f32 0.0, %v784
        %786 = vdwg.mxu0
        %787 = vst [vmem:[#allocation2 + $0x10] sm:$0xff] %v759
        %788 = vst [vmem:[#allocation2 + $0x18] sm:$0xff] %v778
        %789 = vst [vmem:[#allocation2 + $0x50] sm:$0xff] %v761
        %790 = vst [vmem:[#allocation2 + $0x58] sm:$0xff] %v780
        %791 = vst [vmem:[#allocation2 + $0x90] sm:$0xff] %v764
        %792 = vst [vmem:[#allocation2 + $0x98] sm:$0xff] %v783
        %793 = vst [vmem:[#allocation2 + $0xd0] sm:$0xff] %v766
        %794 = vst [vmem:[#allocation2 + $0xd8] sm:$0xff] %v785
        %v795 = vld [vmem:[#allocation3 + $0x8] sm:$0xff]
        %v796 = vld [vmem:[#allocation3 + $0x18] sm:$0xff]
        %v797 = vld [vmem:[#allocation3 + $0x28] sm:$0xff]
        %v798 = vld [vmem:[#allocation3 + $0x38] sm:$0xff]
        %v799 = vpack.c.bf16 %v796, %v795
        %v800 = vpack.c.bf16 %v798, %v797
        %v802 = vsel %vm612, %v799, 0
        %v805 = vsel %vm612, %v800, 0
        %807 = vmatpush.bf16.msra.mxu0 0
        %808 = vmatpush.bf16.msra.mxu0 0
        %809 = vmatpush.bf16.msra.mxu0 0
        %810 = vmatpush.bf16.msra.mxu0 0
        %811 = vmatpush.bf16.msra.mxu0 %v349
        %812 = vmatpush.bf16.msra.mxu0 %v347
        %813 = vmatpush.bf16.msra.mxu0 %v345
        %814 = vmatpush.bf16.msra.mxu0 %v343
        %815 = vmatmul.bf16.gmra.mxu0 %v802
        %v816 = vpop.f32.mrf.mxu0
        %v817 = vadd.f32 0.0, %v816
        %v818 = vpop.f32.mrf.mxu0
        %v819 = vadd.f32 0.0, %v818
        %820 = vmatmul.bf16.gmra.mxu0 %v805
        %v821 = vpop.f32.mrf.mxu0
        %v822 = vadd.f32 0.0, %v821
        %v823 = vpop.f32.mrf.mxu0
        %v824 = vadd.f32 0.0, %v823
        %825 = vdwg.mxu0
        %826 = vmatpush.bf16.msra.mxu0 0
        %827 = vmatpush.bf16.msra.mxu0 0
        %828 = vmatpush.bf16.msra.mxu0 0
        %829 = vmatpush.bf16.msra.mxu0 0
        %830 = vmatpush.bf16.msra.mxu0 %v350
        %831 = vmatpush.bf16.msra.mxu0 %v348
        %832 = vmatpush.bf16.msra.mxu0 %v346
        %833 = vmatpush.bf16.msra.mxu0 %v344
        %834 = vmatmul.bf16.gmra.mxu0 %v802
        %v835 = vpop.f32.mrf.mxu0
        %v836 = vadd.f32 0.0, %v835
        %v837 = vpop.f32.mrf.mxu0
        %v838 = vadd.f32 0.0, %v837
        %839 = vmatmul.bf16.gmra.mxu0 %v805
        %v840 = vpop.f32.mrf.mxu0
        %v841 = vadd.f32 0.0, %v840
        %v842 = vpop.f32.mrf.mxu0
        %v843 = vadd.f32 0.0, %v842
        %844 = vdwg.mxu0
        %845 = vst [vmem:[#allocation2 + $0x20] sm:$0xff] %v817
        %846 = vst [vmem:[#allocation2 + $0x28] sm:$0xff] %v836
        %847 = vst [vmem:[#allocation2 + $0x60] sm:$0xff] %v819
        %848 = vst [vmem:[#allocation2 + $0x68] sm:$0xff] %v838
        %849 = vst [vmem:[#allocation2 + $0xa0] sm:$0xff] %v822
        %850 = vst [vmem:[#allocation2 + $0xa8] sm:$0xff] %v841
        %851 = vst [vmem:[#allocation2 + $0xe0] sm:$0xff] %v824
        %852 = vst [vmem:[#allocation2 + $0xe8] sm:$0xff] %v843
        %v853 = vld [vmem:[#allocation3 + $0x8] sm:$0xff]
        %v854 = vld [vmem:[#allocation3 + $0x18] sm:$0xff]
        %v855 = vld [vmem:[#allocation3 + $0x28] sm:$0xff]
        %v856 = vld [vmem:[#allocation3 + $0x38] sm:$0xff]
        %v857 = vpack.c.bf16 %v854, %v853
        %v858 = vpack.c.bf16 %v856, %v855
        %861 = vrot.lane.b32.xlu0 %v857, 64
        %v862 = vpop.permute.xlu0 %861
        %863 = vrot.lane.b32.xlu0 %v858, 64
        %v864 = vpop.permute.xlu0 %863
        %v866 = vsel %vm612, %v862, 0
        %v869 = vsel %vm612, %v864, 0
        %871 = vmatpush.bf16.msra.mxu0 0
        %872 = vmatpush.bf16.msra.mxu0 0
        %873 = vmatpush.bf16.msra.mxu0 0
        %874 = vmatpush.bf16.msra.mxu0 0
        %875 = vmatpush.bf16.msra.mxu0 %v349
        %876 = vmatpush.bf16.msra.mxu0 %v347
        %877 = vmatpush.bf16.msra.mxu0 %v345
        %878 = vmatpush.bf16.msra.mxu0 %v343
        %879 = vmatmul.bf16.gmra.mxu0 %v866
        %v880 = vpop.f32.mrf.mxu0
        %v881 = vadd.f32 0.0, %v880
        %v882 = vpop.f32.mrf.mxu0
        %v883 = vadd.f32 0.0, %v882
        %884 = vmatmul.bf16.gmra.mxu0 %v869
        %v885 = vpop.f32.mrf.mxu0
        %v886 = vadd.f32 0.0, %v885
        %v887 = vpop.f32.mrf.mxu0
        %v888 = vadd.f32 0.0, %v887
        %889 = vdwg.mxu0
        %890 = vmatpush.bf16.msra.mxu0 0
        %891 = vmatpush.bf16.msra.mxu0 0
        %892 = vmatpush.bf16.msra.mxu0 0
        %893 = vmatpush.bf16.msra.mxu0 0
        %894 = vmatpush.bf16.msra.mxu0 %v350
        %895 = vmatpush.bf16.msra.mxu0 %v348
        %896 = vmatpush.bf16.msra.mxu0 %v346
        %897 = vmatpush.bf16.msra.mxu0 %v344
        %898 = vmatmul.bf16.gmra.mxu0 %v866
        %v899 = vpop.f32.mrf.mxu0
        %v900 = vadd.f32 0.0, %v899
        %v901 = vpop.f32.mrf.mxu0
        %v902 = vadd.f32 0.0, %v901
        %903 = vmatmul.bf16.gmra.mxu0 %v869
        %v904 = vpop.f32.mrf.mxu0
        %v905 = vadd.f32 0.0, %v904
        %v906 = vpop.f32.mrf.mxu0
        %v907 = vadd.f32 0.0, %v906
        %908 = vdwg.mxu0
        %909 = vst [vmem:[#allocation2 + $0x30] sm:$0xff] %v881
        %910 = vst [vmem:[#allocation2 + $0x38] sm:$0xff] %v900
        %911 = vst [vmem:[#allocation2 + $0x70] sm:$0xff] %v883
        %912 = vst [vmem:[#allocation2 + $0x78] sm:$0xff] %v902
        %913 = vst [vmem:[#allocation2 + $0xb0] sm:$0xff] %v886
        %914 = vst [vmem:[#allocation2 + $0xb8] sm:$0xff] %v905
        %915 = vst [vmem:[#allocation2 + $0xf0] sm:$0xff] %v888
        %916 = vst [vmem:[#allocation2 + $0xf8] sm:$0xff] %v907
        %v917 = vld [vmem:[#allocation2] sm:$0xff]
        %v918 = vld [vmem:[#allocation2 + $0x8] sm:$0xff]
        %v919 = vld [vmem:[#allocation2 + $0x10] sm:$0xff]
        %v920 = vld [vmem:[#allocation2 + $0x18] sm:$0xff]
        %v921 = vld [vmem:[#allocation2 + $0x20] sm:$0xff]
        %v922 = vld [vmem:[#allocation2 + $0x28] sm:$0xff]
        %v923 = vld [vmem:[#allocation2 + $0x30] sm:$0xff]
        %v924 = vld [vmem:[#allocation2 + $0x38] sm:$0xff]
        %v925 = vld [vmem:[#allocation2 + $0x40] sm:$0xff]
        %v926 = vld [vmem:[#allocation2 + $0x48] sm:$0xff]
        %v927 = vld [vmem:[#allocation2 + $0x50] sm:$0xff]
        %v928 = vld [vmem:[#allocation2 + $0x58] sm:$0xff]
        %v929 = vld [vmem:[#allocation2 + $0x60] sm:$0xff]
        %v930 = vld [vmem:[#allocation2 + $0x68] sm:$0xff]
        %v931 = vld [vmem:[#allocation2 + $0x70] sm:$0xff]
        %v932 = vld [vmem:[#allocation2 + $0x78] sm:$0xff]
        %v933 = vld [vmem:[#allocation2 + $0x80] sm:$0xff]
        %v934 = vld [vmem:[#allocation2 + $0x88] sm:$0xff]
        %v935 = vld [vmem:[#allocation2 + $0x90] sm:$0xff]
        %v936 = vld [vmem:[#allocation2 + $0x98] sm:$0xff]
        %v937 = vld [vmem:[#allocation2 + $0xa0] sm:$0xff]
        %v938 = vld [vmem:[#allocation2 + $0xa8] sm:$0xff]
        %v939 = vld [vmem:[#allocation2 + $0xb0] sm:$0xff]
        %v940 = vld [vmem:[#allocation2 + $0xb8] sm:$0xff]
        %v941 = vld [vmem:[#allocation2 + $0xc0] sm:$0xff]
        %v942 = vld [vmem:[#allocation2 + $0xc8] sm:$0xff]
        %v943 = vld [vmem:[#allocation2 + $0xd0] sm:$0xff]
        %v944 = vld [vmem:[#allocation2 + $0xd8] sm:$0xff]
        %v945 = vld [vmem:[#allocation2 + $0xe0] sm:$0xff]
        %v946 = vld [vmem:[#allocation2 + $0xe8] sm:$0xff]
        %v947 = vld [vmem:[#allocation2 + $0xf0] sm:$0xff]
        %v948 = vld [vmem:[#allocation2 + $0xf8] sm:$0xff]
        %v949 = vld [vmem:[#allocation2 + $0x100] sm:$0xff]
        %v950 = vld [vmem:[#allocation2 + $0x108] sm:$0xff]
        %v951 = vld [vmem:[#allocation2 + $0x110] sm:$0xff]
        %v952 = vld [vmem:[#allocation2 + $0x118] sm:$0xff]
        %v953 = vld [vmem:[#allocation2 + $0x120] sm:$0xff]
        %v954 = vld [vmem:[#allocation2 + $0x128] sm:$0xff]
        %v955 = vld [vmem:[#allocation2 + $0x130] sm:$0xff]
        %v956 = vld [vmem:[#allocation2 + $0x138] sm:$0xff]
        %957 = vrot.lane.b32.xlu0 %v917, 17
        %v958 = vpop.permute.xlu0 %957
        %959 = vrot.lane.b32.xlu0 %v925, 17
        %v960 = vpop.permute.xlu0 %959
        %961 = vrot.lane.b32.xlu0 %v933, 17
        %v962 = vpop.permute.xlu0 %961
        %963 = vrot.lane.b32.xlu0 %v941, 17
        %v964 = vpop.permute.xlu0 %963
        %965 = vrot.lane.b32.xlu0 %v949, 17
        %v966 = vpop.permute.xlu0 %965
        %967 = vrot.lane.b32.xlu0 %v918, 17
        %v968 = vpop.permute.xlu0 %967
        %969 = vrot.lane.b32.xlu0 %v926, 17
        %v970 = vpop.permute.xlu0 %969
        %971 = vrot.lane.b32.xlu0 %v934, 17
        %v972 = vpop.permute.xlu0 %971
        %973 = vrot.lane.b32.xlu0 %v942, 17
        %v974 = vpop.permute.xlu0 %973
        %975 = vrot.lane.b32.xlu0 %v950, 17
        %v976 = vpop.permute.xlu0 %975
        %977 = vrot.lane.b32.xlu0 %v919, 17
        %v978 = vpop.permute.xlu0 %977
        %979 = vrot.lane.b32.xlu0 %v927, 17
        %v980 = vpop.permute.xlu0 %979
        %981 = vrot.lane.b32.xlu0 %v935, 17
        %v982 = vpop.permute.xlu0 %981
        %983 = vrot.lane.b32.xlu0 %v943, 17
        %v984 = vpop.permute.xlu0 %983
        %985 = vrot.lane.b32.xlu0 %v951, 17
        %v986 = vpop.permute.xlu0 %985
        %987 = vrot.lane.b32.xlu0 %v920, 17
        %v988 = vpop.permute.xlu0 %987
        %989 = vrot.lane.b32.xlu0 %v928, 17
        %v990 = vpop.permute.xlu0 %989
        %991 = vrot.lane.b32.xlu0 %v936, 17
        %v992 = vpop.permute.xlu0 %991
        %993 = vrot.lane.b32.xlu0 %v944, 17
        %v994 = vpop.permute.xlu0 %993
        %995 = vrot.lane.b32.xlu0 %v952, 17
        %v996 = vpop.permute.xlu0 %995
        %997 = vrot.lane.b32.xlu0 %v921, 17
        %v998 = vpop.permute.xlu0 %997
        %999 = vrot.lane.b32.xlu0 %v929, 17
        %v1000 = vpop.permute.xlu0 %999
        %1001 = vrot.lane.b32.xlu0 %v937, 17
        %v1002 = vpop.permute.xlu0 %1001
        %1003 = vrot.lane.b32.xlu0 %v945, 17
        %v1004 = vpop.permute.xlu0 %1003
        %1005 = vrot.lane.b32.xlu0 %v953, 17
        %v1006 = vpop.permute.xlu0 %1005
        %1007 = vrot.lane.b32.xlu0 %v922, 17
        %v1008 = vpop.permute.xlu0 %1007
        %1009 = vrot.lane.b32.xlu0 %v930, 17
        %v1010 = vpop.permute.xlu0 %1009
        %1011 = vrot.lane.b32.xlu0 %v938, 17
        %v1012 = vpop.permute.xlu0 %1011
        %1013 = vrot.lane.b32.xlu0 %v946, 17
        %v1014 = vpop.permute.xlu0 %1013
        %1015 = vrot.lane.b32.xlu0 %v954, 17
        %v1016 = vpop.permute.xlu0 %1015
        %1017 = vrot.lane.b32.xlu0 %v923, 17
        %v1018 = vpop.permute.xlu0 %1017
        %1019 = vrot.lane.b32.xlu0 %v931, 17
        %v1020 = vpop.permute.xlu0 %1019
        %1021 = vrot.lane.b32.xlu0 %v939, 17
        %v1022 = vpop.permute.xlu0 %1021
        %1023 = vrot.lane.b32.xlu0 %v947, 17
        %v1024 = vpop.permute.xlu0 %1023
        %1025 = vrot.lane.b32.xlu0 %v955, 17
        %v1026 = vpop.permute.xlu0 %1025
        %1027 = vrot.lane.b32.xlu0 %v924, 17
        %v1028 = vpop.permute.xlu0 %1027
        %1029 = vrot.lane.b32.xlu0 %v932, 17
        %v1030 = vpop.permute.xlu0 %1029
        %1031 = vrot.lane.b32.xlu0 %v940, 17
        %v1032 = vpop.permute.xlu0 %1031
        %1033 = vrot.lane.b32.xlu0 %v948, 17
        %v1034 = vpop.permute.xlu0 %1033
        %1035 = vrot.lane.b32.xlu0 %v956, 17
        %v1036 = vpop.permute.xlu0 %1035
        %v1037 = vlaneseq
        %v1038 = vand.u32 %v1037, 127
        %vm1039 = vcmp.lt.s32.totalorder %v1038, 17
        %v1040 = vsel %vm1039, %v1018, %v1028
        %v1041 = vsel %vm1039, %v1020, %v1030
        %v1042 = vsel %vm1039, %v1022, %v1032
        %v1043 = vsel %vm1039, %v1024, %v1034
        %v1044 = vsel %vm1039, %v1026, %v1036
        %v1045 = vsel %vm1039, %v1008, %v1018
        %v1046 = vsel %vm1039, %v1010, %v1020
        %v1047 = vsel %vm1039, %v1012, %v1022
        %v1048 = vsel %vm1039, %v1014, %v1024
        %v1049 = vsel %vm1039, %v1016, %v1026
        %v1050 = vsel %vm1039, %v998, %v1008
        %v1051 = vsel %vm1039, %v1000, %v1010
        %v1052 = vsel %vm1039, %v1002, %v1012
        %v1053 = vsel %vm1039, %v1004, %v1014
        %v1054 = vsel %vm1039, %v1006, %v1016
        %v1055 = vsel %vm1039, %v988, %v998
        %v1056 = vsel %vm1039, %v990, %v1000
        %v1057 = vsel %vm1039, %v992, %v1002
        %v1058 = vsel %vm1039, %v994, %v1004
        %v1059 = vsel %vm1039, %v996, %v1006
        %v1060 = vsel %vm1039, %v978, %v988
        %v1061 = vsel %vm1039, %v980, %v990
        %v1062 = vsel %vm1039, %v982, %v992
        %v1063 = vsel %vm1039, %v984, %v994
        %v1064 = vsel %vm1039, %v986, %v996
        %v1065 = vsel %vm1039, %v968, %v978
        %v1066 = vsel %vm1039, %v970, %v980
        %v1067 = vsel %vm1039, %v972, %v982
        %v1068 = vsel %vm1039, %v974, %v984
        %v1069 = vsel %vm1039, %v976, %v986
        %v1070 = vsel %vm1039, %v958, %v968
        %v1071 = vsel %vm1039, %v960, %v970
        %v1072 = vsel %vm1039, %v962, %v972
        %v1073 = vsel %vm1039, %v964, %v974
        %v1074 = vsel %vm1039, %v966, %v976
        %v1075 = vsel %vm1039, %v1028, %v958
        %v1076 = vsel %vm1039, %v1030, %v960
        %v1077 = vsel %vm1039, %v1032, %v962
        %v1078 = vsel %vm1039, %v1034, %v964
        %v1079 = vsel %vm1039, %v1036, %v966
        %v1080 = vld [vmem:[%s4] ss:$8 sm:$0xf]
        %v1081 = vld [vmem:[%s4] ss:$8 sm:$0xf0]
        %v1082 = vor.u32 %v1080, %v1081
        %v1084 = vperm.slane %v1082, 0
        %v1085 = vperm.slane %v1082, 1
        %v1086 = vperm.slane %v1082, 2
        %v1087 = vperm.slane %v1082, 3
        %v1088 = vperm.slane %v1082, 4
        %v1089 = vperm.slane %v1082, 5
        %v1090 = vperm.slane %v1082, 6
        %v1091 = vperm.slane %v1082, 7
        %v1100 = vmul.f32 %v1075, %v1084
        %v1101 = vmul.f32 %v1070, %v1085
        %v1102 = vmul.f32 %v1065, %v1086
        %v1103 = vmul.f32 %v1060, %v1087
        %v1104 = vmul.f32 %v1055, %v1088
        %v1105 = vmul.f32 %v1050, %v1089
        %v1106 = vmul.f32 %v1045, %v1090
        %v1107 = vmul.f32 %v1040, %v1091
        %v1108 = vmul.f32 %v1076, %v1084
        %v1109 = vmul.f32 %v1071, %v1085
        %v1110 = vmul.f32 %v1066, %v1086
        %v1111 = vmul.f32 %v1061, %v1087
        %v1112 = vmul.f32 %v1056, %v1088
        %v1113 = vmul.f32 %v1051, %v1089
        %v1114 = vmul.f32 %v1046, %v1090
        %v1115 = vmul.f32 %v1041, %v1091
        %v1116 = vmul.f32 %v1077, %v1084
        %v1117 = vmul.f32 %v1072, %v1085
        %v1118 = vmul.f32 %v1067, %v1086
        %v1119 = vmul.f32 %v1062, %v1087
        %v1120 = vmul.f32 %v1057, %v1088
        %v1121 = vmul.f32 %v1052, %v1089
        %v1122 = vmul.f32 %v1047, %v1090
        %v1123 = vmul.f32 %v1042, %v1091
        %v1124 = vmul.f32 %v1078, %v1084
        %v1125 = vmul.f32 %v1073, %v1085
        %v1126 = vmul.f32 %v1068, %v1086
        %v1127 = vmul.f32 %v1063, %v1087
        %v1128 = vmul.f32 %v1058, %v1088
        %v1129 = vmul.f32 %v1053, %v1089
        %v1130 = vmul.f32 %v1048, %v1090
        %v1131 = vmul.f32 %v1043, %v1091
        %v1132 = vmul.f32 %v1079, %v1084
        %v1133 = vmul.f32 %v1074, %v1085
        %v1134 = vmul.f32 %v1069, %v1086
        %v1135 = vmul.f32 %v1064, %v1087
        %v1136 = vmul.f32 %v1059, %v1088
        %v1137 = vmul.f32 %v1054, %v1089
        %v1138 = vmul.f32 %v1049, %v1090
        %v1139 = vmul.f32 %v1044, %v1091
        %1140 = vrot.lane.b32.xlu0 %v917, 16
        %v1141 = vpop.permute.xlu0 %1140
        %1142 = vrot.lane.b32.xlu0 %v925, 16
        %v1143 = vpop.permute.xlu0 %1142
        %1144 = vrot.lane.b32.xlu0 %v933, 16
        %v1145 = vpop.permute.xlu0 %1144
        %1146 = vrot.lane.b32.xlu0 %v941, 16
        %v1147 = vpop.permute.xlu0 %1146
        %1148 = vrot.lane.b32.xlu0 %v949, 16
        %v1149 = vpop.permute.xlu0 %1148
        %1150 = vrot.lane.b32.xlu0 %v918, 16
        %v1151 = vpop.permute.xlu0 %1150
        %1152 = vrot.lane.b32.xlu0 %v926, 16
        %v1153 = vpop.permute.xlu0 %1152
        %1154 = vrot.lane.b32.xlu0 %v934, 16
        %v1155 = vpop.permute.xlu0 %1154
        %1156 = vrot.lane.b32.xlu0 %v942, 16
        %v1157 = vpop.permute.xlu0 %1156
        %1158 = vrot.lane.b32.xlu0 %v950, 16
        %v1159 = vpop.permute.xlu0 %1158
        %1160 = vrot.lane.b32.xlu0 %v919, 16
        %v1161 = vpop.permute.xlu0 %1160
        %1162 = vrot.lane.b32.xlu0 %v927, 16
        %v1163 = vpop.permute.xlu0 %1162
        %1164 = vrot.lane.b32.xlu0 %v935, 16
        %v1165 = vpop.permute.xlu0 %1164
        %1166 = vrot.lane.b32.xlu0 %v943, 16
        %v1167 = vpop.permute.xlu0 %1166
        %1168 = vrot.lane.b32.xlu0 %v951, 16
        %v1169 = vpop.permute.xlu0 %1168
        %1170 = vrot.lane.b32.xlu0 %v920, 16
        %v1171 = vpop.permute.xlu0 %1170
        %1172 = vrot.lane.b32.xlu0 %v928, 16
        %v1173 = vpop.permute.xlu0 %1172
        %1174 = vrot.lane.b32.xlu0 %v936, 16
        %v1175 = vpop.permute.xlu0 %1174
        %1176 = vrot.lane.b32.xlu0 %v944, 16
        %v1177 = vpop.permute.xlu0 %1176
        %1178 = vrot.lane.b32.xlu0 %v952, 16
        %v1179 = vpop.permute.xlu0 %1178
        %1180 = vrot.lane.b32.xlu0 %v921, 16
        %v1181 = vpop.permute.xlu0 %1180
        %1182 = vrot.lane.b32.xlu0 %v929, 16
        %v1183 = vpop.permute.xlu0 %1182
        %1184 = vrot.lane.b32.xlu0 %v937, 16
        %v1185 = vpop.permute.xlu0 %1184
        %1186 = vrot.lane.b32.xlu0 %v945, 16
        %v1187 = vpop.permute.xlu0 %1186
        %1188 = vrot.lane.b32.xlu0 %v953, 16
        %v1189 = vpop.permute.xlu0 %1188
        %1190 = vrot.lane.b32.xlu0 %v922, 16
        %v1191 = vpop.permute.xlu0 %1190
        %1192 = vrot.lane.b32.xlu0 %v930, 16
        %v1193 = vpop.permute.xlu0 %1192
        %1194 = vrot.lane.b32.xlu0 %v938, 16
        %v1195 = vpop.permute.xlu0 %1194
        %1196 = vrot.lane.b32.xlu0 %v946, 16
        %v1197 = vpop.permute.xlu0 %1196
        %1198 = vrot.lane.b32.xlu0 %v954, 16
        %v1199 = vpop.permute.xlu0 %1198
        %1200 = vrot.lane.b32.xlu0 %v923, 16
        %v1201 = vpop.permute.xlu0 %1200
        %1202 = vrot.lane.b32.xlu0 %v931, 16
        %v1203 = vpop.permute.xlu0 %1202
        %1204 = vrot.lane.b32.xlu0 %v939, 16
        %v1205 = vpop.permute.xlu0 %1204
        %1206 = vrot.lane.b32.xlu0 %v947, 16
        %v1207 = vpop.permute.xlu0 %1206
        %1208 = vrot.lane.b32.xlu0 %v955, 16
        %v1209 = vpop.permute.xlu0 %1208
        %1210 = vrot.lane.b32.xlu0 %v924, 16
        %v1211 = vpop.permute.xlu0 %1210
        %1212 = vrot.lane.b32.xlu0 %v932, 16
        %v1213 = vpop.permute.xlu0 %1212
        %1214 = vrot.lane.b32.xlu0 %v940, 16
        %v1215 = vpop.permute.xlu0 %1214
        %1216 = vrot.lane.b32.xlu0 %v948, 16
        %v1217 = vpop.permute.xlu0 %1216
        %1218 = vrot.lane.b32.xlu0 %v956, 16
        %v1219 = vpop.permute.xlu0 %1218
        %vm1220 = vcmp.lt.s32.totalorder %v1038, 16
        %v1221 = vsel %vm1220, %v1201, %v1211
        %v1222 = vsel %vm1220, %v1203, %v1213
        %v1223 = vsel %vm1220, %v1205, %v1215
        %v1224 = vsel %vm1220, %v1207, %v1217
        %v1225 = vsel %vm1220, %v1209, %v1219
        %v1226 = vsel %vm1220, %v1191, %v1201
        %v1227 = vsel %vm1220, %v1193, %v1203
        %v1228 = vsel %vm1220, %v1195, %v1205
        %v1229 = vsel %vm1220, %v1197, %v1207
        %v1230 = vsel %vm1220, %v1199, %v1209
        %v1231 = vsel %vm1220, %v1181, %v1191
        %v1232 = vsel %vm1220, %v1183, %v1193
        %v1233 = vsel %vm1220, %v1185, %v1195
        %v1234 = vsel %vm1220, %v1187, %v1197
        %v1235 = vsel %vm1220, %v1189, %v1199
        %v1236 = vsel %vm1220, %v1171, %v1181
        %v1237 = vsel %vm1220, %v1173, %v1183
        %v1238 = vsel %vm1220, %v1175, %v1185
        %v1239 = vsel %vm1220, %v1177, %v1187
        %v1240 = vsel %vm1220, %v1179, %v1189
        %v1241 = vsel %vm1220, %v1161, %v1171
        %v1242 = vsel %vm1220, %v1163, %v1173
        %v1243 = vsel %vm1220, %v1165, %v1175
        %v1244 = vsel %vm1220, %v1167, %v1177
        %v1245 = vsel %vm1220, %v1169, %v1179
        %v1246 = vsel %vm1220, %v1151, %v1161
        %v1247 = vsel %vm1220, %v1153, %v1163
        %v1248 = vsel %vm1220, %v1155, %v1165
        %v1249 = vsel %vm1220, %v1157, %v1167
        %v1250 = vsel %vm1220, %v1159, %v1169
        %v1251 = vsel %vm1220, %v1141, %v1151
        %v1252 = vsel %vm1220, %v1143, %v1153
        %v1253 = vsel %vm1220, %v1145, %v1155
        %v1254 = vsel %vm1220, %v1147, %v1157
        %v1255 = vsel %vm1220, %v1149, %v1159
        %v1256 = vsel %vm1220, %v1211, %v1141
        %v1257 = vsel %vm1220, %v1213, %v1143
        %v1258 = vsel %vm1220, %v1215, %v1145
        %v1259 = vsel %vm1220, %v1217, %v1147
        %v1260 = vsel %vm1220, %v1219, %v1149
        %s1261 = scalar_lea.vmem %s4, 1
        %v1262 = vld [vmem:[%s1261] ss:$8 sm:$0xf]
        %v1263 = vld [vmem:[%s1261] ss:$8 sm:$0xf0]
        %v1264 = vor.u32 %v1262, %v1263
        %v1266 = vperm.slane %v1264, 0
        %v1267 = vperm.slane %v1264, 1
        %v1268 = vperm.slane %v1264, 2
        %v1269 = vperm.slane %v1264, 3
        %v1270 = vperm.slane %v1264, 4
        %v1271 = vperm.slane %v1264, 5
        %v1272 = vperm.slane %v1264, 6
        %v1273 = vperm.slane %v1264, 7
        %v1282 = vmul.f32 %v1256, %v1266
        %v1283 = vmul.f32 %v1251, %v1267
        %v1284 = vmul.f32 %v1246, %v1268
        %v1285 = vmul.f32 %v1241, %v1269
        %v1286 = vmul.f32 %v1236, %v1270
        %v1287 = vmul.f32 %v1231, %v1271
        %v1288 = vmul.f32 %v1226, %v1272
        %v1289 = vmul.f32 %v1221, %v1273
        %v1290 = vmul.f32 %v1257, %v1266
        %v1291 = vmul.f32 %v1252, %v1267
        %v1292 = vmul.f32 %v1247, %v1268
        %v1293 = vmul.f32 %v1242, %v1269
        %v1294 = vmul.f32 %v1237, %v1270
        %v1295 = vmul.f32 %v1232, %v1271
        %v1296 = vmul.f32 %v1227, %v1272
        %v1297 = vmul.f32 %v1222, %v1273
        %v1298 = vmul.f32 %v1258, %v1266
        %v1299 = vmul.f32 %v1253, %v1267
        %v1300 = vmul.f32 %v1248, %v1268
        %v1301 = vmul.f32 %v1243, %v1269
        %v1302 = vmul.f32 %v1238, %v1270
        %v1303 = vmul.f32 %v1233, %v1271
        %v1304 = vmul.f32 %v1228, %v1272
        %v1305 = vmul.f32 %v1223, %v1273
        %v1306 = vmul.f32 %v1259, %v1266
        %v1307 = vmul.f32 %v1254, %v1267
        %v1308 = vmul.f32 %v1249, %v1268
        %v1309 = vmul.f32 %v1244, %v1269
        %v1310 = vmul.f32 %v1239, %v1270
        %v1311 = vmul.f32 %v1234, %v1271
        %v1312 = vmul.f32 %v1229, %v1272
        %v1313 = vmul.f32 %v1224, %v1273
        %v1314 = vmul.f32 %v1260, %v1266
        %v1315 = vmul.f32 %v1255, %v1267
        %v1316 = vmul.f32 %v1250, %v1268
        %v1317 = vmul.f32 %v1245, %v1269
        %v1318 = vmul.f32 %v1240, %v1270
        %v1319 = vmul.f32 %v1235, %v1271
        %v1320 = vmul.f32 %v1230, %v1272
        %v1321 = vmul.f32 %v1225, %v1273
        %1322 = vrot.lane.b32.xlu0 %v917, 15
        %v1323 = vpop.permute.xlu0 %1322
        %1324 = vrot.lane.b32.xlu0 %v925, 15
        %v1325 = vpop.permute.xlu0 %1324
        %1326 = vrot.lane.b32.xlu0 %v933, 15
        %v1327 = vpop.permute.xlu0 %1326
        %1328 = vrot.lane.b32.xlu0 %v941, 15
        %v1329 = vpop.permute.xlu0 %1328
        %1330 = vrot.lane.b32.xlu0 %v949, 15
        %v1331 = vpop.permute.xlu0 %1330
        %1332 = vrot.lane.b32.xlu0 %v918, 15
        %v1333 = vpop.permute.xlu0 %1332
        %1334 = vrot.lane.b32.xlu0 %v926, 15
        %v1335 = vpop.permute.xlu0 %1334
        %1336 = vrot.lane.b32.xlu0 %v934, 15
        %v1337 = vpop.permute.xlu0 %1336
        %1338 = vrot.lane.b32.xlu0 %v942, 15
        %v1339 = vpop.permute.xlu0 %1338
        %1340 = vrot.lane.b32.xlu0 %v950, 15
        %v1341 = vpop.permute.xlu0 %1340
        %1342 = vrot.lane.b32.xlu0 %v919, 15
        %v1343 = vpop.permute.xlu0 %1342
        %1344 = vrot.lane.b32.xlu0 %v927, 15
        %v1345 = vpop.permute.xlu0 %1344
        %1346 = vrot.lane.b32.xlu0 %v935, 15
        %v1347 = vpop.permute.xlu0 %1346
        %1348 = vrot.lane.b32.xlu0 %v943, 15
        %v1349 = vpop.permute.xlu0 %1348
        %1350 = vrot.lane.b32.xlu0 %v951, 15
        %v1351 = vpop.permute.xlu0 %1350
        %1352 = vrot.lane.b32.xlu0 %v920, 15
        %v1353 = vpop.permute.xlu0 %1352
        %1354 = vrot.lane.b32.xlu0 %v928, 15
        %v1355 = vpop.permute.xlu0 %1354
        %1356 = vrot.lane.b32.xlu0 %v936, 15
        %v1357 = vpop.permute.xlu0 %1356
        %1358 = vrot.lane.b32.xlu0 %v944, 15
        %v1359 = vpop.permute.xlu0 %1358
        %1360 = vrot.lane.b32.xlu0 %v952, 15
        %v1361 = vpop.permute.xlu0 %1360
        %1362 = vrot.lane.b32.xlu0 %v921, 15
        %v1363 = vpop.permute.xlu0 %1362
        %1364 = vrot.lane.b32.xlu0 %v929, 15
        %v1365 = vpop.permute.xlu0 %1364
        %1366 = vrot.lane.b32.xlu0 %v937, 15
        %v1367 = vpop.permute.xlu0 %1366
        %1368 = vrot.lane.b32.xlu0 %v945, 15
        %v1369 = vpop.permute.xlu0 %1368
        %1370 = vrot.lane.b32.xlu0 %v953, 15
        %v1371 = vpop.permute.xlu0 %1370
        %1372 = vrot.lane.b32.xlu0 %v922, 15
        %v1373 = vpop.permute.xlu0 %1372
        %1374 = vrot.lane.b32.xlu0 %v930, 15
        %v1375 = vpop.permute.xlu0 %1374
        %1376 = vrot.lane.b32.xlu0 %v938, 15
        %v1377 = vpop.permute.xlu0 %1376
        %1378 = vrot.lane.b32.xlu0 %v946, 15
        %v1379 = vpop.permute.xlu0 %1378
        %1380 = vrot.lane.b32.xlu0 %v954, 15
        %v1381 = vpop.permute.xlu0 %1380
        %1382 = vrot.lane.b32.xlu0 %v923, 15
        %v1383 = vpop.permute.xlu0 %1382
        %1384 = vrot.lane.b32.xlu0 %v931, 15
        %v1385 = vpop.permute.xlu0 %1384
        %1386 = vrot.lane.b32.xlu0 %v939, 15
        %v1387 = vpop.permute.xlu0 %1386
        %1388 = vrot.lane.b32.xlu0 %v947, 15
        %v1389 = vpop.permute.xlu0 %1388
        %1390 = vrot.lane.b32.xlu0 %v955, 15
        %v1391 = vpop.permute.xlu0 %1390
        %1392 = vrot.lane.b32.xlu0 %v924, 15
        %v1393 = vpop.permute.xlu0 %1392
        %1394 = vrot.lane.b32.xlu0 %v932, 15
        %v1395 = vpop.permute.xlu0 %1394
        %1396 = vrot.lane.b32.xlu0 %v940, 15
        %v1397 = vpop.permute.xlu0 %1396
        %1398 = vrot.lane.b32.xlu0 %v948, 15
        %v1399 = vpop.permute.xlu0 %1398
        %1400 = vrot.lane.b32.xlu0 %v956, 15
        %v1401 = vpop.permute.xlu0 %1400
        %vm1402 = vcmp.lt.s32.totalorder %v1038, 15
        %v1403 = vsel %vm1402, %v1383, %v1393
        %v1404 = vsel %vm1402, %v1385, %v1395
        %v1405 = vsel %vm1402, %v1387, %v1397
        %v1406 = vsel %vm1402, %v1389, %v1399
        %v1407 = vsel %vm1402, %v1391, %v1401
        %v1408 = vsel %vm1402, %v1373, %v1383
        %v1409 = vsel %vm1402, %v1375, %v1385
        %v1410 = vsel %vm1402, %v1377, %v1387
        %v1411 = vsel %vm1402, %v1379, %v1389
        %v1412 = vsel %vm1402, %v1381, %v1391
        %v1413 = vsel %vm1402, %v1363, %v1373
        %v1414 = vsel %vm1402, %v1365, %v1375
        %v1415 = vsel %vm1402, %v1367, %v1377
        %v1416 = vsel %vm1402, %v1369, %v1379
        %v1417 = vsel %vm1402, %v1371, %v1381
        %v1418 = vsel %vm1402, %v1353, %v1363
        %v1419 = vsel %vm1402, %v1355, %v1365
        %v1420 = vsel %vm1402, %v1357, %v1367
        %v1421 = vsel %vm1402, %v1359, %v1369
        %v1422 = vsel %vm1402, %v1361, %v1371
        %v1423 = vsel %vm1402, %v1343, %v1353
        %v1424 = vsel %vm1402, %v1345, %v1355
        %v1425 = vsel %vm1402, %v1347, %v1357
        %v1426 = vsel %vm1402, %v1349, %v1359
        %v1427 = vsel %vm1402, %v1351, %v1361
        %v1428 = vsel %vm1402, %v1333, %v1343
        %v1429 = vsel %vm1402, %v1335, %v1345
        %v1430 = vsel %vm1402, %v1337, %v1347
        %v1431 = vsel %vm1402, %v1339, %v1349
        %v1432 = vsel %vm1402, %v1341, %v1351
        %v1433 = vsel %vm1402, %v1323, %v1333
        %v1434 = vsel %vm1402, %v1325, %v1335
        %v1435 = vsel %vm1402, %v1327, %v1337
        %v1436 = vsel %vm1402, %v1329, %v1339
        %v1437 = vsel %vm1402, %v1331, %v1341
        %v1438 = vsel %vm1402, %v1393, %v1323
        %v1439 = vsel %vm1402, %v1395, %v1325
        %v1440 = vsel %vm1402, %v1397, %v1327
        %v1441 = vsel %vm1402, %v1399, %v1329
        %v1442 = vsel %vm1402, %v1401, %v1331
        %s1443 = scalar_lea.vmem %s4, 2
        %v1444 = vld [vmem:[%s1443] ss:$8 sm:$0xf]
        %v1445 = vld [vmem:[%s1443] ss:$8 sm:$0xf0]
        %v1446 = vor.u32 %v1444, %v1445
        %v1448 = vperm.slane %v1446, 0
        %v1449 = vperm.slane %v1446, 1
        %v1450 = vperm.slane %v1446, 2
        %v1451 = vperm.slane %v1446, 3
        %v1452 = vperm.slane %v1446, 4
        %v1453 = vperm.slane %v1446, 5
        %v1454 = vperm.slane %v1446, 6
        %v1455 = vperm.slane %v1446, 7
        %v1464 = vmul.f32 %v1438, %v1448
        %v1465 = vmul.f32 %v1433, %v1449
        %v1466 = vmul.f32 %v1428, %v1450
        %v1467 = vmul.f32 %v1423, %v1451
        %v1468 = vmul.f32 %v1418, %v1452
        %v1469 = vmul.f32 %v1413, %v1453
        %v1470 = vmul.f32 %v1408, %v1454
        %v1471 = vmul.f32 %v1403, %v1455
        %v1472 = vmul.f32 %v1439, %v1448
        %v1473 = vmul.f32 %v1434, %v1449
        %v1474 = vmul.f32 %v1429, %v1450
        %v1475 = vmul.f32 %v1424, %v1451
        %v1476 = vmul.f32 %v1419, %v1452
        %v1477 = vmul.f32 %v1414, %v1453
        %v1478 = vmul.f32 %v1409, %v1454
        %v1479 = vmul.f32 %v1404, %v1455
        %v1480 = vmul.f32 %v1440, %v1448
        %v1481 = vmul.f32 %v1435, %v1449
        %v1482 = vmul.f32 %v1430, %v1450
        %v1483 = vmul.f32 %v1425, %v1451
        %v1484 = vmul.f32 %v1420, %v1452
        %v1485 = vmul.f32 %v1415, %v1453
        %v1486 = vmul.f32 %v1410, %v1454
        %v1487 = vmul.f32 %v1405, %v1455
        %v1488 = vmul.f32 %v1441, %v1448
        %v1489 = vmul.f32 %v1436, %v1449
        %v1490 = vmul.f32 %v1431, %v1450
        %v1491 = vmul.f32 %v1426, %v1451
        %v1492 = vmul.f32 %v1421, %v1452
        %v1493 = vmul.f32 %v1416, %v1453
        %v1494 = vmul.f32 %v1411, %v1454
        %v1495 = vmul.f32 %v1406, %v1455
        %v1496 = vmul.f32 %v1442, %v1448
        %v1497 = vmul.f32 %v1437, %v1449
        %v1498 = vmul.f32 %v1432, %v1450
        %v1499 = vmul.f32 %v1427, %v1451
        %v1500 = vmul.f32 %v1422, %v1452
        %v1501 = vmul.f32 %v1417, %v1453
        %v1502 = vmul.f32 %v1412, %v1454
        %v1503 = vmul.f32 %v1407, %v1455
        %1504 = vrot.lane.b32.xlu0 %v917, 1
        %v1505 = vpop.permute.xlu0 %1504
        %1506 = vrot.lane.b32.xlu0 %v925, 1
        %v1507 = vpop.permute.xlu0 %1506
        %1508 = vrot.lane.b32.xlu0 %v933, 1
        %v1509 = vpop.permute.xlu0 %1508
        %1510 = vrot.lane.b32.xlu0 %v941, 1
        %v1511 = vpop.permute.xlu0 %1510
        %1512 = vrot.lane.b32.xlu0 %v949, 1
        %v1513 = vpop.permute.xlu0 %1512
        %1514 = vrot.lane.b32.xlu0 %v918, 1
        %v1515 = vpop.permute.xlu0 %1514
        %1516 = vrot.lane.b32.xlu0 %v926, 1
        %v1517 = vpop.permute.xlu0 %1516
        %1518 = vrot.lane.b32.xlu0 %v934, 1
        %v1519 = vpop.permute.xlu0 %1518
        %1520 = vrot.lane.b32.xlu0 %v942, 1
        %v1521 = vpop.permute.xlu0 %1520
        %1522 = vrot.lane.b32.xlu0 %v950, 1
        %v1523 = vpop.permute.xlu0 %1522
        %1524 = vrot.lane.b32.xlu0 %v919, 1
        %v1525 = vpop.permute.xlu0 %1524
        %1526 = vrot.lane.b32.xlu0 %v927, 1
        %v1527 = vpop.permute.xlu0 %1526
        %1528 = vrot.lane.b32.xlu0 %v935, 1
        %v1529 = vpop.permute.xlu0 %1528
        %1530 = vrot.lane.b32.xlu0 %v943, 1
        %v1531 = vpop.permute.xlu0 %1530
        %1532 = vrot.lane.b32.xlu0 %v951, 1
        %v1533 = vpop.permute.xlu0 %1532
        %1534 = vrot.lane.b32.xlu0 %v920, 1
        %v1535 = vpop.permute.xlu0 %1534
        %1536 = vrot.lane.b32.xlu0 %v928, 1
        %v1537 = vpop.permute.xlu0 %1536
        %1538 = vrot.lane.b32.xlu0 %v936, 1
        %v1539 = vpop.permute.xlu0 %1538
        %1540 = vrot.lane.b32.xlu0 %v944, 1
        %v1541 = vpop.permute.xlu0 %1540
        %1542 = vrot.lane.b32.xlu0 %v952, 1
        %v1543 = vpop.permute.xlu0 %1542
        %1544 = vrot.lane.b32.xlu0 %v921, 1
        %v1545 = vpop.permute.xlu0 %1544
        %1546 = vrot.lane.b32.xlu0 %v929, 1
        %v1547 = vpop.permute.xlu0 %1546
        %1548 = vrot.lane.b32.xlu0 %v937, 1
        %v1549 = vpop.permute.xlu0 %1548
        %1550 = vrot.lane.b32.xlu0 %v945, 1
        %v1551 = vpop.permute.xlu0 %1550
        %1552 = vrot.lane.b32.xlu0 %v953, 1
        %v1553 = vpop.permute.xlu0 %1552
        %1554 = vrot.lane.b32.xlu0 %v922, 1
        %v1555 = vpop.permute.xlu0 %1554
        %1556 = vrot.lane.b32.xlu0 %v930, 1
        %v1557 = vpop.permute.xlu0 %1556
        %1558 = vrot.lane.b32.xlu0 %v938, 1
        %v1559 = vpop.permute.xlu0 %1558
        %1560 = vrot.lane.b32.xlu0 %v946, 1
        %v1561 = vpop.permute.xlu0 %1560
        %1562 = vrot.lane.b32.xlu0 %v954, 1
        %v1563 = vpop.permute.xlu0 %1562
        %1564 = vrot.lane.b32.xlu0 %v923, 1
        %v1565 = vpop.permute.xlu0 %1564
        %1566 = vrot.lane.b32.xlu0 %v931, 1
        %v1567 = vpop.permute.xlu0 %1566
        %1568 = vrot.lane.b32.xlu0 %v939, 1
        %v1569 = vpop.permute.xlu0 %1568
        %1570 = vrot.lane.b32.xlu0 %v947, 1
        %v1571 = vpop.permute.xlu0 %1570
        %1572 = vrot.lane.b32.xlu0 %v955, 1
        %v1573 = vpop.permute.xlu0 %1572
        %1574 = vrot.lane.b32.xlu0 %v924, 1
        %v1575 = vpop.permute.xlu0 %1574
        %1576 = vrot.lane.b32.xlu0 %v932, 1
        %v1577 = vpop.permute.xlu0 %1576
        %1578 = vrot.lane.b32.xlu0 %v940, 1
        %v1579 = vpop.permute.xlu0 %1578
        %1580 = vrot.lane.b32.xlu0 %v948, 1
        %v1581 = vpop.permute.xlu0 %1580
        %1582 = vrot.lane.b32.xlu0 %v956, 1
        %v1583 = vpop.permute.xlu0 %1582
        %vm1584 = vcmp.lt.s32.totalorder %v1038, 1
        %v1585 = vsel %vm1584, %v1565, %v1575
        %v1586 = vsel %vm1584, %v1567, %v1577
        %v1587 = vsel %vm1584, %v1569, %v1579
        %v1588 = vsel %vm1584, %v1571, %v1581
        %v1589 = vsel %vm1584, %v1573, %v1583
        %v1590 = vsel %vm1584, %v1555, %v1565
        %v1591 = vsel %vm1584, %v1557, %v1567
        %v1592 = vsel %vm1584, %v1559, %v1569
        %v1593 = vsel %vm1584, %v1561, %v1571
        %v1594 = vsel %vm1584, %v1563, %v1573
        %v1595 = vsel %vm1584, %v1545, %v1555
        %v1596 = vsel %vm1584, %v1547, %v1557
        %v1597 = vsel %vm1584, %v1549, %v1559
        %v1598 = vsel %vm1584, %v1551, %v1561
        %v1599 = vsel %vm1584, %v1553, %v1563
        %v1600 = vsel %vm1584, %v1535, %v1545
        %v1601 = vsel %vm1584, %v1537, %v1547
        %v1602 = vsel %vm1584, %v1539, %v1549
        %v1603 = vsel %vm1584, %v1541, %v1551
        %v1604 = vsel %vm1584, %v1543, %v1553
        %v1605 = vsel %vm1584, %v1525, %v1535
        %v1606 = vsel %vm1584, %v1527, %v1537
        %v1607 = vsel %vm1584, %v1529, %v1539
        %v1608 = vsel %vm1584, %v1531, %v1541
        %v1609 = vsel %vm1584, %v1533, %v1543
        %v1610 = vsel %vm1584, %v1515, %v1525
        %v1611 = vsel %vm1584, %v1517, %v1527
        %v1612 = vsel %vm1584, %v1519, %v1529
        %v1613 = vsel %vm1584, %v1521, %v1531
        %v1614 = vsel %vm1584, %v1523, %v1533
        %v1615 = vsel %vm1584, %v1505, %v1515
        %v1616 = vsel %vm1584, %v1507, %v1517
        %v1617 = vsel %vm1584, %v1509, %v1519
        %v1618 = vsel %vm1584, %v1511, %v1521
        %v1619 = vsel %vm1584, %v1513, %v1523
        %v1620 = vsel %vm1584, %v1575, %v1505
        %v1621 = vsel %vm1584, %v1577, %v1507
        %v1622 = vsel %vm1584, %v1579, %v1509
        %v1623 = vsel %vm1584, %v1581, %v1511
        %v1624 = vsel %vm1584, %v1583, %v1513
        %s1625 = scalar_lea.vmem %s4, 3
        %v1626 = vld [vmem:[%s1625] ss:$8 sm:$0xf]
        %v1627 = vld [vmem:[%s1625] ss:$8 sm:$0xf0]
        %v1628 = vor.u32 %v1626, %v1627
        %v1630 = vperm.slane %v1628, 0
        %v1631 = vperm.slane %v1628, 1
        %v1632 = vperm.slane %v1628, 2
        %v1633 = vperm.slane %v1628, 3
        %v1634 = vperm.slane %v1628, 4
        %v1635 = vperm.slane %v1628, 5
        %v1636 = vperm.slane %v1628, 6
        %v1637 = vperm.slane %v1628, 7
        %v1646 = vmul.f32 %v1620, %v1630
        %v1647 = vmul.f32 %v1615, %v1631
        %v1648 = vmul.f32 %v1610, %v1632
        %v1649 = vmul.f32 %v1605, %v1633
        %v1650 = vmul.f32 %v1600, %v1634
        %v1651 = vmul.f32 %v1595, %v1635
        %v1652 = vmul.f32 %v1590, %v1636
        %v1653 = vmul.f32 %v1585, %v1637
        %v1654 = vmul.f32 %v1621, %v1630
        %v1655 = vmul.f32 %v1616, %v1631
        %v1656 = vmul.f32 %v1611, %v1632
        %v1657 = vmul.f32 %v1606, %v1633
        %v1658 = vmul.f32 %v1601, %v1634
        %v1659 = vmul.f32 %v1596, %v1635
        %v1660 = vmul.f32 %v1591, %v1636
        %v1661 = vmul.f32 %v1586, %v1637
        %v1662 = vmul.f32 %v1622, %v1630
        %v1663 = vmul.f32 %v1617, %v1631
        %v1664 = vmul.f32 %v1612, %v1632
        %v1665 = vmul.f32 %v1607, %v1633
        %v1666 = vmul.f32 %v1602, %v1634
        %v1667 = vmul.f32 %v1597, %v1635
        %v1668 = vmul.f32 %v1592, %v1636
        %v1669 = vmul.f32 %v1587, %v1637
        %v1670 = vmul.f32 %v1623, %v1630
        %v1671 = vmul.f32 %v1618, %v1631
        %v1672 = vmul.f32 %v1613, %v1632
        %v1673 = vmul.f32 %v1608, %v1633
        %v1674 = vmul.f32 %v1603, %v1634
        %v1675 = vmul.f32 %v1598, %v1635
        %v1676 = vmul.f32 %v1593, %v1636
        %v1677 = vmul.f32 %v1588, %v1637
        %v1678 = vmul.f32 %v1624, %v1630
        %v1679 = vmul.f32 %v1619, %v1631
        %v1680 = vmul.f32 %v1614, %v1632
        %v1681 = vmul.f32 %v1609, %v1633
        %v1682 = vmul.f32 %v1604, %v1634
        %v1683 = vmul.f32 %v1599, %v1635
        %v1684 = vmul.f32 %v1594, %v1636
        %v1685 = vmul.f32 %v1589, %v1637
        %1686 = vrot.lane.b32.xlu0 %v917, 127
        %v1687 = vpop.permute.xlu0 %1686
        %1688 = vrot.lane.b32.xlu0 %v925, 127
        %v1689 = vpop.permute.xlu0 %1688
        %1690 = vrot.lane.b32.xlu0 %v933, 127
        %v1691 = vpop.permute.xlu0 %1690
        %1692 = vrot.lane.b32.xlu0 %v941, 127
        %v1693 = vpop.permute.xlu0 %1692
        %1694 = vrot.lane.b32.xlu0 %v949, 127
        %v1695 = vpop.permute.xlu0 %1694
        %1696 = vrot.lane.b32.xlu0 %v918, 127
        %v1697 = vpop.permute.xlu0 %1696
        %1698 = vrot.lane.b32.xlu0 %v926, 127
        %v1699 = vpop.permute.xlu0 %1698
        %1700 = vrot.lane.b32.xlu0 %v934, 127
        %v1701 = vpop.permute.xlu0 %1700
        %1702 = vrot.lane.b32.xlu0 %v942, 127
        %v1703 = vpop.permute.xlu0 %1702
        %1704 = vrot.lane.b32.xlu0 %v950, 127
        %v1705 = vpop.permute.xlu0 %1704
        %1706 = vrot.lane.b32.xlu0 %v919, 127
        %v1707 = vpop.permute.xlu0 %1706
        %1708 = vrot.lane.b32.xlu0 %v927, 127
        %v1709 = vpop.permute.xlu0 %1708
        %1710 = vrot.lane.b32.xlu0 %v935, 127
        %v1711 = vpop.permute.xlu0 %1710
        %1712 = vrot.lane.b32.xlu0 %v943, 127
        %v1713 = vpop.permute.xlu0 %1712
        %1714 = vrot.lane.b32.xlu0 %v951, 127
        %v1715 = vpop.permute.xlu0 %1714
        %1716 = vrot.lane.b32.xlu0 %v920, 127
        %v1717 = vpop.permute.xlu0 %1716
        %1718 = vrot.lane.b32.xlu0 %v928, 127
        %v1719 = vpop.permute.xlu0 %1718
        %1720 = vrot.lane.b32.xlu0 %v936, 127
        %v1721 = vpop.permute.xlu0 %1720
        %1722 = vrot.lane.b32.xlu0 %v944, 127
        %v1723 = vpop.permute.xlu0 %1722
        %1724 = vrot.lane.b32.xlu0 %v952, 127
        %v1725 = vpop.permute.xlu0 %1724
        %1726 = vrot.lane.b32.xlu0 %v921, 127
        %v1727 = vpop.permute.xlu0 %1726
        %1728 = vrot.lane.b32.xlu0 %v929, 127
        %v1729 = vpop.permute.xlu0 %1728
        %1730 = vrot.lane.b32.xlu0 %v937, 127
        %v1731 = vpop.permute.xlu0 %1730
        %1732 = vrot.lane.b32.xlu0 %v945, 127
        %v1733 = vpop.permute.xlu0 %1732
        %1734 = vrot.lane.b32.xlu0 %v953, 127
        %v1735 = vpop.permute.xlu0 %1734
        %1736 = vrot.lane.b32.xlu0 %v922, 127
        %v1737 = vpop.permute.xlu0 %1736
        %1738 = vrot.lane.b32.xlu0 %v930, 127
        %v1739 = vpop.permute.xlu0 %1738
        %1740 = vrot.lane.b32.xlu0 %v938, 127
        %v1741 = vpop.permute.xlu0 %1740
        %1742 = vrot.lane.b32.xlu0 %v946, 127
        %v1743 = vpop.permute.xlu0 %1742
        %1744 = vrot.lane.b32.xlu0 %v954, 127
        %v1745 = vpop.permute.xlu0 %1744
        %1746 = vrot.lane.b32.xlu0 %v923, 127
        %v1747 = vpop.permute.xlu0 %1746
        %1748 = vrot.lane.b32.xlu0 %v931, 127
        %v1749 = vpop.permute.xlu0 %1748
        %1750 = vrot.lane.b32.xlu0 %v939, 127
        %v1751 = vpop.permute.xlu0 %1750
        %1752 = vrot.lane.b32.xlu0 %v947, 127
        %v1753 = vpop.permute.xlu0 %1752
        %1754 = vrot.lane.b32.xlu0 %v955, 127
        %v1755 = vpop.permute.xlu0 %1754
        %1756 = vrot.lane.b32.xlu0 %v924, 127
        %v1757 = vpop.permute.xlu0 %1756
        %1758 = vrot.lane.b32.xlu0 %v932, 127
        %v1759 = vpop.permute.xlu0 %1758
        %1760 = vrot.lane.b32.xlu0 %v940, 127
        %v1761 = vpop.permute.xlu0 %1760
        %1762 = vrot.lane.b32.xlu0 %v948, 127
        %v1763 = vpop.permute.xlu0 %1762
        %1764 = vrot.lane.b32.xlu0 %v956, 127
        %v1765 = vpop.permute.xlu0 %1764
        %vm1766 = vcmp.lt.s32.totalorder %v1038, 127
        %v1767 = vsel %vm1766, %v1747, %v1757
        %v1768 = vsel %vm1766, %v1749, %v1759
        %v1769 = vsel %vm1766, %v1751, %v1761
        %v1770 = vsel %vm1766, %v1753, %v1763
        %v1771 = vsel %vm1766, %v1755, %v1765
        %v1772 = vsel %vm1766, %v1737, %v1747
        %v1773 = vsel %vm1766, %v1739, %v1749
        %v1774 = vsel %vm1766, %v1741, %v1751
        %v1775 = vsel %vm1766, %v1743, %v1753
        %v1776 = vsel %vm1766, %v1745, %v1755
        %v1777 = vsel %vm1766, %v1727, %v1737
        %v1778 = vsel %vm1766, %v1729, %v1739
        %v1779 = vsel %vm1766, %v1731, %v1741
        %v1780 = vsel %vm1766, %v1733, %v1743
        %v1781 = vsel %vm1766, %v1735, %v1745
        %v1782 = vsel %vm1766, %v1717, %v1727
        %v1783 = vsel %vm1766, %v1719, %v1729
        %v1784 = vsel %vm1766, %v1721, %v1731
        %v1785 = vsel %vm1766, %v1723, %v1733
        %v1786 = vsel %vm1766, %v1725, %v1735
        %v1787 = vsel %vm1766, %v1707, %v1717
        %v1788 = vsel %vm1766, %v1709, %v1719
        %v1789 = vsel %vm1766, %v1711, %v1721
        %v1790 = vsel %vm1766, %v1713, %v1723
        %v1791 = vsel %vm1766, %v1715, %v1725
        %v1792 = vsel %vm1766, %v1697, %v1707
        %v1793 = vsel %vm1766, %v1699, %v1709
        %v1794 = vsel %vm1766, %v1701, %v1711
        %v1795 = vsel %vm1766, %v1703, %v1713
        %v1796 = vsel %vm1766, %v1705, %v1715
        %v1797 = vsel %vm1766, %v1687, %v1697
        %v1798 = vsel %vm1766, %v1689, %v1699
        %v1799 = vsel %vm1766, %v1691, %v1701
        %v1800 = vsel %vm1766, %v1693, %v1703
        %v1801 = vsel %vm1766, %v1695, %v1705
        %v1802 = vsel %vm1766, %v1757, %v1687
        %v1803 = vsel %vm1766, %v1759, %v1689
        %v1804 = vsel %vm1766, %v1761, %v1691
        %v1805 = vsel %vm1766, %v1763, %v1693
        %v1806 = vsel %vm1766, %v1765, %v1695
        %s1807 = scalar_lea.vmem %s4, 5
        %v1808 = vld [vmem:[%s1807] ss:$8 sm:$0xf]
        %v1809 = vld [vmem:[%s1807] ss:$8 sm:$0xf0]
        %v1810 = vor.u32 %v1808, %v1809
        %v1812 = vperm.slane %v1810, 0
        %v1813 = vperm.slane %v1810, 1
        %v1814 = vperm.slane %v1810, 2
        %v1815 = vperm.slane %v1810, 3
        %v1816 = vperm.slane %v1810, 4
        %v1817 = vperm.slane %v1810, 5
        %v1818 = vperm.slane %v1810, 6
        %v1819 = vperm.slane %v1810, 7
        %v1828 = vmul.f32 %v1797, %v1812
        %v1829 = vmul.f32 %v1792, %v1813
        %v1830 = vmul.f32 %v1787, %v1814
        %v1831 = vmul.f32 %v1782, %v1815
        %v1832 = vmul.f32 %v1777, %v1816
        %v1833 = vmul.f32 %v1772, %v1817
        %v1834 = vmul.f32 %v1767, %v1818
        %v1835 = vmul.f32 %v1802, %v1819
        %v1836 = vmul.f32 %v1798, %v1812
        %v1837 = vmul.f32 %v1793, %v1813
        %v1838 = vmul.f32 %v1788, %v1814
        %v1839 = vmul.f32 %v1783, %v1815
        %v1840 = vmul.f32 %v1778, %v1816
        %v1841 = vmul.f32 %v1773, %v1817
        %v1842 = vmul.f32 %v1768, %v1818
        %v1843 = vmul.f32 %v1803, %v1819
        %v1844 = vmul.f32 %v1799, %v1812
        %v1845 = vmul.f32 %v1794, %v1813
        %v1846 = vmul.f32 %v1789, %v1814
        %v1847 = vmul.f32 %v1784, %v1815
        %v1848 = vmul.f32 %v1779, %v1816
        %v1849 = vmul.f32 %v1774, %v1817
        %v1850 = vmul.f32 %v1769, %v1818
        %v1851 = vmul.f32 %v1804, %v1819
        %v1852 = vmul.f32 %v1800, %v1812
        %v1853 = vmul.f32 %v1795, %v1813
        %v1854 = vmul.f32 %v1790, %v1814
        %v1855 = vmul.f32 %v1785, %v1815
        %v1856 = vmul.f32 %v1780, %v1816
        %v1857 = vmul.f32 %v1775, %v1817
        %v1858 = vmul.f32 %v1770, %v1818
        %v1859 = vmul.f32 %v1805, %v1819
        %v1860 = vmul.f32 %v1801, %v1812
        %v1861 = vmul.f32 %v1796, %v1813
        %v1862 = vmul.f32 %v1791, %v1814
        %v1863 = vmul.f32 %v1786, %v1815
        %v1864 = vmul.f32 %v1781, %v1816
        %v1865 = vmul.f32 %v1776, %v1817
        %v1866 = vmul.f32 %v1771, %v1818
        %v1867 = vmul.f32 %v1806, %v1819
        %1868 = vrot.lane.b32.xlu0 %v917, 113
        %v1869 = vpop.permute.xlu0 %1868
        %1870 = vrot.lane.b32.xlu0 %v925, 113
        %v1871 = vpop.permute.xlu0 %1870
        %1872 = vrot.lane.b32.xlu0 %v933, 113
        %v1873 = vpop.permute.xlu0 %1872
        %1874 = vrot.lane.b32.xlu0 %v941, 113
        %v1875 = vpop.permute.xlu0 %1874
        %1876 = vrot.lane.b32.xlu0 %v949, 113
        %v1877 = vpop.permute.xlu0 %1876
        %1878 = vrot.lane.b32.xlu0 %v918, 113
        %v1879 = vpop.permute.xlu0 %1878
        %1880 = vrot.lane.b32.xlu0 %v926, 113
        %v1881 = vpop.permute.xlu0 %1880
        %1882 = vrot.lane.b32.xlu0 %v934, 113
        %v1883 = vpop.permute.xlu0 %1882
        %1884 = vrot.lane.b32.xlu0 %v942, 113
        %v1885 = vpop.permute.xlu0 %1884
        %1886 = vrot.lane.b32.xlu0 %v950, 113
        %v1887 = vpop.permute.xlu0 %1886
        %1888 = vrot.lane.b32.xlu0 %v919, 113
        %v1889 = vpop.permute.xlu0 %1888
        %1890 = vrot.lane.b32.xlu0 %v927, 113
        %v1891 = vpop.permute.xlu0 %1890
        %1892 = vrot.lane.b32.xlu0 %v935, 113
        %v1893 = vpop.permute.xlu0 %1892
        %1894 = vrot.lane.b32.xlu0 %v943, 113
        %v1895 = vpop.permute.xlu0 %1894
        %1896 = vrot.lane.b32.xlu0 %v951, 113
        %v1897 = vpop.permute.xlu0 %1896
        %1898 = vrot.lane.b32.xlu0 %v920, 113
        %v1899 = vpop.permute.xlu0 %1898
        %1900 = vrot.lane.b32.xlu0 %v928, 113
        %v1901 = vpop.permute.xlu0 %1900
        %1902 = vrot.lane.b32.xlu0 %v936, 113
        %v1903 = vpop.permute.xlu0 %1902
        %1904 = vrot.lane.b32.xlu0 %v944, 113
        %v1905 = vpop.permute.xlu0 %1904
        %1906 = vrot.lane.b32.xlu0 %v952, 113
        %v1907 = vpop.permute.xlu0 %1906
        %1908 = vrot.lane.b32.xlu0 %v921, 113
        %v1909 = vpop.permute.xlu0 %1908
        %1910 = vrot.lane.b32.xlu0 %v929, 113
        %v1911 = vpop.permute.xlu0 %1910
        %1912 = vrot.lane.b32.xlu0 %v937, 113
        %v1913 = vpop.permute.xlu0 %1912
        %1914 = vrot.lane.b32.xlu0 %v945, 113
        %v1915 = vpop.permute.xlu0 %1914
        %1916 = vrot.lane.b32.xlu0 %v953, 113
        %v1917 = vpop.permute.xlu0 %1916
        %1918 = vrot.lane.b32.xlu0 %v922, 113
        %v1919 = vpop.permute.xlu0 %1918
        %1920 = vrot.lane.b32.xlu0 %v930, 113
        %v1921 = vpop.permute.xlu0 %1920
        %1922 = vrot.lane.b32.xlu0 %v938, 113
        %v1923 = vpop.permute.xlu0 %1922
        %1924 = vrot.lane.b32.xlu0 %v946, 113
        %v1925 = vpop.permute.xlu0 %1924
        %1926 = vrot.lane.b32.xlu0 %v954, 113
        %v1927 = vpop.permute.xlu0 %1926
        %1928 = vrot.lane.b32.xlu0 %v923, 113
        %v1929 = vpop.permute.xlu0 %1928
        %1930 = vrot.lane.b32.xlu0 %v931, 113
        %v1931 = vpop.permute.xlu0 %1930
        %1932 = vrot.lane.b32.xlu0 %v939, 113
        %v1933 = vpop.permute.xlu0 %1932
        %1934 = vrot.lane.b32.xlu0 %v947, 113
        %v1935 = vpop.permute.xlu0 %1934
        %1936 = vrot.lane.b32.xlu0 %v955, 113
        %v1937 = vpop.permute.xlu0 %1936
        %1938 = vrot.lane.b32.xlu0 %v924, 113
        %v1939 = vpop.permute.xlu0 %1938
        %1940 = vrot.lane.b32.xlu0 %v932, 113
        %v1941 = vpop.permute.xlu0 %1940
        %1942 = vrot.lane.b32.xlu0 %v940, 113
        %v1943 = vpop.permute.xlu0 %1942
        %1944 = vrot.lane.b32.xlu0 %v948, 113
        %v1945 = vpop.permute.xlu0 %1944
        %1946 = vrot.lane.b32.xlu0 %v956, 113
        %v1947 = vpop.permute.xlu0 %1946
        %vm1948 = vcmp.lt.s32.totalorder %v1038, 113
        %v1949 = vsel %vm1948, %v1929, %v1939
        %v1950 = vsel %vm1948, %v1931, %v1941
        %v1951 = vsel %vm1948, %v1933, %v1943
        %v1952 = vsel %vm1948, %v1935, %v1945
        %v1953 = vsel %vm1948, %v1937, %v1947
        %v1954 = vsel %vm1948, %v1919, %v1929
        %v1955 = vsel %vm1948, %v1921, %v1931
        %v1956 = vsel %vm1948, %v1923, %v1933
        %v1957 = vsel %vm1948, %v1925, %v1935
        %v1958 = vsel %vm1948, %v1927, %v1937
        %v1959 = vsel %vm1948, %v1909, %v1919
        %v1960 = vsel %vm1948, %v1911, %v1921
        %v1961 = vsel %vm1948, %v1913, %v1923
        %v1962 = vsel %vm1948, %v1915, %v1925
        %v1963 = vsel %vm1948, %v1917, %v1927
        %v1964 = vsel %vm1948, %v1899, %v1909
        %v1965 = vsel %vm1948, %v1901, %v1911
        %v1966 = vsel %vm1948, %v1903, %v1913
        %v1967 = vsel %vm1948, %v1905, %v1915
        %v1968 = vsel %vm1948, %v1907, %v1917
        %v1969 = vsel %vm1948, %v1889, %v1899
        %v1970 = vsel %vm1948, %v1891, %v1901
        %v1971 = vsel %vm1948, %v1893, %v1903
        %v1972 = vsel %vm1948, %v1895, %v1905
        %v1973 = vsel %vm1948, %v1897, %v1907
        %v1974 = vsel %vm1948, %v1879, %v1889
        %v1975 = vsel %vm1948, %v1881, %v1891
        %v1976 = vsel %vm1948, %v1883, %v1893
        %v1977 = vsel %vm1948, %v1885, %v1895
        %v1978 = vsel %vm1948, %v1887, %v1897
        %v1979 = vsel %vm1948, %v1869, %v1879
        %v1980 = vsel %vm1948, %v1871, %v1881
        %v1981 = vsel %vm1948, %v1873, %v1883
        %v1982 = vsel %vm1948, %v1875, %v1885
        %v1983 = vsel %vm1948, %v1877, %v1887
        %v1984 = vsel %vm1948, %v1939, %v1869
        %v1985 = vsel %vm1948, %v1941, %v1871
        %v1986 = vsel %vm1948, %v1943, %v1873
        %v1987 = vsel %vm1948, %v1945, %v1875
        %v1988 = vsel %vm1948, %v1947, %v1877
        %s1989 = scalar_lea.vmem %s4, 6
        %v1990 = vld [vmem:[%s1989] ss:$8 sm:$0xf]
        %v1991 = vld [vmem:[%s1989] ss:$8 sm:$0xf0]
        %v1992 = vor.u32 %v1990, %v1991
        %v1994 = vperm.slane %v1992, 0
        %v1995 = vperm.slane %v1992, 1
        %v1996 = vperm.slane %v1992, 2
        %v1997 = vperm.slane %v1992, 3
        %v1998 = vperm.slane %v1992, 4
        %v1999 = vperm.slane %v1992, 5
        %v2000 = vperm.slane %v1992, 6
        %v2001 = vperm.slane %v1992, 7
        %v2010 = vmul.f32 %v1979, %v1994
        %v2011 = vmul.f32 %v1974, %v1995
        %v2012 = vmul.f32 %v1969, %v1996
        %v2013 = vmul.f32 %v1964, %v1997
        %v2014 = vmul.f32 %v1959, %v1998
        %v2015 = vmul.f32 %v1954, %v1999
        %v2016 = vmul.f32 %v1949, %v2000
        %v2017 = vmul.f32 %v1984, %v2001
        %v2018 = vmul.f32 %v1980, %v1994
        %v2019 = vmul.f32 %v1975, %v1995
        %v2020 = vmul.f32 %v1970, %v1996
        %v2021 = vmul.f32 %v1965, %v1997
        %v2022 = vmul.f32 %v1960, %v1998
        %v2023 = vmul.f32 %v1955, %v1999
        %v2024 = vmul.f32 %v1950, %v2000
        %v2025 = vmul.f32 %v1985, %v2001
        %v2026 = vmul.f32 %v1981, %v1994
        %v2027 = vmul.f32 %v1976, %v1995
        %v2028 = vmul.f32 %v1971, %v1996
        %v2029 = vmul.f32 %v1966, %v1997
        %v2030 = vmul.f32 %v1961, %v1998
        %v2031 = vmul.f32 %v1956, %v1999
        %v2032 = vmul.f32 %v1951, %v2000
        %v2033 = vmul.f32 %v1986, %v2001
        %v2034 = vmul.f32 %v1982, %v1994
        %v2035 = vmul.f32 %v1977, %v1995
        %v2036 = vmul.f32 %v1972, %v1996
        %v2037 = vmul.f32 %v1967, %v1997
        %v2038 = vmul.f32 %v1962, %v1998
        %v2039 = vmul.f32 %v1957, %v1999
        %v2040 = vmul.f32 %v1952, %v2000
        %v2041 = vmul.f32 %v1987, %v2001
        %v2042 = vmul.f32 %v1983, %v1994
        %v2043 = vmul.f32 %v1978, %v1995
        %v2044 = vmul.f32 %v1973, %v1996
        %v2045 = vmul.f32 %v1968, %v1997
        %v2046 = vmul.f32 %v1963, %v1998
        %v2047 = vmul.f32 %v1958, %v1999
        %v2048 = vmul.f32 %v1953, %v2000
        %v2049 = vmul.f32 %v1988, %v2001
        %2050 = vrot.lane.b32.xlu0 %v917, 112
        %v2051 = vpop.permute.xlu0 %2050
        %2052 = vrot.lane.b32.xlu0 %v925, 112
        %v2053 = vpop.permute.xlu0 %2052
        %2054 = vrot.lane.b32.xlu0 %v933, 112
        %v2055 = vpop.permute.xlu0 %2054
        %2056 = vrot.lane.b32.xlu0 %v941, 112
        %v2057 = vpop.permute.xlu0 %2056
        %2058 = vrot.lane.b32.xlu0 %v949, 112
        %v2059 = vpop.permute.xlu0 %2058
        %2060 = vrot.lane.b32.xlu0 %v918, 112
        %v2061 = vpop.permute.xlu0 %2060
        %2062 = vrot.lane.b32.xlu0 %v926, 112
        %v2063 = vpop.permute.xlu0 %2062
        %2064 = vrot.lane.b32.xlu0 %v934, 112
        %v2065 = vpop.permute.xlu0 %2064
        %2066 = vrot.lane.b32.xlu0 %v942, 112
        %v2067 = vpop.permute.xlu0 %2066
        %2068 = vrot.lane.b32.xlu0 %v950, 112
        %v2069 = vpop.permute.xlu0 %2068
        %2070 = vrot.lane.b32.xlu0 %v919, 112
        %v2071 = vpop.permute.xlu0 %2070
        %2072 = vrot.lane.b32.xlu0 %v927, 112
        %v2073 = vpop.permute.xlu0 %2072
        %2074 = vrot.lane.b32.xlu0 %v935, 112
        %v2075 = vpop.permute.xlu0 %2074
        %2076 = vrot.lane.b32.xlu0 %v943, 112
        %v2077 = vpop.permute.xlu0 %2076
        %2078 = vrot.lane.b32.xlu0 %v951, 112
        %v2079 = vpop.permute.xlu0 %2078
        %2080 = vrot.lane.b32.xlu0 %v920, 112
        %v2081 = vpop.permute.xlu0 %2080
        %2082 = vrot.lane.b32.xlu0 %v928, 112
        %v2083 = vpop.permute.xlu0 %2082
        %2084 = vrot.lane.b32.xlu0 %v936, 112
        %v2085 = vpop.permute.xlu0 %2084
        %2086 = vrot.lane.b32.xlu0 %v944, 112
        %v2087 = vpop.permute.xlu0 %2086
        %2088 = vrot.lane.b32.xlu0 %v952, 112
        %v2089 = vpop.permute.xlu0 %2088
        %2090 = vrot.lane.b32.xlu0 %v921, 112
        %v2091 = vpop.permute.xlu0 %2090
        %2092 = vrot.lane.b32.xlu0 %v929, 112
        %v2093 = vpop.permute.xlu0 %2092
        %2094 = vrot.lane.b32.xlu0 %v937, 112
        %v2095 = vpop.permute.xlu0 %2094
        %2096 = vrot.lane.b32.xlu0 %v945, 112
        %v2097 = vpop.permute.xlu0 %2096
        %2098 = vrot.lane.b32.xlu0 %v953, 112
        %v2099 = vpop.permute.xlu0 %2098
        %2100 = vrot.lane.b32.xlu0 %v922, 112
        %v2101 = vpop.permute.xlu0 %2100
        %2102 = vrot.lane.b32.xlu0 %v930, 112
        %v2103 = vpop.permute.xlu0 %2102
        %2104 = vrot.lane.b32.xlu0 %v938, 112
        %v2105 = vpop.permute.xlu0 %2104
        %2106 = vrot.lane.b32.xlu0 %v946, 112
        %v2107 = vpop.permute.xlu0 %2106
        %2108 = vrot.lane.b32.xlu0 %v954, 112
        %v2109 = vpop.permute.xlu0 %2108
        %2110 = vrot.lane.b32.xlu0 %v923, 112
        %v2111 = vpop.permute.xlu0 %2110
        %2112 = vrot.lane.b32.xlu0 %v931, 112
        %v2113 = vpop.permute.xlu0 %2112
        %2114 = vrot.lane.b32.xlu0 %v939, 112
        %v2115 = vpop.permute.xlu0 %2114
        %2116 = vrot.lane.b32.xlu0 %v947, 112
        %v2117 = vpop.permute.xlu0 %2116
        %2118 = vrot.lane.b32.xlu0 %v955, 112
        %v2119 = vpop.permute.xlu0 %2118
        %2120 = vrot.lane.b32.xlu0 %v924, 112
        %v2121 = vpop.permute.xlu0 %2120
        %2122 = vrot.lane.b32.xlu0 %v932, 112
        %v2123 = vpop.permute.xlu0 %2122
        %2124 = vrot.lane.b32.xlu0 %v940, 112
        %v2125 = vpop.permute.xlu0 %2124
        %2126 = vrot.lane.b32.xlu0 %v948, 112
        %v2127 = vpop.permute.xlu0 %2126
        %2128 = vrot.lane.b32.xlu0 %v956, 112
        %v2129 = vpop.permute.xlu0 %2128
        %vm2130 = vcmp.lt.s32.totalorder %v1038, 112
        %v2131 = vsel %vm2130, %v2111, %v2121
        %v2132 = vsel %vm2130, %v2113, %v2123
        %v2133 = vsel %vm2130, %v2115, %v2125
        %v2134 = vsel %vm2130, %v2117, %v2127
        %v2135 = vsel %vm2130, %v2119, %v2129
        %v2136 = vsel %vm2130, %v2101, %v2111
        %v2137 = vsel %vm2130, %v2103, %v2113
        %v2138 = vsel %vm2130, %v2105, %v2115
        %v2139 = vsel %vm2130, %v2107, %v2117
        %v2140 = vsel %vm2130, %v2109, %v2119
        %v2141 = vsel %vm2130, %v2091, %v2101
        %v2142 = vsel %vm2130, %v2093, %v2103
        %v2143 = vsel %vm2130, %v2095, %v2105
        %v2144 = vsel %vm2130, %v2097, %v2107
        %v2145 = vsel %vm2130, %v2099, %v2109
        %v2146 = vsel %vm2130, %v2081, %v2091
        %v2147 = vsel %vm2130, %v2083, %v2093
        %v2148 = vsel %vm2130, %v2085, %v2095
        %v2149 = vsel %vm2130, %v2087, %v2097
        %v2150 = vsel %vm2130, %v2089, %v2099
        %v2151 = vsel %vm2130, %v2071, %v2081
        %v2152 = vsel %vm2130, %v2073, %v2083
        %v2153 = vsel %vm2130, %v2075, %v2085
        %v2154 = vsel %vm2130, %v2077, %v2087
        %v2155 = vsel %vm2130, %v2079, %v2089
        %v2156 = vsel %vm2130, %v2061, %v2071
        %v2157 = vsel %vm2130, %v2063, %v2073
        %v2158 = vsel %vm2130, %v2065, %v2075
        %v2159 = vsel %vm2130, %v2067, %v2077
        %v2160 = vsel %vm2130, %v2069, %v2079
        %v2161 = vsel %vm2130, %v2051, %v2061
        %v2162 = vsel %vm2130, %v2053, %v2063
        %v2163 = vsel %vm2130, %v2055, %v2065
        %v2164 = vsel %vm2130, %v2057, %v2067
        %v2165 = vsel %vm2130, %v2059, %v2069
        %v2166 = vsel %vm2130, %v2121, %v2051
        %v2167 = vsel %vm2130, %v2123, %v2053
        %v2168 = vsel %vm2130, %v2125, %v2055
        %v2169 = vsel %vm2130, %v2127, %v2057
        %v2170 = vsel %vm2130, %v2129, %v2059
        %s2171 = scalar_lea.vmem %s4, 7
        %v2172 = vld [vmem:[%s2171] ss:$8 sm:$0xf]
        %v2173 = vld [vmem:[%s2171] ss:$8 sm:$0xf0]
        %v2174 = vor.u32 %v2172, %v2173
        %v2176 = vperm.slane %v2174, 0
        %v2177 = vperm.slane %v2174, 1
        %v2178 = vperm.slane %v2174, 2
        %v2179 = vperm.slane %v2174, 3
        %v2180 = vperm.slane %v2174, 4
        %v2181 = vperm.slane %v2174, 5
        %v2182 = vperm.slane %v2174, 6
        %v2183 = vperm.slane %v2174, 7
        %v2192 = vmul.f32 %v2161, %v2176
        %v2193 = vmul.f32 %v2156, %v2177
        %v2194 = vmul.f32 %v2151, %v2178
        %v2195 = vmul.f32 %v2146, %v2179
        %v2196 = vmul.f32 %v2141, %v2180
        %v2197 = vmul.f32 %v2136, %v2181
        %v2198 = vmul.f32 %v2131, %v2182
        %v2199 = vmul.f32 %v2166, %v2183
        %v2200 = vmul.f32 %v2162, %v2176
        %v2201 = vmul.f32 %v2157, %v2177
        %v2202 = vmul.f32 %v2152, %v2178
        %v2203 = vmul.f32 %v2147, %v2179
        %v2204 = vmul.f32 %v2142, %v2180
        %v2205 = vmul.f32 %v2137, %v2181
        %v2206 = vmul.f32 %v2132, %v2182
        %v2207 = vmul.f32 %v2167, %v2183
        %v2208 = vmul.f32 %v2163, %v2176
        %v2209 = vmul.f32 %v2158, %v2177
        %v2210 = vmul.f32 %v2153, %v2178
        %v2211 = vmul.f32 %v2148, %v2179
        %v2212 = vmul.f32 %v2143, %v2180
        %v2213 = vmul.f32 %v2138, %v2181
        %v2214 = vmul.f32 %v2133, %v2182
        %v2215 = vmul.f32 %v2168, %v2183
        %v2216 = vmul.f32 %v2164, %v2176
        %v2217 = vmul.f32 %v2159, %v2177
        %v2218 = vmul.f32 %v2154, %v2178
        %v2219 = vmul.f32 %v2149, %v2179
        %v2220 = vmul.f32 %v2144, %v2180
        %v2221 = vmul.f32 %v2139, %v2181
        %v2222 = vmul.f32 %v2134, %v2182
        %v2223 = vmul.f32 %v2169, %v2183
        %v2224 = vmul.f32 %v2165, %v2176
        %v2225 = vmul.f32 %v2160, %v2177
        %v2226 = vmul.f32 %v2155, %v2178
        %v2227 = vmul.f32 %v2150, %v2179
        %v2228 = vmul.f32 %v2145, %v2180
        %v2229 = vmul.f32 %v2140, %v2181
        %v2230 = vmul.f32 %v2135, %v2182
        %v2231 = vmul.f32 %v2170, %v2183
        %2232 = vrot.lane.b32.xlu0 %v917, 111
        %v2233 = vpop.permute.xlu0 %2232
        %2234 = vrot.lane.b32.xlu0 %v925, 111
        %v2235 = vpop.permute.xlu0 %2234
        %2236 = vrot.lane.b32.xlu0 %v933, 111
        %v2237 = vpop.permute.xlu0 %2236
        %2238 = vrot.lane.b32.xlu0 %v941, 111
        %v2239 = vpop.permute.xlu0 %2238
        %2240 = vrot.lane.b32.xlu0 %v949, 111
        %v2241 = vpop.permute.xlu0 %2240
        %2242 = vrot.lane.b32.xlu0 %v918, 111
        %v2243 = vpop.permute.xlu0 %2242
        %2244 = vrot.lane.b32.xlu0 %v926, 111
        %v2245 = vpop.permute.xlu0 %2244
        %2246 = vrot.lane.b32.xlu0 %v934, 111
        %v2247 = vpop.permute.xlu0 %2246
        %2248 = vrot.lane.b32.xlu0 %v942, 111
        %v2249 = vpop.permute.xlu0 %2248
        %2250 = vrot.lane.b32.xlu0 %v950, 111
        %v2251 = vpop.permute.xlu0 %2250
        %2252 = vrot.lane.b32.xlu0 %v919, 111
        %v2253 = vpop.permute.xlu0 %2252
        %2254 = vrot.lane.b32.xlu0 %v927, 111
        %v2255 = vpop.permute.xlu0 %2254
        %2256 = vrot.lane.b32.xlu0 %v935, 111
        %v2257 = vpop.permute.xlu0 %2256
        %2258 = vrot.lane.b32.xlu0 %v943, 111
        %v2259 = vpop.permute.xlu0 %2258
        %2260 = vrot.lane.b32.xlu0 %v951, 111
        %v2261 = vpop.permute.xlu0 %2260
        %2262 = vrot.lane.b32.xlu0 %v920, 111
        %v2263 = vpop.permute.xlu0 %2262
        %2264 = vrot.lane.b32.xlu0 %v928, 111
        %v2265 = vpop.permute.xlu0 %2264
        %2266 = vrot.lane.b32.xlu0 %v936, 111
        %v2267 = vpop.permute.xlu0 %2266
        %2268 = vrot.lane.b32.xlu0 %v944, 111
        %v2269 = vpop.permute.xlu0 %2268
        %2270 = vrot.lane.b32.xlu0 %v952, 111
        %v2271 = vpop.permute.xlu0 %2270
        %2272 = vrot.lane.b32.xlu0 %v921, 111
        %v2273 = vpop.permute.xlu0 %2272
        %2274 = vrot.lane.b32.xlu0 %v929, 111
        %v2275 = vpop.permute.xlu0 %2274
        %2276 = vrot.lane.b32.xlu0 %v937, 111
        %v2277 = vpop.permute.xlu0 %2276
        %2278 = vrot.lane.b32.xlu0 %v945, 111
        %v2279 = vpop.permute.xlu0 %2278
        %2280 = vrot.lane.b32.xlu0 %v953, 111
        %v2281 = vpop.permute.xlu0 %2280
        %2282 = vrot.lane.b32.xlu0 %v922, 111
        %v2283 = vpop.permute.xlu0 %2282
        %2284 = vrot.lane.b32.xlu0 %v930, 111
        %v2285 = vpop.permute.xlu0 %2284
        %2286 = vrot.lane.b32.xlu0 %v938, 111
        %v2287 = vpop.permute.xlu0 %2286
        %2288 = vrot.lane.b32.xlu0 %v946, 111
        %v2289 = vpop.permute.xlu0 %2288
        %2290 = vrot.lane.b32.xlu0 %v954, 111
        %v2291 = vpop.permute.xlu0 %2290
        %2292 = vrot.lane.b32.xlu0 %v923, 111
        %v2293 = vpop.permute.xlu0 %2292
        %2294 = vrot.lane.b32.xlu0 %v931, 111
        %v2295 = vpop.permute.xlu0 %2294
        %2296 = vrot.lane.b32.xlu0 %v939, 111
        %v2297 = vpop.permute.xlu0 %2296
        %2298 = vrot.lane.b32.xlu0 %v947, 111
        %v2299 = vpop.permute.xlu0 %2298
        %2300 = vrot.lane.b32.xlu0 %v955, 111
        %v2301 = vpop.permute.xlu0 %2300
        %2302 = vrot.lane.b32.xlu0 %v924, 111
        %v2303 = vpop.permute.xlu0 %2302
        %2304 = vrot.lane.b32.xlu0 %v932, 111
        %v2305 = vpop.permute.xlu0 %2304
        %2306 = vrot.lane.b32.xlu0 %v940, 111
        %v2307 = vpop.permute.xlu0 %2306
        %2308 = vrot.lane.b32.xlu0 %v948, 111
        %v2309 = vpop.permute.xlu0 %2308
        %2310 = vrot.lane.b32.xlu0 %v956, 111
        %v2311 = vpop.permute.xlu0 %2310
        %vm2312 = vcmp.lt.s32.totalorder %v1038, 111
        %v2313 = vsel %vm2312, %v2293, %v2303
        %v2314 = vsel %vm2312, %v2295, %v2305
        %v2315 = vsel %vm2312, %v2297, %v2307
        %v2316 = vsel %vm2312, %v2299, %v2309
        %v2317 = vsel %vm2312, %v2301, %v2311
        %v2318 = vsel %vm2312, %v2283, %v2293
        %v2319 = vsel %vm2312, %v2285, %v2295
        %v2320 = vsel %vm2312, %v2287, %v2297
        %v2321 = vsel %vm2312, %v2289, %v2299
        %v2322 = vsel %vm2312, %v2291, %v2301
        %v2323 = vsel %vm2312, %v2273, %v2283
        %v2324 = vsel %vm2312, %v2275, %v2285
        %v2325 = vsel %vm2312, %v2277, %v2287
        %v2326 = vsel %vm2312, %v2279, %v2289
        %v2327 = vsel %vm2312, %v2281, %v2291
        %v2328 = vsel %vm2312, %v2263, %v2273
        %v2329 = vsel %vm2312, %v2265, %v2275
        %v2330 = vsel %vm2312, %v2267, %v2277
        %v2331 = vsel %vm2312, %v2269, %v2279
        %v2332 = vsel %vm2312, %v2271, %v2281
        %v2333 = vsel %vm2312, %v2253, %v2263
        %v2334 = vsel %vm2312, %v2255, %v2265
        %v2335 = vsel %vm2312, %v2257, %v2267
        %v2336 = vsel %vm2312, %v2259, %v2269
        %v2337 = vsel %vm2312, %v2261, %v2271
        %v2338 = vsel %vm2312, %v2243, %v2253
        %v2339 = vsel %vm2312, %v2245, %v2255
        %v2340 = vsel %vm2312, %v2247, %v2257
        %v2341 = vsel %vm2312, %v2249, %v2259
        %v2342 = vsel %vm2312, %v2251, %v2261
        %v2343 = vsel %vm2312, %v2233, %v2243
        %v2344 = vsel %vm2312, %v2235, %v2245
        %v2345 = vsel %vm2312, %v2237, %v2247
        %v2346 = vsel %vm2312, %v2239, %v2249
        %v2347 = vsel %vm2312, %v2241, %v2251
        %v2348 = vsel %vm2312, %v2303, %v2233
        %v2349 = vsel %vm2312, %v2305, %v2235
        %v2350 = vsel %vm2312, %v2307, %v2237
        %v2351 = vsel %vm2312, %v2309, %v2239
        %v2352 = vsel %vm2312, %v2311, %v2241
        %s2353 = scalar_lea.vmem %s4, 64
        %v2354 = vld [vmem:[%s2353] ss:$8 sm:$0xf]
        %v2355 = vld [vmem:[%s2353] ss:$8 sm:$0xf0]
        %v2356 = vor.u32 %v2354, %v2355
        %v2358 = vperm.slane %v2356, 0
        %v2359 = vperm.slane %v2356, 1
        %v2360 = vperm.slane %v2356, 2
        %v2361 = vperm.slane %v2356, 3
        %v2362 = vperm.slane %v2356, 4
        %v2363 = vperm.slane %v2356, 5
        %v2364 = vperm.slane %v2356, 6
        %v2365 = vperm.slane %v2356, 7
        %v2374 = vmul.f32 %v2343, %v2358
        %v2375 = vmul.f32 %v2338, %v2359
        %v2376 = vmul.f32 %v2333, %v2360
        %v2377 = vmul.f32 %v2328, %v2361
        %v2378 = vmul.f32 %v2323, %v2362
        %v2379 = vmul.f32 %v2318, %v2363
        %v2380 = vmul.f32 %v2313, %v2364
        %v2381 = vmul.f32 %v2348, %v2365
        %v2382 = vmul.f32 %v2344, %v2358
        %v2383 = vmul.f32 %v2339, %v2359
        %v2384 = vmul.f32 %v2334, %v2360
        %v2385 = vmul.f32 %v2329, %v2361
        %v2386 = vmul.f32 %v2324, %v2362
        %v2387 = vmul.f32 %v2319, %v2363
        %v2388 = vmul.f32 %v2314, %v2364
        %v2389 = vmul.f32 %v2349, %v2365
        %v2390 = vmul.f32 %v2345, %v2358
        %v2391 = vmul.f32 %v2340, %v2359
        %v2392 = vmul.f32 %v2335, %v2360
        %v2393 = vmul.f32 %v2330, %v2361
        %v2394 = vmul.f32 %v2325, %v2362
        %v2395 = vmul.f32 %v2320, %v2363
        %v2396 = vmul.f32 %v2315, %v2364
        %v2397 = vmul.f32 %v2350, %v2365
        %v2398 = vmul.f32 %v2346, %v2358
        %v2399 = vmul.f32 %v2341, %v2359
        %v2400 = vmul.f32 %v2336, %v2360
        %v2401 = vmul.f32 %v2331, %v2361
        %v2402 = vmul.f32 %v2326, %v2362
        %v2403 = vmul.f32 %v2321, %v2363
        %v2404 = vmul.f32 %v2316, %v2364
        %v2405 = vmul.f32 %v2351, %v2365
        %v2406 = vmul.f32 %v2347, %v2358
        %v2407 = vmul.f32 %v2342, %v2359
        %v2408 = vmul.f32 %v2337, %v2360
        %v2409 = vmul.f32 %v2332, %v2361
        %v2410 = vmul.f32 %v2327, %v2362
        %v2411 = vmul.f32 %v2322, %v2363
        %v2412 = vmul.f32 %v2317, %v2364
        %v2413 = vmul.f32 %v2352, %v2365
        %v2414 = vpack.c.bf16 %v320, %v317
        %v2415 = vpack.c.bf16 %v321, %v318
        %v2416 = vpack.c.bf16 %v322, %v319
        %v2417 = vpack.c.bf16 %v1108, %v1100
        %v2418 = vpack.c.bf16 %v1109, %v1101
        %v2419 = vpack.c.bf16 %v1110, %v1102
        %v2420 = vpack.c.bf16 %v1111, %v1103
        %v2421 = vpack.c.bf16 %v1112, %v1104
        %v2422 = vpack.c.bf16 %v1113, %v1105
        %v2423 = vpack.c.bf16 %v1114, %v1106
        %v2424 = vpack.c.bf16 %v1115, %v1107
        %v2425 = vpack.c.bf16 %v1124, %v1116
        %v2426 = vpack.c.bf16 %v1125, %v1117
        %v2427 = vpack.c.bf16 %v1126, %v1118
        %v2428 = vpack.c.bf16 %v1127, %v1119
        %v2429 = vpack.c.bf16 %v1128, %v1120
        %v2430 = vpack.c.bf16 %v1129, %v1121
        %v2431 = vpack.c.bf16 %v1130, %v1122
        %v2432 = vpack.c.bf16 %v1131, %v1123
        %v2433 = vpack.c.bf16 %v1282, %v1132
        %v2434 = vpack.c.bf16 %v1283, %v1133
        %v2435 = vpack.c.bf16 %v1284, %v1134
        %v2436 = vpack.c.bf16 %v1285, %v1135
        %v2437 = vpack.c.bf16 %v1286, %v1136
        %v2438 = vpack.c.bf16 %v1287, %v1137
        %v2439 = vpack.c.bf16 %v1288, %v1138
        %v2440 = vpack.c.bf16 %v1289, %v1139
        %v2441 = vpack.c.bf16 %v1298, %v1290
        %v2442 = vpack.c.bf16 %v1299, %v1291
        %v2443 = vpack.c.bf16 %v1300, %v1292
        %v2444 = vpack.c.bf16 %v1301, %v1293
        %v2445 = vpack.c.bf16 %v1302, %v1294
        %v2446 = vpack.c.bf16 %v1303, %v1295
        %v2447 = vpack.c.bf16 %v1304, %v1296
        %v2448 = vpack.c.bf16 %v1305, %v1297
        %v2449 = vpack.c.bf16 %v1314, %v1306
        %v2450 = vpack.c.bf16 %v1315, %v1307
        %v2451 = vpack.c.bf16 %v1316, %v1308
        %v2452 = vpack.c.bf16 %v1317, %v1309
        %v2453 = vpack.c.bf16 %v1318, %v1310
        %v2454 = vpack.c.bf16 %v1319, %v1311
        %v2455 = vpack.c.bf16 %v1320, %v1312
        %v2456 = vpack.c.bf16 %v1321, %v1313
        %v2457 = vpack.c.bf16 %v1472, %v1464
        %v2458 = vpack.c.bf16 %v1473, %v1465
        %v2459 = vpack.c.bf16 %v1474, %v1466
        %v2460 = vpack.c.bf16 %v1475, %v1467
        %v2461 = vpack.c.bf16 %v1476, %v1468
        %v2462 = vpack.c.bf16 %v1477, %v1469
        %v2463 = vpack.c.bf16 %v1478, %v1470
        %v2464 = vpack.c.bf16 %v1479, %v1471
        %v2465 = vpack.c.bf16 %v1488, %v1480
        %v2466 = vpack.c.bf16 %v1489, %v1481
        %v2467 = vpack.c.bf16 %v1490, %v1482
        %v2468 = vpack.c.bf16 %v1491, %v1483
        %v2469 = vpack.c.bf16 %v1492, %v1484
        %v2470 = vpack.c.bf16 %v1493, %v1485
        %v2471 = vpack.c.bf16 %v1494, %v1486
        %v2472 = vpack.c.bf16 %v1495, %v1487
        %v2473 = vpack.c.bf16 %v1646, %v1496
        %v2474 = vpack.c.bf16 %v1647, %v1497
        %v2475 = vpack.c.bf16 %v1648, %v1498
        %v2476 = vpack.c.bf16 %v1649, %v1499
        %v2477 = vpack.c.bf16 %v1650, %v1500
        %v2478 = vpack.c.bf16 %v1651, %v1501
        %v2479 = vpack.c.bf16 %v1652, %v1502
        %v2480 = vpack.c.bf16 %v1653, %v1503
        %v2481 = vpack.c.bf16 %v1662, %v1654
        %v2482 = vpack.c.bf16 %v1663, %v1655
        %v2483 = vpack.c.bf16 %v1664, %v1656
        %v2484 = vpack.c.bf16 %v1665, %v1657
        %v2485 = vpack.c.bf16 %v1666, %v1658
        %v2486 = vpack.c.bf16 %v1667, %v1659
        %v2487 = vpack.c.bf16 %v1668, %v1660
        %v2488 = vpack.c.bf16 %v1669, %v1661
        %v2489 = vpack.c.bf16 %v1678, %v1670
        %v2490 = vpack.c.bf16 %v1679, %v1671
        %v2491 = vpack.c.bf16 %v1680, %v1672
        %v2492 = vpack.c.bf16 %v1681, %v1673
        %v2493 = vpack.c.bf16 %v1682, %v1674
        %v2494 = vpack.c.bf16 %v1683, %v1675
        %v2495 = vpack.c.bf16 %v1684, %v1676
        %v2496 = vpack.c.bf16 %v1685, %v1677
        %v2497 = vpack.c.bf16 %v925, %v917
        %v2498 = vpack.c.bf16 %v926, %v918
        %v2499 = vpack.c.bf16 %v927, %v919
        %v2500 = vpack.c.bf16 %v928, %v920
        %v2501 = vpack.c.bf16 %v929, %v921
        %v2502 = vpack.c.bf16 %v930, %v922
        %v2503 = vpack.c.bf16 %v931, %v923
        %v2504 = vpack.c.bf16 %v932, %v924
        %v2505 = vpack.c.bf16 %v941, %v933
        %v2506 = vpack.c.bf16 %v942, %v934
        %v2507 = vpack.c.bf16 %v943, %v935
        %v2508 = vpack.c.bf16 %v944, %v936
        %v2509 = vpack.c.bf16 %v945, %v937
        %v2510 = vpack.c.bf16 %v946, %v938
        %v2511 = vpack.c.bf16 %v947, %v939
        %v2512 = vpack.c.bf16 %v948, %v940
        %v2513 = vpack.c.bf16 %v1828, %v949
        %v2514 = vpack.c.bf16 %v1829, %v950
        %v2515 = vpack.c.bf16 %v1830, %v951
        %v2516 = vpack.c.bf16 %v1831, %v952
        %v2517 = vpack.c.bf16 %v1832, %v953
        %v2518 = vpack.c.bf16 %v1833, %v954
        %v2519 = vpack.c.bf16 %v1834, %v955
        %v2520 = vpack.c.bf16 %v1835, %v956
        %v2521 = vpack.c.bf16 %v1844, %v1836
        %v2522 = vpack.c.bf16 %v1845, %v1837
        %v2523 = vpack.c.bf16 %v1846, %v1838
        %v2524 = vpack.c.bf16 %v1847, %v1839
        %v2525 = vpack.c.bf16 %v1848, %v1840
        %v2526 = vpack.c.bf16 %v1849, %v1841
        %v2527 = vpack.c.bf16 %v1850, %v1842
        %v2528 = vpack.c.bf16 %v1851, %v1843
        %v2529 = vpack.c.bf16 %v1860, %v1852
        %v2530 = vpack.c.bf16 %v1861, %v1853
        %v2531 = vpack.c.bf16 %v1862, %v1854
        %v2532 = vpack.c.bf16 %v1863, %v1855
        %v2533 = vpack.c.bf16 %v1864, %v1856
        %v2534 = vpack.c.bf16 %v1865, %v1857
        %v2535 = vpack.c.bf16 %v1866, %v1858
        %v2536 = vpack.c.bf16 %v1867, %v1859
        %v2537 = vpack.c.bf16 %v2018, %v2010
        %v2538 = vpack.c.bf16 %v2019, %v2011
        %v2539 = vpack.c.bf16 %v2020, %v2012
        %v2540 = vpack.c.bf16 %v2021, %v2013
        %v2541 = vpack.c.bf16 %v2022, %v2014
        %v2542 = vpack.c.bf16 %v2023, %v2015
        %v2543 = vpack.c.bf16 %v2024, %v2016
        %v2544 = vpack.c.bf16 %v2025, %v2017
        %v2545 = vpack.c.bf16 %v2034, %v2026
        %v2546 = vpack.c.bf16 %v2035, %v2027
        %v2547 = vpack.c.bf16 %v2036, %v2028
        %v2548 = vpack.c.bf16 %v2037, %v2029
        %v2549 = vpack.c.bf16 %v2038, %v2030
        %v2550 = vpack.c.bf16 %v2039, %v2031
        %v2551 = vpack.c.bf16 %v2040, %v2032
        %v2552 = vpack.c.bf16 %v2041, %v2033
        %v2553 = vpack.c.bf16 %v2192, %v2042
        %v2554 = vpack.c.bf16 %v2193, %v2043
        %v2555 = vpack.c.bf16 %v2194, %v2044
        %v2556 = vpack.c.bf16 %v2195, %v2045
        %v2557 = vpack.c.bf16 %v2196, %v2046
        %v2558 = vpack.c.bf16 %v2197, %v2047
        %v2559 = vpack.c.bf16 %v2198, %v2048
        %v2560 = vpack.c.bf16 %v2199, %v2049
        %v2561 = vpack.c.bf16 %v2208, %v2200
        %v2562 = vpack.c.bf16 %v2209, %v2201
        %v2563 = vpack.c.bf16 %v2210, %v2202
        %v2564 = vpack.c.bf16 %v2211, %v2203
        %v2565 = vpack.c.bf16 %v2212, %v2204
        %v2566 = vpack.c.bf16 %v2213, %v2205
        %v2567 = vpack.c.bf16 %v2214, %v2206
        %v2568 = vpack.c.bf16 %v2215, %v2207
        %v2569 = vpack.c.bf16 %v2224, %v2216
        %v2570 = vpack.c.bf16 %v2225, %v2217
        %v2571 = vpack.c.bf16 %v2226, %v2218
        %v2572 = vpack.c.bf16 %v2227, %v2219
        %v2573 = vpack.c.bf16 %v2228, %v2220
        %v2574 = vpack.c.bf16 %v2229, %v2221
        %v2575 = vpack.c.bf16 %v2230, %v2222
        %v2576 = vpack.c.bf16 %v2231, %v2223
        %v2577 = vpack.c.bf16 %v2382, %v2374
        %v2578 = vpack.c.bf16 %v2383, %v2375
        %v2579 = vpack.c.bf16 %v2384, %v2376
        %v2580 = vpack.c.bf16 %v2385, %v2377
        %v2581 = vpack.c.bf16 %v2386, %v2378
        %v2582 = vpack.c.bf16 %v2387, %v2379
        %v2583 = vpack.c.bf16 %v2388, %v2380
        %v2584 = vpack.c.bf16 %v2389, %v2381
        %v2585 = vpack.c.bf16 %v2398, %v2390
        %v2586 = vpack.c.bf16 %v2399, %v2391
        %v2587 = vpack.c.bf16 %v2400, %v2392
        %v2588 = vpack.c.bf16 %v2401, %v2393
        %v2589 = vpack.c.bf16 %v2402, %v2394
        %v2590 = vpack.c.bf16 %v2403, %v2395
        %v2591 = vpack.c.bf16 %v2404, %v2396
        %v2592 = vpack.c.bf16 %v2405, %v2397
        %v2593 = vpack.c.bf16 %v2406, %v2406
        %v2594 = vpack.c.bf16 %v2407, %v2407
        %v2595 = vpack.c.bf16 %v2408, %v2408
        %v2596 = vpack.c.bf16 %v2409, %v2409
        %v2597 = vpack.c.bf16 %v2410, %v2410
        %v2598 = vpack.c.bf16 %v2411, %v2411
        %v2599 = vpack.c.bf16 %v2412, %v2412
        %v2600 = vpack.c.bf16 %v2413, %v2413
        %2602 = vset.pattern.permute.xlu0 0
        %2603 = vperm.xlu0 %2602, %v356
        %v2604 = vpop.permute.xlu0 %2603
        %2607 = vset.pattern.permute.xlu0 0
        %2608 = vperm.xlu0 %2607, %v357
        %v2609 = vpop.permute.xlu0 %2608
        %vm2611 = vcmask 850944
        %v2613 = vsel %vm2611, %v2416, 0
        %v2616 = vsel %vm397, %v2593, 0
        %v2619 = vsel %vm397, %v2594, 0
        %v2622 = vsel %vm397, %v2595, 0
        %v2625 = vsel %vm397, %v2596, 0
        %v2628 = vsel %vm397, %v2597, 0
        %v2631 = vsel %vm397, %v2598, 0
        %v2634 = vsel %vm397, %v2599, 0
        %v2637 = vsel %vm397, %v2600, 0
        %2639 = vmatpush.bf16.msra.mxu0 %v2473
        %2640 = vmatpush.bf16.msra.mxu0 %v2465
        %2641 = vmatpush.bf16.msra.mxu0 %v2457
        %2642 = vmatpush.bf16.msra.mxu0 %v2449
        %2643 = vmatpush.bf16.msra.mxu0 %v2441
        %2644 = vmatpush.bf16.msra.mxu0 %v2433
        %2645 = vmatpush.bf16.msra.mxu0 %v2425
        %2646 = vmatpush.bf16.msra.mxu0 %v2417
        %2647 = vmatmul.bf16.gmra.mxu0 %v2414
        %v2648 = vpop.f32.mrf.mxu0
        %v2649 = vadd.f32 %v2604, %v2648
        %v2650 = vpop.f32.mrf.mxu0
        %v2651 = vadd.f32 %v2609, %v2650
        %2652 = vdwg.mxu0
        %2653 = vmatpush.bf16.msra.mxu0 %v2537
        %2654 = vmatpush.bf16.msra.mxu0 %v2529
        %2655 = vmatpush.bf16.msra.mxu0 %v2521
        %2656 = vmatpush.bf16.msra.mxu0 %v2513
        %2657 = vmatpush.bf16.msra.mxu0 %v2505
        %2658 = vmatpush.bf16.msra.mxu0 %v2497
        %2659 = vmatpush.bf16.msra.mxu0 %v2489
        %2660 = vmatpush.bf16.msra.mxu0 %v2481
        %2661 = vmatmul.bf16.gmra.mxu0 %v2415
        %v2662 = vpop.f32.mrf.mxu0
        %v2663 = vadd.f32 %v2649, %v2662
        %v2664 = vpop.f32.mrf.mxu0
        %v2665 = vadd.f32 %v2651, %v2664
        %2666 = vdwg.mxu0
        %2667 = vmatpush.bf16.msra.mxu0 0
        %2668 = vmatpush.bf16.msra.mxu0 %v2616
        %2669 = vmatpush.bf16.msra.mxu0 %v2585
        %2670 = vmatpush.bf16.msra.mxu0 %v2577
        %2671 = vmatpush.bf16.msra.mxu0 %v2569
        %2672 = vmatpush.bf16.msra.mxu0 %v2561
        %2673 = vmatpush.bf16.msra.mxu0 %v2553
        %2674 = vmatpush.bf16.msra.mxu0 %v2545
        %2675 = vmatmul.bf16.gmra.mxu0 %v2613
        %v2676 = vpop.f32.mrf.mxu0
        %v2677 = vadd.f32 %v2663, %v2676
        %v2678 = vpop.f32.mrf.mxu0
        %v2679 = vadd.f32 %v2665, %v2678
        %2680 = vdwg.mxu0
        %2681 = vmatpush.bf16.msra.mxu0 %v2474
        %2682 = vmatpush.bf16.msra.mxu0 %v2466
        %2683 = vmatpush.bf16.msra.mxu0 %v2458
        %2684 = vmatpush.bf16.msra.mxu0 %v2450
        %2685 = vmatpush.bf16.msra.mxu0 %v2442
        %2686 = vmatpush.bf16.msra.mxu0 %v2434
        %2687 = vmatpush.bf16.msra.mxu0 %v2426
        %2688 = vmatpush.bf16.msra.mxu0 %v2418
        %2689 = vmatmul.bf16.gmra.mxu0 %v2414
        %v2690 = vpop.f32.mrf.mxu0
        %v2691 = vadd.f32 %v2604, %v2690
        %v2692 = vpop.f32.mrf.mxu0
        %v2693 = vadd.f32 %v2609, %v2692
        %2694 = vdwg.mxu0
        %2695 = vmatpush.bf16.msra.mxu0 %v2538
        %2696 = vmatpush.bf16.msra.mxu0 %v2530
        %2697 = vmatpush.bf16.msra.mxu0 %v2522
        %2698 = vmatpush.bf16.msra.mxu0 %v2514
        %2699 = vmatpush.bf16.msra.mxu0 %v2506
        %2700 = vmatpush.bf16.msra.mxu0 %v2498
        %2701 = vmatpush.bf16.msra.mxu0 %v2490
        %2702 = vmatpush.bf16.msra.mxu0 %v2482
        %2703 = vmatmul.bf16.gmra.mxu0 %v2415
        %v2704 = vpop.f32.mrf.mxu0
        %v2705 = vadd.f32 %v2691, %v2704
        %v2706 = vpop.f32.mrf.mxu0
        %v2707 = vadd.f32 %v2693, %v2706
        %2708 = vdwg.mxu0
        %2709 = vmatpush.bf16.msra.mxu0 0
        %2710 = vmatpush.bf16.msra.mxu0 %v2619
        %2711 = vmatpush.bf16.msra.mxu0 %v2586
        %2712 = vmatpush.bf16.msra.mxu0 %v2578
        %2713 = vmatpush.bf16.msra.mxu0 %v2570
        %2714 = vmatpush.bf16.msra.mxu0 %v2562
        %2715 = vmatpush.bf16.msra.mxu0 %v2554
        %2716 = vmatpush.bf16.msra.mxu0 %v2546
        %2717 = vmatmul.bf16.gmra.mxu0 %v2613
        %v2718 = vpop.f32.mrf.mxu0
        %v2719 = vadd.f32 %v2705, %v2718
        %v2720 = vpop.f32.mrf.mxu0
        %v2721 = vadd.f32 %v2707, %v2720
        %2722 = vdwg.mxu0
        %2723 = vmatpush.bf16.msra.mxu0 %v2475
        %2724 = vmatpush.bf16.msra.mxu0 %v2467
        %2725 = vmatpush.bf16.msra.mxu0 %v2459
        %2726 = vmatpush.bf16.msra.mxu0 %v2451
        %2727 = vmatpush.bf16.msra.mxu0 %v2443
        %2728 = vmatpush.bf16.msra.mxu0 %v2435
        %2729 = vmatpush.bf16.msra.mxu0 %v2427
        %2730 = vmatpush.bf16.msra.mxu0 %v2419
        %2731 = vmatmul.bf16.gmra.mxu0 %v2414
        %v2732 = vpop.f32.mrf.mxu0
        %v2733 = vadd.f32 %v2604, %v2732
        %v2734 = vpop.f32.mrf.mxu0
        %v2735 = vadd.f32 %v2609, %v2734
        %2736 = vdwg.mxu0
        %2737 = vmatpush.bf16.msra.mxu0 %v2539
        %2738 = vmatpush.bf16.msra.mxu0 %v2531
        %2739 = vmatpush.bf16.msra.mxu0 %v2523
        %2740 = vmatpush.bf16.msra.mxu0 %v2515
        %2741 = vmatpush.bf16.msra.mxu0 %v2507
        %2742 = vmatpush.bf16.msra.mxu0 %v2499
        %2743 = vmatpush.bf16.msra.mxu0 %v2491
        %2744 = vmatpush.bf16.msra.mxu0 %v2483
        %2745 = vmatmul.bf16.gmra.mxu0 %v2415
        %v2746 = vpop.f32.mrf.mxu0
        %v2747 = vadd.f32 %v2733, %v2746
        %v2748 = vpop.f32.mrf.mxu0
        %v2749 = vadd.f32 %v2735, %v2748
        %2750 = vdwg.mxu0
        %2751 = vmatpush.bf16.msra.mxu0 0
        %2752 = vmatpush.bf16.msra.mxu0 %v2622
        %2753 = vmatpush.bf16.msra.mxu0 %v2587
        %2754 = vmatpush.bf16.msra.mxu0 %v2579
        %2755 = vmatpush.bf16.msra.mxu0 %v2571
        %2756 = vmatpush.bf16.msra.mxu0 %v2563
        %2757 = vmatpush.bf16.msra.mxu0 %v2555
        %2758 = vmatpush.bf16.msra.mxu0 %v2547
        %2759 = vmatmul.bf16.gmra.mxu0 %v2613
        %v2760 = vpop.f32.mrf.mxu0
        %v2761 = vadd.f32 %v2747, %v2760
        %v2762 = vpop.f32.mrf.mxu0
        %v2763 = vadd.f32 %v2749, %v2762
        %2764 = vdwg.mxu0
        %2765 = vmatpush.bf16.msra.mxu0 %v2476
        %2766 = vmatpush.bf16.msra.mxu0 %v2468
        %2767 = vmatpush.bf16.msra.mxu0 %v2460
        %2768 = vmatpush.bf16.msra.mxu0 %v2452
        %2769 = vmatpush.bf16.msra.mxu0 %v2444
        %2770 = vmatpush.bf16.msra.mxu0 %v2436
        %2771 = vmatpush.bf16.msra.mxu0 %v2428
        %2772 = vmatpush.bf16.msra.mxu0 %v2420
        %2773 = vmatmul.bf16.gmra.mxu0 %v2414
        %v2774 = vpop.f32.mrf.mxu0
        %v2775 = vadd.f32 %v2604, %v2774
        %v2776 = vpop.f32.mrf.mxu0
        %v2777 = vadd.f32 %v2609, %v2776
        %2778 = vdwg.mxu0
        %2779 = vmatpush.bf16.msra.mxu0 %v2540
        %2780 = vmatpush.bf16.msra.mxu0 %v2532
        %2781 = vmatpush.bf16.msra.mxu0 %v2524
        %2782 = vmatpush.bf16.msra.mxu0 %v2516
        %2783 = vmatpush.bf16.msra.mxu0 %v2508
        %2784 = vmatpush.bf16.msra.mxu0 %v2500
        %2785 = vmatpush.bf16.msra.mxu0 %v2492
        %2786 = vmatpush.bf16.msra.mxu0 %v2484
        %2787 = vmatmul.bf16.gmra.mxu0 %v2415
        %v2788 = vpop.f32.mrf.mxu0
        %v2789 = vadd.f32 %v2775, %v2788
        %v2790 = vpop.f32.mrf.mxu0
        %v2791 = vadd.f32 %v2777, %v2790
        %2792 = vdwg.mxu0
        %2793 = vmatpush.bf16.msra.mxu0 0
        %2794 = vmatpush.bf16.msra.mxu0 %v2625
        %2795 = vmatpush.bf16.msra.mxu0 %v2588
        %2796 = vmatpush.bf16.msra.mxu0 %v2580
        %2797 = vmatpush.bf16.msra.mxu0 %v2572
        %2798 = vmatpush.bf16.msra.mxu0 %v2564
        %2799 = vmatpush.bf16.msra.mxu0 %v2556
        %2800 = vmatpush.bf16.msra.mxu0 %v2548
        %2801 = vmatmul.bf16.gmra.mxu0 %v2613
        %v2802 = vpop.f32.mrf.mxu0
        %v2803 = vadd.f32 %v2789, %v2802
        %v2804 = vpop.f32.mrf.mxu0
        %v2805 = vadd.f32 %v2791, %v2804
        %2806 = vdwg.mxu0
        %2807 = vmatpush.bf16.msra.mxu0 %v2477
        %2808 = vmatpush.bf16.msra.mxu0 %v2469
        %2809 = vmatpush.bf16.msra.mxu0 %v2461
        %2810 = vmatpush.bf16.msra.mxu0 %v2453
        %2811 = vmatpush.bf16.msra.mxu0 %v2445
        %2812 = vmatpush.bf16.msra.mxu0 %v2437
        %2813 = vmatpush.bf16.msra.mxu0 %v2429
        %2814 = vmatpush.bf16.msra.mxu0 %v2421
        %2815 = vmatmul.bf16.gmra.mxu0 %v2414
        %v2816 = vpop.f32.mrf.mxu0
        %v2817 = vadd.f32 %v2604, %v2816
        %v2818 = vpop.f32.mrf.mxu0
        %v2819 = vadd.f32 %v2609, %v2818
        %2820 = vdwg.mxu0
        %2821 = vmatpush.bf16.msra.mxu0 %v2541
        %2822 = vmatpush.bf16.msra.mxu0 %v2533
        %2823 = vmatpush.bf16.msra.mxu0 %v2525
        %2824 = vmatpush.bf16.msra.mxu0 %v2517
        %2825 = vmatpush.bf16.msra.mxu0 %v2509
        %2826 = vmatpush.bf16.msra.mxu0 %v2501
        %2827 = vmatpush.bf16.msra.mxu0 %v2493
        %2828 = vmatpush.bf16.msra.mxu0 %v2485
        %2829 = vmatmul.bf16.gmra.mxu0 %v2415
        %v2830 = vpop.f32.mrf.mxu0
        %v2831 = vadd.f32 %v2817, %v2830
        %v2832 = vpop.f32.mrf.mxu0
        %v2833 = vadd.f32 %v2819, %v2832
        %2834 = vdwg.mxu0
        %2835 = vmatpush.bf16.msra.mxu0 0
        %2836 = vmatpush.bf16.msra.mxu0 %v2628
        %2837 = vmatpush.bf16.msra.mxu0 %v2589
        %2838 = vmatpush.bf16.msra.mxu0 %v2581
        %2839 = vmatpush.bf16.msra.mxu0 %v2573
        %2840 = vmatpush.bf16.msra.mxu0 %v2565
        %2841 = vmatpush.bf16.msra.mxu0 %v2557
        %2842 = vmatpush.bf16.msra.mxu0 %v2549
        %2843 = vmatmul.bf16.gmra.mxu0 %v2613
        %v2844 = vpop.f32.mrf.mxu0
        %v2845 = vadd.f32 %v2831, %v2844
        %v2846 = vpop.f32.mrf.mxu0
        %v2847 = vadd.f32 %v2833, %v2846
        %2848 = vdwg.mxu0
        %2849 = vmatpush.bf16.msra.mxu0 %v2478
        %2850 = vmatpush.bf16.msra.mxu0 %v2470
        %2851 = vmatpush.bf16.msra.mxu0 %v2462
        %2852 = vmatpush.bf16.msra.mxu0 %v2454
        %2853 = vmatpush.bf16.msra.mxu0 %v2446
        %2854 = vmatpush.bf16.msra.mxu0 %v2438
        %2855 = vmatpush.bf16.msra.mxu0 %v2430
        %2856 = vmatpush.bf16.msra.mxu0 %v2422
        %2857 = vmatmul.bf16.gmra.mxu0 %v2414
        %v2858 = vpop.f32.mrf.mxu0
        %v2859 = vadd.f32 %v2604, %v2858
        %v2860 = vpop.f32.mrf.mxu0
        %v2861 = vadd.f32 %v2609, %v2860
        %2862 = vdwg.mxu0
        %2863 = vmatpush.bf16.msra.mxu0 %v2542
        %2864 = vmatpush.bf16.msra.mxu0 %v2534
        %2865 = vmatpush.bf16.msra.mxu0 %v2526
        %2866 = vmatpush.bf16.msra.mxu0 %v2518
        %2867 = vmatpush.bf16.msra.mxu0 %v2510
        %2868 = vmatpush.bf16.msra.mxu0 %v2502
        %2869 = vmatpush.bf16.msra.mxu0 %v2494
        %2870 = vmatpush.bf16.msra.mxu0 %v2486
        %2871 = vmatmul.bf16.gmra.mxu0 %v2415
        %v2872 = vpop.f32.mrf.mxu0
        %v2873 = vadd.f32 %v2859, %v2872
        %v2874 = vpop.f32.mrf.mxu0
        %v2875 = vadd.f32 %v2861, %v2874
        %2876 = vdwg.mxu0
        %2877 = vmatpush.bf16.msra.mxu0 0
        %2878 = vmatpush.bf16.msra.mxu0 %v2631
        %2879 = vmatpush.bf16.msra.mxu0 %v2590
        %2880 = vmatpush.bf16.msra.mxu0 %v2582
        %2881 = vmatpush.bf16.msra.mxu0 %v2574
        %2882 = vmatpush.bf16.msra.mxu0 %v2566
        %2883 = vmatpush.bf16.msra.mxu0 %v2558
        %2884 = vmatpush.bf16.msra.mxu0 %v2550
        %2885 = vmatmul.bf16.gmra.mxu0 %v2613
        %v2886 = vpop.f32.mrf.mxu0
        %v2887 = vadd.f32 %v2873, %v2886
        %v2888 = vpop.f32.mrf.mxu0
        %v2889 = vadd.f32 %v2875, %v2888
        %2890 = vdwg.mxu0
        %2891 = vmatpush.bf16.msra.mxu0 %v2479
        %2892 = vmatpush.bf16.msra.mxu0 %v2471
        %2893 = vmatpush.bf16.msra.mxu0 %v2463
        %2894 = vmatpush.bf16.msra.mxu0 %v2455
        %2895 = vmatpush.bf16.msra.mxu0 %v2447
        %2896 = vmatpush.bf16.msra.mxu0 %v2439
        %2897 = vmatpush.bf16.msra.mxu0 %v2431
        %2898 = vmatpush.bf16.msra.mxu0 %v2423
        %2899 = vmatmul.bf16.gmra.mxu0 %v2414
        %v2900 = vpop.f32.mrf.mxu0
        %v2901 = vadd.f32 %v2604, %v2900
        %v2902 = vpop.f32.mrf.mxu0
        %v2903 = vadd.f32 %v2609, %v2902
        %2904 = vdwg.mxu0
        %2905 = vmatpush.bf16.msra.mxu0 %v2543
        %2906 = vmatpush.bf16.msra.mxu0 %v2535
        %2907 = vmatpush.bf16.msra.mxu0 %v2527
        %2908 = vmatpush.bf16.msra.mxu0 %v2519
        %2909 = vmatpush.bf16.msra.mxu0 %v2511
        %2910 = vmatpush.bf16.msra.mxu0 %v2503
        %2911 = vmatpush.bf16.msra.mxu0 %v2495
        %2912 = vmatpush.bf16.msra.mxu0 %v2487
        %2913 = vmatmul.bf16.gmra.mxu0 %v2415
        %v2914 = vpop.f32.mrf.mxu0
        %v2915 = vadd.f32 %v2901, %v2914
        %v2916 = vpop.f32.mrf.mxu0
        %v2917 = vadd.f32 %v2903, %v2916
        %2918 = vdwg.mxu0
        %2919 = vmatpush.bf16.msra.mxu0 0
        %2920 = vmatpush.bf16.msra.mxu0 %v2634
        %2921 = vmatpush.bf16.msra.mxu0 %v2591
        %2922 = vmatpush.bf16.msra.mxu0 %v2583
        %2923 = vmatpush.bf16.msra.mxu0 %v2575
        %2924 = vmatpush.bf16.msra.mxu0 %v2567
        %2925 = vmatpush.bf16.msra.mxu0 %v2559
        %2926 = vmatpush.bf16.msra.mxu0 %v2551
        %2927 = vmatmul.bf16.gmra.mxu0 %v2613
        %v2928 = vpop.f32.mrf.mxu0
        %v2929 = vadd.f32 %v2915, %v2928
        %v2930 = vpop.f32.mrf.mxu0
        %v2931 = vadd.f32 %v2917, %v2930
        %2932 = vdwg.mxu0
        %2933 = vmatpush.bf16.msra.mxu0 %v2480
        %2934 = vmatpush.bf16.msra.mxu0 %v2472
        %2935 = vmatpush.bf16.msra.mxu0 %v2464
        %2936 = vmatpush.bf16.msra.mxu0 %v2456
        %2937 = vmatpush.bf16.msra.mxu0 %v2448
        %2938 = vmatpush.bf16.msra.mxu0 %v2440
        %2939 = vmatpush.bf16.msra.mxu0 %v2432
        %2940 = vmatpush.bf16.msra.mxu0 %v2424
        %2941 = vmatmul.bf16.gmra.mxu0 %v2414
        %v2942 = vpop.f32.mrf.mxu0
        %v2943 = vadd.f32 %v2604, %v2942
        %v2944 = vpop.f32.mrf.mxu0
        %v2945 = vadd.f32 %v2609, %v2944
        %2946 = vdwg.mxu0
        %2947 = vmatpush.bf16.msra.mxu0 %v2544
        %2948 = vmatpush.bf16.msra.mxu0 %v2536
        %2949 = vmatpush.bf16.msra.mxu0 %v2528
        %2950 = vmatpush.bf16.msra.mxu0 %v2520
        %2951 = vmatpush.bf16.msra.mxu0 %v2512
        %2952 = vmatpush.bf16.msra.mxu0 %v2504
        %2953 = vmatpush.bf16.msra.mxu0 %v2496
        %2954 = vmatpush.bf16.msra.mxu0 %v2488
        %2955 = vmatmul.bf16.gmra.mxu0 %v2415
        %v2956 = vpop.f32.mrf.mxu0
        %v2957 = vadd.f32 %v2943, %v2956
        %v2958 = vpop.f32.mrf.mxu0
        %v2959 = vadd.f32 %v2945, %v2958
        %2960 = vdwg.mxu0
        %2961 = vmatpush.bf16.msra.mxu0 0
        %2962 = vmatpush.bf16.msra.mxu0 %v2637
        %2963 = vmatpush.bf16.msra.mxu0 %v2592
        %2964 = vmatpush.bf16.msra.mxu0 %v2584
        %2965 = vmatpush.bf16.msra.mxu0 %v2576
        %2966 = vmatpush.bf16.msra.mxu0 %v2568
        %2967 = vmatpush.bf16.msra.mxu0 %v2560
        %2968 = vmatpush.bf16.msra.mxu0 %v2552
        %2969 = vmatmul.bf16.gmra.mxu0 %v2613
        %v2970 = vpop.f32.mrf.mxu0
        %v2971 = vadd.f32 %v2957, %v2970
        %v2972 = vpop.f32.mrf.mxu0
        %v2973 = vadd.f32 %v2959, %v2972
        %2974 = vdwg.mxu0
        %v2975 = vmax.f32 %v2677, 0.0
        %v2976 = vmax.f32 %v2719, 0.0
        %v2977 = vmax.f32 %v2761, 0.0
        %v2978 = vmax.f32 %v2803, 0.0
        %v2979 = vmax.f32 %v2845, 0.0
        %v2980 = vmax.f32 %v2887, 0.0
        %v2981 = vmax.f32 %v2929, 0.0
        %v2982 = vmax.f32 %v2971, 0.0
        %v2983 = vmax.f32 %v2679, 0.0
        %v2984 = vmax.f32 %v2721, 0.0
        %v2985 = vmax.f32 %v2763, 0.0
        %v2986 = vmax.f32 %v2805, 0.0
        %v2987 = vmax.f32 %v2847, 0.0
        %v2988 = vmax.f32 %v2889, 0.0
        %v2989 = vmax.f32 %v2931, 0.0
        %v2990 = vmax.f32 %v2973, 0.0
        %2991 = vrot.lane.b32.xlu0 %v2975, 17
        %v2992 = vpop.permute.xlu0 %2991
        %2993 = vrot.lane.b32.xlu0 %v2983, 17
        %v2994 = vpop.permute.xlu0 %2993
        %2995 = vrot.lane.b32.xlu0 %v2976, 17
        %v2996 = vpop.permute.xlu0 %2995
        %2997 = vrot.lane.b32.xlu0 %v2984, 17
        %v2998 = vpop.permute.xlu0 %2997
        %2999 = vrot.lane.b32.xlu0 %v2977, 17
        %v3000 = vpop.permute.xlu0 %2999
        %3001 = vrot.lane.b32.xlu0 %v2985, 17
        %v3002 = vpop.permute.xlu0 %3001
        %3003 = vrot.lane.b32.xlu0 %v2978, 17
        %v3004 = vpop.permute.xlu0 %3003
        %3005 = vrot.lane.b32.xlu0 %v2986, 17
        %v3006 = vpop.permute.xlu0 %3005
        %3007 = vrot.lane.b32.xlu0 %v2979, 17
        %v3008 = vpop.permute.xlu0 %3007
        %3009 = vrot.lane.b32.xlu0 %v2987, 17
        %v3010 = vpop.permute.xlu0 %3009
        %3011 = vrot.lane.b32.xlu0 %v2980, 17
        %v3012 = vpop.permute.xlu0 %3011
        %3013 = vrot.lane.b32.xlu0 %v2988, 17
        %v3014 = vpop.permute.xlu0 %3013
        %3015 = vrot.lane.b32.xlu0 %v2981, 17
        %v3016 = vpop.permute.xlu0 %3015
        %3017 = vrot.lane.b32.xlu0 %v2989, 17
        %v3018 = vpop.permute.xlu0 %3017
        %3019 = vrot.lane.b32.xlu0 %v2982, 17
        %v3020 = vpop.permute.xlu0 %3019
        %3021 = vrot.lane.b32.xlu0 %v2990, 17
        %v3022 = vpop.permute.xlu0 %3021
        %v3023 = vsel %vm1039, %v3016, %v3020
        %v3024 = vsel %vm1039, %v3018, %v3022
        %v3025 = vsel %vm1039, %v3012, %v3016
        %v3026 = vsel %vm1039, %v3014, %v3018
        %v3027 = vsel %vm1039, %v3008, %v3012
        %v3028 = vsel %vm1039, %v3010, %v3014
        %v3029 = vsel %vm1039, %v3004, %v3008
        %v3030 = vsel %vm1039, %v3006, %v3010
        %v3031 = vsel %vm1039, %v3000, %v3004
        %v3032 = vsel %vm1039, %v3002, %v3006
        %v3033 = vsel %vm1039, %v2996, %v3000
        %v3034 = vsel %vm1039, %v2998, %v3002
        %v3035 = vsel %vm1039, %v2992, %v2996
        %v3036 = vsel %vm1039, %v2994, %v2998
        %v3037 = vsel %vm1039, %v3020, %v2992
        %v3038 = vsel %vm1039, %v3022, %v2994
        %v3039 = vmul.f32 %v3037, %v1084
        %v3040 = vmul.f32 %v3035, %v1085
        %v3041 = vmul.f32 %v3033, %v1086
        %v3042 = vmul.f32 %v3031, %v1087
        %v3043 = vmul.f32 %v3029, %v1088
        %v3044 = vmul.f32 %v3027, %v1089
        %v3045 = vmul.f32 %v3025, %v1090
        %v3046 = vmul.f32 %v3023, %v1091
        %v3047 = vmul.f32 %v3038, %v1084
        %v3048 = vmul.f32 %v3036, %v1085
        %v3049 = vmul.f32 %v3034, %v1086
        %v3050 = vmul.f32 %v3032, %v1087
        %v3051 = vmul.f32 %v3030, %v1088
        %v3052 = vmul.f32 %v3028, %v1089
        %v3053 = vmul.f32 %v3026, %v1090
        %v3054 = vmul.f32 %v3024, %v1091
        %3055 = vrot.lane.b32.xlu0 %v2975, 16
        %v3056 = vpop.permute.xlu0 %3055
        %3057 = vrot.lane.b32.xlu0 %v2983, 16
        %v3058 = vpop.permute.xlu0 %3057
        %3059 = vrot.lane.b32.xlu0 %v2976, 16
        %v3060 = vpop.permute.xlu0 %3059
        %3061 = vrot.lane.b32.xlu0 %v2984, 16
        %v3062 = vpop.permute.xlu0 %3061
        %3063 = vrot.lane.b32.xlu0 %v2977, 16
        %v3064 = vpop.permute.xlu0 %3063
        %3065 = vrot.lane.b32.xlu0 %v2985, 16
        %v3066 = vpop.permute.xlu0 %3065
        %3067 = vrot.lane.b32.xlu0 %v2978, 16
        %v3068 = vpop.permute.xlu0 %3067
        %3069 = vrot.lane.b32.xlu0 %v2986, 16
        %v3070 = vpop.permute.xlu0 %3069
        %3071 = vrot.lane.b32.xlu0 %v2979, 16
        %v3072 = vpop.permute.xlu0 %3071
        %3073 = vrot.lane.b32.xlu0 %v2987, 16
        %v3074 = vpop.permute.xlu0 %3073
        %3075 = vrot.lane.b32.xlu0 %v2980, 16
        %v3076 = vpop.permute.xlu0 %3075
        %3077 = vrot.lane.b32.xlu0 %v2988, 16
        %v3078 = vpop.permute.xlu0 %3077
        %3079 = vrot.lane.b32.xlu0 %v2981, 16
        %v3080 = vpop.permute.xlu0 %3079
        %3081 = vrot.lane.b32.xlu0 %v2989, 16
        %v3082 = vpop.permute.xlu0 %3081
        %3083 = vrot.lane.b32.xlu0 %v2982, 16
        %v3084 = vpop.permute.xlu0 %3083
        %3085 = vrot.lane.b32.xlu0 %v2990, 16
        %v3086 = vpop.permute.xlu0 %3085
        %v3087 = vsel %vm1220, %v3080, %v3084
        %v3088 = vsel %vm1220, %v3082, %v3086
        %v3089 = vsel %vm1220, %v3076, %v3080
        %v3090 = vsel %vm1220, %v3078, %v3082
        %v3091 = vsel %vm1220, %v3072, %v3076
        %v3092 = vsel %vm1220, %v3074, %v3078
        %v3093 = vsel %vm1220, %v3068, %v3072
        %v3094 = vsel %vm1220, %v3070, %v3074
        %v3095 = vsel %vm1220, %v3064, %v3068
        %v3096 = vsel %vm1220, %v3066, %v3070
        %v3097 = vsel %vm1220, %v3060, %v3064
        %v3098 = vsel %vm1220, %v3062, %v3066
        %v3099 = vsel %vm1220, %v3056, %v3060
        %v3100 = vsel %vm1220, %v3058, %v3062
        %v3101 = vsel %vm1220, %v3084, %v3056
        %v3102 = vsel %vm1220, %v3086, %v3058
        %v3103 = vmul.f32 %v3101, %v1266
        %v3104 = vmul.f32 %v3099, %v1267
        %v3105 = vmul.f32 %v3097, %v1268
        %v3106 = vmul.f32 %v3095, %v1269
        %v3107 = vmul.f32 %v3093, %v1270
        %v3108 = vmul.f32 %v3091, %v1271
        %v3109 = vmul.f32 %v3089, %v1272
        %v3110 = vmul.f32 %v3087, %v1273
        %v3111 = vmul.f32 %v3102, %v1266
        %v3112 = vmul.f32 %v3100, %v1267
        %v3113 = vmul.f32 %v3098, %v1268
        %v3114 = vmul.f32 %v3096, %v1269
        %v3115 = vmul.f32 %v3094, %v1270
        %v3116 = vmul.f32 %v3092, %v1271
        %v3117 = vmul.f32 %v3090, %v1272
        %v3118 = vmul.f32 %v3088, %v1273
        %3119 = vrot.lane.b32.xlu0 %v2975, 15
        %v3120 = vpop.permute.xlu0 %3119
        %3121 = vrot.lane.b32.xlu0 %v2983, 15
        %v3122 = vpop.permute.xlu0 %3121
        %3123 = vrot.lane.b32.xlu0 %v2976, 15
        %v3124 = vpop.permute.xlu0 %3123
        %3125 = vrot.lane.b32.xlu0 %v2984, 15
        %v3126 = vpop.permute.xlu0 %3125
        %3127 = vrot.lane.b32.xlu0 %v2977, 15
        %v3128 = vpop.permute.xlu0 %3127
        %3129 = vrot.lane.b32.xlu0 %v2985, 15
        %v3130 = vpop.permute.xlu0 %3129
        %3131 = vrot.lane.b32.xlu0 %v2978, 15
        %v3132 = vpop.permute.xlu0 %3131
        %3133 = vrot.lane.b32.xlu0 %v2986, 15
        %v3134 = vpop.permute.xlu0 %3133
        %3135 = vrot.lane.b32.xlu0 %v2979, 15
        %v3136 = vpop.permute.xlu0 %3135
        %3137 = vrot.lane.b32.xlu0 %v2987, 15
        %v3138 = vpop.permute.xlu0 %3137
        %3139 = vrot.lane.b32.xlu0 %v2980, 15
        %v3140 = vpop.permute.xlu0 %3139
        %3141 = vrot.lane.b32.xlu0 %v2988, 15
        %v3142 = vpop.permute.xlu0 %3141
        %3143 = vrot.lane.b32.xlu0 %v2981, 15
        %v3144 = vpop.permute.xlu0 %3143
        %3145 = vrot.lane.b32.xlu0 %v2989, 15
        %v3146 = vpop.permute.xlu0 %3145
        %3147 = vrot.lane.b32.xlu0 %v2982, 15
        %v3148 = vpop.permute.xlu0 %3147
        %3149 = vrot.lane.b32.xlu0 %v2990, 15
        %v3150 = vpop.permute.xlu0 %3149
        %v3151 = vsel %vm1402, %v3144, %v3148
        %v3152 = vsel %vm1402, %v3146, %v3150
        %v3153 = vsel %vm1402, %v3140, %v3144
        %v3154 = vsel %vm1402, %v3142, %v3146
        %v3155 = vsel %vm1402, %v3136, %v3140
        %v3156 = vsel %vm1402, %v3138, %v3142
        %v3157 = vsel %vm1402, %v3132, %v3136
        %v3158 = vsel %vm1402, %v3134, %v3138
        %v3159 = vsel %vm1402, %v3128, %v3132
        %v3160 = vsel %vm1402, %v3130, %v3134
        %v3161 = vsel %vm1402, %v3124, %v3128
        %v3162 = vsel %vm1402, %v3126, %v3130
        %v3163 = vsel %vm1402, %v3120, %v3124
        %v3164 = vsel %vm1402, %v3122, %v3126
        %v3165 = vsel %vm1402, %v3148, %v3120
        %v3166 = vsel %vm1402, %v3150, %v3122
        %v3167 = vmul.f32 %v3165, %v1448
        %v3168 = vmul.f32 %v3163, %v1449
        %v3169 = vmul.f32 %v3161, %v1450
        %v3170 = vmul.f32 %v3159, %v1451
        %v3171 = vmul.f32 %v3157, %v1452
        %v3172 = vmul.f32 %v3155, %v1453
        %v3173 = vmul.f32 %v3153, %v1454
        %v3174 = vmul.f32 %v3151, %v1455
        %v3175 = vmul.f32 %v3166, %v1448
        %v3176 = vmul.f32 %v3164, %v1449
        %v3177 = vmul.f32 %v3162, %v1450
        %v3178 = vmul.f32 %v3160, %v1451
        %v3179 = vmul.f32 %v3158, %v1452
        %v3180 = vmul.f32 %v3156, %v1453
        %v3181 = vmul.f32 %v3154, %v1454
        %v3182 = vmul.f32 %v3152, %v1455
        %3183 = vrot.lane.b32.xlu0 %v2975, 1
        %v3184 = vpop.permute.xlu0 %3183
        %3185 = vrot.lane.b32.xlu0 %v2983, 1
        %v3186 = vpop.permute.xlu0 %3185
        %3187 = vrot.lane.b32.xlu0 %v2976, 1
        %v3188 = vpop.permute.xlu0 %3187
        %3189 = vrot.lane.b32.xlu0 %v2984, 1
        %v3190 = vpop.permute.xlu0 %3189
        %3191 = vrot.lane.b32.xlu0 %v2977, 1
        %v3192 = vpop.permute.xlu0 %3191
        %3193 = vrot.lane.b32.xlu0 %v2985, 1
        %v3194 = vpop.permute.xlu0 %3193
        %3195 = vrot.lane.b32.xlu0 %v2978, 1
        %v3196 = vpop.permute.xlu0 %3195
        %3197 = vrot.lane.b32.xlu0 %v2986, 1
        %v3198 = vpop.permute.xlu0 %3197
        %3199 = vrot.lane.b32.xlu0 %v2979, 1
        %v3200 = vpop.permute.xlu0 %3199
        %3201 = vrot.lane.b32.xlu0 %v2987, 1
        %v3202 = vpop.permute.xlu0 %3201
        %3203 = vrot.lane.b32.xlu0 %v2980, 1
        %v3204 = vpop.permute.xlu0 %3203
        %3205 = vrot.lane.b32.xlu0 %v2988, 1
        %v3206 = vpop.permute.xlu0 %3205
        %3207 = vrot.lane.b32.xlu0 %v2981, 1
        %v3208 = vpop.permute.xlu0 %3207
        %3209 = vrot.lane.b32.xlu0 %v2989, 1
        %v3210 = vpop.permute.xlu0 %3209
        %3211 = vrot.lane.b32.xlu0 %v2982, 1
        %v3212 = vpop.permute.xlu0 %3211
        %3213 = vrot.lane.b32.xlu0 %v2990, 1
        %v3214 = vpop.permute.xlu0 %3213
        %v3215 = vsel %vm1584, %v3208, %v3212
        %v3216 = vsel %vm1584, %v3210, %v3214
        %v3217 = vsel %vm1584, %v3204, %v3208
        %v3218 = vsel %vm1584, %v3206, %v3210
        %v3219 = vsel %vm1584, %v3200, %v3204
        %v3220 = vsel %vm1584, %v3202, %v3206
        %v3221 = vsel %vm1584, %v3196, %v3200
        %v3222 = vsel %vm1584, %v3198, %v3202
        %v3223 = vsel %vm1584, %v3192, %v3196
        %v3224 = vsel %vm1584, %v3194, %v3198
        %v3225 = vsel %vm1584, %v3188, %v3192
        %v3226 = vsel %vm1584, %v3190, %v3194
        %v3227 = vsel %vm1584, %v3184, %v3188
        %v3228 = vsel %vm1584, %v3186, %v3190
        %v3229 = vsel %vm1584, %v3212, %v3184
        %v3230 = vsel %vm1584, %v3214, %v3186
        %v3231 = vmul.f32 %v3229, %v1630
        %v3232 = vmul.f32 %v3227, %v1631
        %v3233 = vmul.f32 %v3225, %v1632
        %v3234 = vmul.f32 %v3223, %v1633
        %v3235 = vmul.f32 %v3221, %v1634
        %v3236 = vmul.f32 %v3219, %v1635
        %v3237 = vmul.f32 %v3217, %v1636
        %v3238 = vmul.f32 %v3215, %v1637
        %v3239 = vmul.f32 %v3230, %v1630
        %v3240 = vmul.f32 %v3228, %v1631
        %v3241 = vmul.f32 %v3226, %v1632
        %v3242 = vmul.f32 %v3224, %v1633
        %v3243 = vmul.f32 %v3222, %v1634
        %v3244 = vmul.f32 %v3220, %v1635
        %v3245 = vmul.f32 %v3218, %v1636
        %v3246 = vmul.f32 %v3216, %v1637
        %3247 = vrot.lane.b32.xlu0 %v2975, 127
        %v3248 = vpop.permute.xlu0 %3247
        %3249 = vrot.lane.b32.xlu0 %v2983, 127
        %v3250 = vpop.permute.xlu0 %3249
        %3251 = vrot.lane.b32.xlu0 %v2976, 127
        %v3252 = vpop.permute.xlu0 %3251
        %3253 = vrot.lane.b32.xlu0 %v2984, 127
        %v3254 = vpop.permute.xlu0 %3253
        %3255 = vrot.lane.b32.xlu0 %v2977, 127
        %v3256 = vpop.permute.xlu0 %3255
        %3257 = vrot.lane.b32.xlu0 %v2985, 127
        %v3258 = vpop.permute.xlu0 %3257
        %3259 = vrot.lane.b32.xlu0 %v2978, 127
        %v3260 = vpop.permute.xlu0 %3259
        %3261 = vrot.lane.b32.xlu0 %v2986, 127
        %v3262 = vpop.permute.xlu0 %3261
        %3263 = vrot.lane.b32.xlu0 %v2979, 127
        %v3264 = vpop.permute.xlu0 %3263
        %3265 = vrot.lane.b32.xlu0 %v2987, 127
        %v3266 = vpop.permute.xlu0 %3265
        %3267 = vrot.lane.b32.xlu0 %v2980, 127
        %v3268 = vpop.permute.xlu0 %3267
        %3269 = vrot.lane.b32.xlu0 %v2988, 127
        %v3270 = vpop.permute.xlu0 %3269
        %3271 = vrot.lane.b32.xlu0 %v2981, 127
        %v3272 = vpop.permute.xlu0 %3271
        %3273 = vrot.lane.b32.xlu0 %v2989, 127
        %v3274 = vpop.permute.xlu0 %3273
        %3275 = vrot.lane.b32.xlu0 %v2982, 127
        %v3276 = vpop.permute.xlu0 %3275
        %3277 = vrot.lane.b32.xlu0 %v2990, 127
        %v3278 = vpop.permute.xlu0 %3277
        %v3279 = vsel %vm1766, %v3272, %v3276
        %v3280 = vsel %vm1766, %v3274, %v3278
        %v3281 = vsel %vm1766, %v3268, %v3272
        %v3282 = vsel %vm1766, %v3270, %v3274
        %v3283 = vsel %vm1766, %v3264, %v3268
        %v3284 = vsel %vm1766, %v3266, %v3270
        %v3285 = vsel %vm1766, %v3260, %v3264
        %v3286 = vsel %vm1766, %v3262, %v3266
        %v3287 = vsel %vm1766, %v3256, %v3260
        %v3288 = vsel %vm1766, %v3258, %v3262
        %v3289 = vsel %vm1766, %v3252, %v3256
        %v3290 = vsel %vm1766, %v3254, %v3258
        %v3291 = vsel %vm1766, %v3248, %v3252
        %v3292 = vsel %vm1766, %v3250, %v3254
        %v3293 = vsel %vm1766, %v3276, %v3248
        %v3294 = vsel %vm1766, %v3278, %v3250
        %v3295 = vmul.f32 %v3291, %v1812
        %v3296 = vmul.f32 %v3289, %v1813
        %v3297 = vmul.f32 %v3287, %v1814
        %v3298 = vmul.f32 %v3285, %v1815
        %v3299 = vmul.f32 %v3283, %v1816
        %v3300 = vmul.f32 %v3281, %v1817
        %v3301 = vmul.f32 %v3279, %v1818
        %v3302 = vmul.f32 %v3293, %v1819
        %v3303 = vmul.f32 %v3292, %v1812
        %v3304 = vmul.f32 %v3290, %v1813
        %v3305 = vmul.f32 %v3288, %v1814
        %v3306 = vmul.f32 %v3286, %v1815
        %v3307 = vmul.f32 %v3284, %v1816
        %v3308 = vmul.f32 %v3282, %v1817
        %v3309 = vmul.f32 %v3280, %v1818
        %v3310 = vmul.f32 %v3294, %v1819
        %3311 = vrot.lane.b32.xlu0 %v2975, 113
        %v3312 = vpop.permute.xlu0 %3311
        %3313 = vrot.lane.b32.xlu0 %v2983, 113
        %v3314 = vpop.permute.xlu0 %3313
        %3315 = vrot.lane.b32.xlu0 %v2976, 113
        %v3316 = vpop.permute.xlu0 %3315
        %3317 = vrot.lane.b32.xlu0 %v2984, 113
        %v3318 = vpop.permute.xlu0 %3317
        %3319 = vrot.lane.b32.xlu0 %v2977, 113
        %v3320 = vpop.permute.xlu0 %3319
        %3321 = vrot.lane.b32.xlu0 %v2985, 113
        %v3322 = vpop.permute.xlu0 %3321
        %3323 = vrot.lane.b32.xlu0 %v2978, 113
        %v3324 = vpop.permute.xlu0 %3323
        %3325 = vrot.lane.b32.xlu0 %v2986, 113
        %v3326 = vpop.permute.xlu0 %3325
        %3327 = vrot.lane.b32.xlu0 %v2979, 113
        %v3328 = vpop.permute.xlu0 %3327
        %3329 = vrot.lane.b32.xlu0 %v2987, 113
        %v3330 = vpop.permute.xlu0 %3329
        %3331 = vrot.lane.b32.xlu0 %v2980, 113
        %v3332 = vpop.permute.xlu0 %3331
        %3333 = vrot.lane.b32.xlu0 %v2988, 113
        %v3334 = vpop.permute.xlu0 %3333
        %3335 = vrot.lane.b32.xlu0 %v2981, 113
        %v3336 = vpop.permute.xlu0 %3335
        %3337 = vrot.lane.b32.xlu0 %v2989, 113
        %v3338 = vpop.permute.xlu0 %3337
        %3339 = vrot.lane.b32.xlu0 %v2982, 113
        %v3340 = vpop.permute.xlu0 %3339
        %3341 = vrot.lane.b32.xlu0 %v2990, 113
        %v3342 = vpop.permute.xlu0 %3341
        %v3343 = vsel %vm1948, %v3336, %v3340
        %v3344 = vsel %vm1948, %v3338, %v3342
        %v3345 = vsel %vm1948, %v3332, %v3336
        %v3346 = vsel %vm1948, %v3334, %v3338
        %v3347 = vsel %vm1948, %v3328, %v3332
        %v3348 = vsel %vm1948, %v3330, %v3334
        %v3349 = vsel %vm1948, %v3324, %v3328
        %v3350 = vsel %vm1948, %v3326, %v3330
        %v3351 = vsel %vm1948, %v3320, %v3324
        %v3352 = vsel %vm1948, %v3322, %v3326
        %v3353 = vsel %vm1948, %v3316, %v3320
        %v3354 = vsel %vm1948, %v3318, %v3322
        %v3355 = vsel %vm1948, %v3312, %v3316
        %v3356 = vsel %vm1948, %v3314, %v3318
        %v3357 = vsel %vm1948, %v3340, %v3312
        %v3358 = vsel %vm1948, %v3342, %v3314
        %v3359 = vmul.f32 %v3355, %v1994
        %v3360 = vmul.f32 %v3353, %v1995
        %v3361 = vmul.f32 %v3351, %v1996
        %v3362 = vmul.f32 %v3349, %v1997
        %v3363 = vmul.f32 %v3347, %v1998
        %v3364 = vmul.f32 %v3345, %v1999
        %v3365 = vmul.f32 %v3343, %v2000
        %v3366 = vmul.f32 %v3357, %v2001
        %v3367 = vmul.f32 %v3356, %v1994
        %v3368 = vmul.f32 %v3354, %v1995
        %v3369 = vmul.f32 %v3352, %v1996
        %v3370 = vmul.f32 %v3350, %v1997
        %v3371 = vmul.f32 %v3348, %v1998
        %v3372 = vmul.f32 %v3346, %v1999
        %v3373 = vmul.f32 %v3344, %v2000
        %v3374 = vmul.f32 %v3358, %v2001
        %3375 = vrot.lane.b32.xlu0 %v2975, 112
        %v3376 = vpop.permute.xlu0 %3375
        %3377 = vrot.lane.b32.xlu0 %v2983, 112
        %v3378 = vpop.permute.xlu0 %3377
        %3379 = vrot.lane.b32.xlu0 %v2976, 112
        %v3380 = vpop.permute.xlu0 %3379
        %3381 = vrot.lane.b32.xlu0 %v2984, 112
        %v3382 = vpop.permute.xlu0 %3381
        %3383 = vrot.lane.b32.xlu0 %v2977, 112
        %v3384 = vpop.permute.xlu0 %3383
        %3385 = vrot.lane.b32.xlu0 %v2985, 112
        %v3386 = vpop.permute.xlu0 %3385
        %3387 = vrot.lane.b32.xlu0 %v2978, 112
        %v3388 = vpop.permute.xlu0 %3387
        %3389 = vrot.lane.b32.xlu0 %v2986, 112
        %v3390 = vpop.permute.xlu0 %3389
        %3391 = vrot.lane.b32.xlu0 %v2979, 112
        %v3392 = vpop.permute.xlu0 %3391
        %3393 = vrot.lane.b32.xlu0 %v2987, 112
        %v3394 = vpop.permute.xlu0 %3393
        %3395 = vrot.lane.b32.xlu0 %v2980, 112
        %v3396 = vpop.permute.xlu0 %3395
        %3397 = vrot.lane.b32.xlu0 %v2988, 112
        %v3398 = vpop.permute.xlu0 %3397
        %3399 = vrot.lane.b32.xlu0 %v2981, 112
        %v3400 = vpop.permute.xlu0 %3399
        %3401 = vrot.lane.b32.xlu0 %v2989, 112
        %v3402 = vpop.permute.xlu0 %3401
        %3403 = vrot.lane.b32.xlu0 %v2982, 112
        %v3404 = vpop.permute.xlu0 %3403
        %3405 = vrot.lane.b32.xlu0 %v2990, 112
        %v3406 = vpop.permute.xlu0 %3405
        %v3407 = vsel %vm2130, %v3400, %v3404
        %v3408 = vsel %vm2130, %v3402, %v3406
        %v3409 = vsel %vm2130, %v3396, %v3400
        %v3410 = vsel %vm2130, %v3398, %v3402
        %v3411 = vsel %vm2130, %v3392, %v3396
        %v3412 = vsel %vm2130, %v3394, %v3398
        %v3413 = vsel %vm2130, %v3388, %v3392
        %v3414 = vsel %vm2130, %v3390, %v3394
        %v3415 = vsel %vm2130, %v3384, %v3388
        %v3416 = vsel %vm2130, %v3386, %v3390
        %v3417 = vsel %vm2130, %v3380, %v3384
        %v3418 = vsel %vm2130, %v3382, %v3386
        %v3419 = vsel %vm2130, %v3376, %v3380
        %v3420 = vsel %vm2130, %v3378, %v3382
        %v3421 = vsel %vm2130, %v3404, %v3376
        %v3422 = vsel %vm2130, %v3406, %v3378
        %v3423 = vmul.f32 %v3419, %v2176
        %v3424 = vmul.f32 %v3417, %v2177
        %v3425 = vmul.f32 %v3415, %v2178
        %v3426 = vmul.f32 %v3413, %v2179
        %v3427 = vmul.f32 %v3411, %v2180
        %v3428 = vmul.f32 %v3409, %v2181
        %v3429 = vmul.f32 %v3407, %v2182
        %v3430 = vmul.f32 %v3421, %v2183
        %v3431 = vmul.f32 %v3420, %v2176
        %v3432 = vmul.f32 %v3418, %v2177
        %v3433 = vmul.f32 %v3416, %v2178
        %v3434 = vmul.f32 %v3414, %v2179
        %v3435 = vmul.f32 %v3412, %v2180
        %v3436 = vmul.f32 %v3410, %v2181
        %v3437 = vmul.f32 %v3408, %v2182
        %v3438 = vmul.f32 %v3422, %v2183
        %3439 = vrot.lane.b32.xlu0 %v2975, 111
        %v3440 = vpop.permute.xlu0 %3439
        %3441 = vrot.lane.b32.xlu0 %v2983, 111
        %v3442 = vpop.permute.xlu0 %3441
        %3443 = vrot.lane.b32.xlu0 %v2976, 111
        %v3444 = vpop.permute.xlu0 %3443
        %3445 = vrot.lane.b32.xlu0 %v2984, 111
        %v3446 = vpop.permute.xlu0 %3445
        %3447 = vrot.lane.b32.xlu0 %v2977, 111
        %v3448 = vpop.permute.xlu0 %3447
        %3449 = vrot.lane.b32.xlu0 %v2985, 111
        %v3450 = vpop.permute.xlu0 %3449
        %3451 = vrot.lane.b32.xlu0 %v2978, 111
        %v3452 = vpop.permute.xlu0 %3451
        %3453 = vrot.lane.b32.xlu0 %v2986, 111
        %v3454 = vpop.permute.xlu0 %3453
        %3455 = vrot.lane.b32.xlu0 %v2979, 111
        %v3456 = vpop.permute.xlu0 %3455
        %3457 = vrot.lane.b32.xlu0 %v2987, 111
        %v3458 = vpop.permute.xlu0 %3457
        %3459 = vrot.lane.b32.xlu0 %v2980, 111
        %v3460 = vpop.permute.xlu0 %3459
        %3461 = vrot.lane.b32.xlu0 %v2988, 111
        %v3462 = vpop.permute.xlu0 %3461
        %3463 = vrot.lane.b32.xlu0 %v2981, 111
        %v3464 = vpop.permute.xlu0 %3463
        %3465 = vrot.lane.b32.xlu0 %v2989, 111
        %v3466 = vpop.permute.xlu0 %3465
        %3467 = vrot.lane.b32.xlu0 %v2982, 111
        %v3468 = vpop.permute.xlu0 %3467
        %3469 = vrot.lane.b32.xlu0 %v2990, 111
        %v3470 = vpop.permute.xlu0 %3469
        %v3471 = vsel %vm2312, %v3464, %v3468
        %v3472 = vsel %vm2312, %v3466, %v3470
        %v3473 = vsel %vm2312, %v3460, %v3464
        %v3474 = vsel %vm2312, %v3462, %v3466
        %v3475 = vsel %vm2312, %v3456, %v3460
        %v3476 = vsel %vm2312, %v3458, %v3462
        %v3477 = vsel %vm2312, %v3452, %v3456
        %v3478 = vsel %vm2312, %v3454, %v3458
        %v3479 = vsel %vm2312, %v3448, %v3452
        %v3480 = vsel %vm2312, %v3450, %v3454
        %v3481 = vsel %vm2312, %v3444, %v3448
        %v3482 = vsel %vm2312, %v3446, %v3450
        %v3483 = vsel %vm2312, %v3440, %v3444
        %v3484 = vsel %vm2312, %v3442, %v3446
        %v3485 = vsel %vm2312, %v3468, %v3440
        %v3486 = vsel %vm2312, %v3470, %v3442
        %v3487 = vmul.f32 %v3483, %v2358
        %v3488 = vmul.f32 %v3481, %v2359
        %v3489 = vmul.f32 %v3479, %v2360
        %v3490 = vmul.f32 %v3477, %v2361
        %v3491 = vmul.f32 %v3475, %v2362
        %v3492 = vmul.f32 %v3473, %v2363
        %v3493 = vmul.f32 %v3471, %v2364
        %v3494 = vmul.f32 %v3485, %v2365
        %v3495 = vmul.f32 %v3484, %v2358
        %v3496 = vmul.f32 %v3482, %v2359
        %v3497 = vmul.f32 %v3480, %v2360
        %v3498 = vmul.f32 %v3478, %v2361
        %v3499 = vmul.f32 %v3476, %v2362
        %v3500 = vmul.f32 %v3474, %v2363
        %v3501 = vmul.f32 %v3472, %v2364
        %v3502 = vmul.f32 %v3486, %v2365
        %v3503 = vpack.c.bf16 %v325, %v323
        %v3504 = vpack.c.bf16 %v326, %v324
        %v3505 = vpack.c.bf16 %v3047, %v3039
        %v3506 = vpack.c.bf16 %v3048, %v3040
        %v3507 = vpack.c.bf16 %v3049, %v3041
        %v3508 = vpack.c.bf16 %v3050, %v3042
        %v3509 = vpack.c.bf16 %v3051, %v3043
        %v3510 = vpack.c.bf16 %v3052, %v3044
        %v3511 = vpack.c.bf16 %v3053, %v3045
        %v3512 = vpack.c.bf16 %v3054, %v3046
        %v3513 = vpack.c.bf16 %v3111, %v3103
        %v3514 = vpack.c.bf16 %v3112, %v3104
        %v3515 = vpack.c.bf16 %v3113, %v3105
        %v3516 = vpack.c.bf16 %v3114, %v3106
        %v3517 = vpack.c.bf16 %v3115, %v3107
        %v3518 = vpack.c.bf16 %v3116, %v3108
        %v3519 = vpack.c.bf16 %v3117, %v3109
        %v3520 = vpack.c.bf16 %v3118, %v3110
        %v3521 = vpack.c.bf16 %v3175, %v3167
        %v3522 = vpack.c.bf16 %v3176, %v3168
        %v3523 = vpack.c.bf16 %v3177, %v3169
        %v3524 = vpack.c.bf16 %v3178, %v3170
        %v3525 = vpack.c.bf16 %v3179, %v3171
        %v3526 = vpack.c.bf16 %v3180, %v3172
        %v3527 = vpack.c.bf16 %v3181, %v3173
        %v3528 = vpack.c.bf16 %v3182, %v3174
        %v3529 = vpack.c.bf16 %v3239, %v3231
        %v3530 = vpack.c.bf16 %v3240, %v3232
        %v3531 = vpack.c.bf16 %v3241, %v3233
        %v3532 = vpack.c.bf16 %v3242, %v3234
        %v3533 = vpack.c.bf16 %v3243, %v3235
        %v3534 = vpack.c.bf16 %v3244, %v3236
        %v3535 = vpack.c.bf16 %v3245, %v3237
        %v3536 = vpack.c.bf16 %v3246, %v3238
        %v3537 = vpack.c.bf16 %v2983, %v2975
        %v3538 = vpack.c.bf16 %v2984, %v2976
        %v3539 = vpack.c.bf16 %v2985, %v2977
        %v3540 = vpack.c.bf16 %v2986, %v2978
        %v3541 = vpack.c.bf16 %v2987, %v2979
        %v3542 = vpack.c.bf16 %v2988, %v2980
        %v3543 = vpack.c.bf16 %v2989, %v2981
        %v3544 = vpack.c.bf16 %v2990, %v2982
        %v3545 = vpack.c.bf16 %v3303, %v3295
        %v3546 = vpack.c.bf16 %v3304, %v3296
        %v3547 = vpack.c.bf16 %v3305, %v3297
        %v3548 = vpack.c.bf16 %v3306, %v3298
        %v3549 = vpack.c.bf16 %v3307, %v3299
        %v3550 = vpack.c.bf16 %v3308, %v3300
        %v3551 = vpack.c.bf16 %v3309, %v3301
        %v3552 = vpack.c.bf16 %v3310, %v3302
        %v3553 = vpack.c.bf16 %v3367, %v3359
        %v3554 = vpack.c.bf16 %v3368, %v3360
        %v3555 = vpack.c.bf16 %v3369, %v3361
        %v3556 = vpack.c.bf16 %v3370, %v3362
        %v3557 = vpack.c.bf16 %v3371, %v3363
        %v3558 = vpack.c.bf16 %v3372, %v3364
        %v3559 = vpack.c.bf16 %v3373, %v3365
        %v3560 = vpack.c.bf16 %v3374, %v3366
        %v3561 = vpack.c.bf16 %v3431, %v3423
        %v3562 = vpack.c.bf16 %v3432, %v3424
        %v3563 = vpack.c.bf16 %v3433, %v3425
        %v3564 = vpack.c.bf16 %v3434, %v3426
        %v3565 = vpack.c.bf16 %v3435, %v3427
        %v3566 = vpack.c.bf16 %v3436, %v3428
        %v3567 = vpack.c.bf16 %v3437, %v3429
        %v3568 = vpack.c.bf16 %v3438, %v3430
        %v3569 = vpack.c.bf16 %v3495, %v3487
        %v3570 = vpack.c.bf16 %v3496, %v3488
        %v3571 = vpack.c.bf16 %v3497, %v3489
        %v3572 = vpack.c.bf16 %v3498, %v3490
        %v3573 = vpack.c.bf16 %v3499, %v3491
        %v3574 = vpack.c.bf16 %v3500, %v3492
        %v3575 = vpack.c.bf16 %v3501, %v3493
        %v3576 = vpack.c.bf16 %v3502, %v3494
        %3578 = vset.pattern.permute.xlu0 0
        %3579 = vperm.xlu0 %3578, %v358
        %v3580 = vpop.permute.xlu0 %3579
        %3583 = vset.pattern.permute.xlu0 0
        %3584 = vperm.xlu0 %3583, %v359
        %v3585 = vpop.permute.xlu0 %3584
        %vm3587 = vcmask 130048
        %v3589 = vsel %vm3587, %v3504, 0
        %3591 = vmatpush.bf16.msra.mxu0 %v3561
        %3592 = vmatpush.bf16.msra.mxu0 %v3553
        %3593 = vmatpush.bf16.msra.mxu0 %v3545
        %3594 = vmatpush.bf16.msra.mxu0 %v3537
        %3595 = vmatpush.bf16.msra.mxu0 %v3529
        %3596 = vmatpush.bf16.msra.mxu0 %v3521
        %3597 = vmatpush.bf16.msra.mxu0 %v3513
        %3598 = vmatpush.bf16.msra.mxu0 %v3505
        %3599 = vmatmul.bf16.gmra.mxu0 %v3503
        %v3600 = vpop.f32.mrf.mxu0
        %v3601 = vadd.f32 %v3580, %v3600
        %v3602 = vpop.f32.mrf.mxu0
        %v3603 = vadd.f32 %v3585, %v3602
        %3604 = vdwg.mxu0
        %3605 = vmatpush.bf16.msra.mxu0 0
        %3606 = vmatpush.bf16.msra.mxu0 0
        %3607 = vmatpush.bf16.msra.mxu0 0
        %3608 = vmatpush.bf16.msra.mxu0 0
        %3609 = vmatpush.bf16.msra.mxu0 0
        %3610 = vmatpush.bf16.msra.mxu0 0
        %3611 = vmatpush.bf16.msra.mxu0 0
        %3612 = vmatpush.bf16.msra.mxu0 %v3569
        %3613 = vmatmul.bf16.gmra.mxu0 %v3589
        %v3614 = vpop.f32.mrf.mxu0
        %v3615 = vadd.f32 %v3601, %v3614
        %v3616 = vpop.f32.mrf.mxu0
        %v3617 = vadd.f32 %v3603, %v3616
        %3618 = vdwg.mxu0
        %3619 = vmatpush.bf16.msra.mxu0 %v3562
        %3620 = vmatpush.bf16.msra.mxu0 %v3554
        %3621 = vmatpush.bf16.msra.mxu0 %v3546
        %3622 = vmatpush.bf16.msra.mxu0 %v3538
        %3623 = vmatpush.bf16.msra.mxu0 %v3530
        %3624 = vmatpush.bf16.msra.mxu0 %v3522
        %3625 = vmatpush.bf16.msra.mxu0 %v3514
        %3626 = vmatpush.bf16.msra.mxu0 %v3506
        %3627 = vmatmul.bf16.gmra.mxu0 %v3503
        %v3628 = vpop.f32.mrf.mxu0
        %v3629 = vadd.f32 %v3580, %v3628
        %v3630 = vpop.f32.mrf.mxu0
        %v3631 = vadd.f32 %v3585, %v3630
        %3632 = vdwg.mxu0
        %3633 = vmatpush.bf16.msra.mxu0 0
        %3634 = vmatpush.bf16.msra.mxu0 0
        %3635 = vmatpush.bf16.msra.mxu0 0
        %3636 = vmatpush.bf16.msra.mxu0 0
        %3637 = vmatpush.bf16.msra.mxu0 0
        %3638 = vmatpush.bf16.msra.mxu0 0
        %3639 = vmatpush.bf16.msra.mxu0 0
        %3640 = vmatpush.bf16.msra.mxu0 %v3570
        %3641 = vmatmul.bf16.gmra.mxu0 %v3589
        %v3642 = vpop.f32.mrf.mxu0
        %v3643 = vadd.f32 %v3629, %v3642
        %v3644 = vpop.f32.mrf.mxu0
        %v3645 = vadd.f32 %v3631, %v3644
        %3646 = vdwg.mxu0
        %3647 = vmatpush.bf16.msra.mxu0 %v3563
        %3648 = vmatpush.bf16.msra.mxu0 %v3555
        %3649 = vmatpush.bf16.msra.mxu0 %v3547
        %3650 = vmatpush.bf16.msra.mxu0 %v3539
        %3651 = vmatpush.bf16.msra.mxu0 %v3531
        %3652 = vmatpush.bf16.msra.mxu0 %v3523
        %3653 = vmatpush.bf16.msra.mxu0 %v3515
        %3654 = vmatpush.bf16.msra.mxu0 %v3507
        %3655 = vmatmul.bf16.gmra.mxu0 %v3503
        %v3656 = vpop.f32.mrf.mxu0
        %v3657 = vadd.f32 %v3580, %v3656
        %v3658 = vpop.f32.mrf.mxu0
        %v3659 = vadd.f32 %v3585, %v3658
        %3660 = vdwg.mxu0
        %3661 = vmatpush.bf16.msra.mxu0 0
        %3662 = vmatpush.bf16.msra.mxu0 0
        %3663 = vmatpush.bf16.msra.mxu0 0
        %3664 = vmatpush.bf16.msra.mxu0 0
        %3665 = vmatpush.bf16.msra.mxu0 0
        %3666 = vmatpush.bf16.msra.mxu0 0
        %3667 = vmatpush.bf16.msra.mxu0 0
        %3668 = vmatpush.bf16.msra.mxu0 %v3571
        %3669 = vmatmul.bf16.gmra.mxu0 %v3589
        %v3670 = vpop.f32.mrf.mxu0
        %v3671 = vadd.f32 %v3657, %v3670
        %v3672 = vpop.f32.mrf.mxu0
        %v3673 = vadd.f32 %v3659, %v3672
        %3674 = vdwg.mxu0
        %3675 = vmatpush.bf16.msra.mxu0 %v3564
        %3676 = vmatpush.bf16.msra.mxu0 %v3556
        %3677 = vmatpush.bf16.msra.mxu0 %v3548
        %3678 = vmatpush.bf16.msra.mxu0 %v3540
        %3679 = vmatpush.bf16.msra.mxu0 %v3532
        %3680 = vmatpush.bf16.msra.mxu0 %v3524
        %3681 = vmatpush.bf16.msra.mxu0 %v3516
        %3682 = vmatpush.bf16.msra.mxu0 %v3508
        %3683 = vmatmul.bf16.gmra.mxu0 %v3503
        %v3684 = vpop.f32.mrf.mxu0
        %v3685 = vadd.f32 %v3580, %v3684
        %v3686 = vpop.f32.mrf.mxu0
        %v3687 = vadd.f32 %v3585, %v3686
        %3688 = vdwg.mxu0
        %3689 = vmatpush.bf16.msra.mxu0 0
        %3690 = vmatpush.bf16.msra.mxu0 0
        %3691 = vmatpush.bf16.msra.mxu0 0
        %3692 = vmatpush.bf16.msra.mxu0 0
        %3693 = vmatpush.bf16.msra.mxu0 0
        %3694 = vmatpush.bf16.msra.mxu0 0
        %3695 = vmatpush.bf16.msra.mxu0 0
        %3696 = vmatpush.bf16.msra.mxu0 %v3572
        %3697 = vmatmul.bf16.gmra.mxu0 %v3589
        %v3698 = vpop.f32.mrf.mxu0
        %v3699 = vadd.f32 %v3685, %v3698
        %v3700 = vpop.f32.mrf.mxu0
        %v3701 = vadd.f32 %v3687, %v3700
        %3702 = vdwg.mxu0
        %3703 = vmatpush.bf16.msra.mxu0 %v3565
        %3704 = vmatpush.bf16.msra.mxu0 %v3557
        %3705 = vmatpush.bf16.msra.mxu0 %v3549
        %3706 = vmatpush.bf16.msra.mxu0 %v3541
        %3707 = vmatpush.bf16.msra.mxu0 %v3533
        %3708 = vmatpush.bf16.msra.mxu0 %v3525
        %3709 = vmatpush.bf16.msra.mxu0 %v3517
        %3710 = vmatpush.bf16.msra.mxu0 %v3509
        %3711 = vmatmul.bf16.gmra.mxu0 %v3503
        %v3712 = vpop.f32.mrf.mxu0
        %v3713 = vadd.f32 %v3580, %v3712
        %v3714 = vpop.f32.mrf.mxu0
        %v3715 = vadd.f32 %v3585, %v3714
        %3716 = vdwg.mxu0
        %3717 = vmatpush.bf16.msra.mxu0 0
        %3718 = vmatpush.bf16.msra.mxu0 0
        %3719 = vmatpush.bf16.msra.mxu0 0
        %3720 = vmatpush.bf16.msra.mxu0 0
        %3721 = vmatpush.bf16.msra.mxu0 0
        %3722 = vmatpush.bf16.msra.mxu0 0
        %3723 = vmatpush.bf16.msra.mxu0 0
        %3724 = vmatpush.bf16.msra.mxu0 %v3573
        %3725 = vmatmul.bf16.gmra.mxu0 %v3589
        %v3726 = vpop.f32.mrf.mxu0
        %v3727 = vadd.f32 %v3713, %v3726
        %v3728 = vpop.f32.mrf.mxu0
        %v3729 = vadd.f32 %v3715, %v3728
        %3730 = vdwg.mxu0
        %3731 = vmatpush.bf16.msra.mxu0 %v3566
        %3732 = vmatpush.bf16.msra.mxu0 %v3558
        %3733 = vmatpush.bf16.msra.mxu0 %v3550
        %3734 = vmatpush.bf16.msra.mxu0 %v3542
        %3735 = vmatpush.bf16.msra.mxu0 %v3534
        %3736 = vmatpush.bf16.msra.mxu0 %v3526
        %3737 = vmatpush.bf16.msra.mxu0 %v3518
        %3738 = vmatpush.bf16.msra.mxu0 %v3510
        %3739 = vmatmul.bf16.gmra.mxu0 %v3503
        %v3740 = vpop.f32.mrf.mxu0
        %v3741 = vadd.f32 %v3580, %v3740
        %v3742 = vpop.f32.mrf.mxu0
        %v3743 = vadd.f32 %v3585, %v3742
        %3744 = vdwg.mxu0
        %3745 = vmatpush.bf16.msra.mxu0 0
        %3746 = vmatpush.bf16.msra.mxu0 0
        %3747 = vmatpush.bf16.msra.mxu0 0
        %3748 = vmatpush.bf16.msra.mxu0 0
        %3749 = vmatpush.bf16.msra.mxu0 0
        %3750 = vmatpush.bf16.msra.mxu0 0
        %3751 = vmatpush.bf16.msra.mxu0 0
        %3752 = vmatpush.bf16.msra.mxu0 %v3574
        %3753 = vmatmul.bf16.gmra.mxu0 %v3589
        %v3754 = vpop.f32.mrf.mxu0
        %v3755 = vadd.f32 %v3741, %v3754
        %v3756 = vpop.f32.mrf.mxu0
        %v3757 = vadd.f32 %v3743, %v3756
        %3758 = vdwg.mxu0
        %3759 = vmatpush.bf16.msra.mxu0 %v3567
        %3760 = vmatpush.bf16.msra.mxu0 %v3559
        %3761 = vmatpush.bf16.msra.mxu0 %v3551
        %3762 = vmatpush.bf16.msra.mxu0 %v3543
        %3763 = vmatpush.bf16.msra.mxu0 %v3535
        %3764 = vmatpush.bf16.msra.mxu0 %v3527
        %3765 = vmatpush.bf16.msra.mxu0 %v3519
        %3766 = vmatpush.bf16.msra.mxu0 %v3511
        %3767 = vmatmul.bf16.gmra.mxu0 %v3503
        %v3768 = vpop.f32.mrf.mxu0
        %v3769 = vadd.f32 %v3580, %v3768
        %v3770 = vpop.f32.mrf.mxu0
        %v3771 = vadd.f32 %v3585, %v3770
        %3772 = vdwg.mxu0
        %3773 = vmatpush.bf16.msra.mxu0 0
        %3774 = vmatpush.bf16.msra.mxu0 0
        %3775 = vmatpush.bf16.msra.mxu0 0
        %3776 = vmatpush.bf16.msra.mxu0 0
        %3777 = vmatpush.bf16.msra.mxu0 0
        %3778 = vmatpush.bf16.msra.mxu0 0
        %3779 = vmatpush.bf16.msra.mxu0 0
        %3780 = vmatpush.bf16.msra.mxu0 %v3575
        %3781 = vmatmul.bf16.gmra.mxu0 %v3589
        %v3782 = vpop.f32.mrf.mxu0
        %v3783 = vadd.f32 %v3769, %v3782
        %v3784 = vpop.f32.mrf.mxu0
        %v3785 = vadd.f32 %v3771, %v3784
        %3786 = vdwg.mxu0
        %3787 = vmatpush.bf16.msra.mxu0 %v3568
        %3788 = vmatpush.bf16.msra.mxu0 %v3560
        %3789 = vmatpush.bf16.msra.mxu0 %v3552
        %3790 = vmatpush.bf16.msra.mxu0 %v3544
        %3791 = vmatpush.bf16.msra.mxu0 %v3536
        %3792 = vmatpush.bf16.msra.mxu0 %v3528
        %3793 = vmatpush.bf16.msra.mxu0 %v3520
        %3794 = vmatpush.bf16.msra.mxu0 %v3512
        %3795 = vmatmul.bf16.gmra.mxu0 %v3503
        %v3796 = vpop.f32.mrf.mxu0
        %v3797 = vadd.f32 %v3580, %v3796
        %v3798 = vpop.f32.mrf.mxu0
        %v3799 = vadd.f32 %v3585, %v3798
        %3800 = vdwg.mxu0
        %3801 = vmatpush.bf16.msra.mxu0 0
        %3802 = vmatpush.bf16.msra.mxu0 0
        %3803 = vmatpush.bf16.msra.mxu0 0
        %3804 = vmatpush.bf16.msra.mxu0 0
        %3805 = vmatpush.bf16.msra.mxu0 0
        %3806 = vmatpush.bf16.msra.mxu0 0
        %3807 = vmatpush.bf16.msra.mxu0 0
        %3808 = vmatpush.bf16.msra.mxu0 %v3576
        %3809 = vmatmul.bf16.gmra.mxu0 %v3589
        %v3810 = vpop.f32.mrf.mxu0
        %v3811 = vadd.f32 %v3797, %v3810
        %v3812 = vpop.f32.mrf.mxu0
        %v3813 = vadd.f32 %v3799, %v3812
        %3814 = vdwg.mxu0
        %v3815 = vmax.f32 %v3615, 0.0
        %v3816 = vmax.f32 %v3643, 0.0
        %v3817 = vmax.f32 %v3671, 0.0
        %v3818 = vmax.f32 %v3699, 0.0
        %v3819 = vmax.f32 %v3727, 0.0
        %v3820 = vmax.f32 %v3755, 0.0
        %v3821 = vmax.f32 %v3783, 0.0
        %v3822 = vmax.f32 %v3811, 0.0
        %v3823 = vmax.f32 %v3617, 0.0
        %v3824 = vmax.f32 %v3645, 0.0
        %v3825 = vmax.f32 %v3673, 0.0
        %v3826 = vmax.f32 %v3701, 0.0
        %v3827 = vmax.f32 %v3729, 0.0
        %v3828 = vmax.f32 %v3757, 0.0
        %v3829 = vmax.f32 %v3785, 0.0
        %v3830 = vmax.f32 %v3813, 0.0
        %3832 = vset.pattern.permute.xlu0 0
        %3833 = vperm.xlu0 %3832, %v360
        %v3834 = vpop.permute.xlu0 %3833
        %3837 = vset.pattern.permute.xlu0 0
        %3838 = vperm.xlu0 %3837, %v361
        %v3839 = vpop.permute.xlu0 %3838
        %v3841 = vmul.f32 %v3815, %v3834
        %v3842 = vmul.f32 %v3816, %v3834
        %v3843 = vmul.f32 %v3817, %v3834
        %v3844 = vmul.f32 %v3818, %v3834
        %v3845 = vmul.f32 %v3819, %v3834
        %v3846 = vmul.f32 %v3820, %v3834
        %v3847 = vmul.f32 %v3821, %v3834
        %v3848 = vmul.f32 %v3822, %v3834
        %v3849 = vmul.f32 %v3823, %v3839
        %v3850 = vmul.f32 %v3824, %v3839
        %v3851 = vmul.f32 %v3825, %v3839
        %v3852 = vmul.f32 %v3826, %v3839
        %v3853 = vmul.f32 %v3827, %v3839
        %v3854 = vmul.f32 %v3828, %v3839
        %v3855 = vmul.f32 %v3829, %v3839
        %v3856 = vmul.f32 %v3830, %v3839
        %v3857 = vadd.f32 %v3841, %v3849
        %v3858 = vrot.slane %v3857, 4
        %v3859 = vadd.f32 %v3857, %v3858
        %v3860 = vrot.slane %v3859, 2
        %v3861 = vadd.f32 %v3859, %v3860
        %v3862 = vrot.slane %v3861, 1
        %v3863 = vadd.f32 %v3861, %v3862
        %v3864 = vadd.f32 %v3842, %v3850
        %v3865 = vrot.slane %v3864, 4
        %v3866 = vadd.f32 %v3864, %v3865
        %v3867 = vrot.slane %v3866, 2
        %v3868 = vadd.f32 %v3866, %v3867
        %v3869 = vrot.slane %v3868, 1
        %v3870 = vadd.f32 %v3868, %v3869
        %v3871 = vadd.f32 %v3843, %v3851
        %v3872 = vrot.slane %v3871, 4
        %v3873 = vadd.f32 %v3871, %v3872
        %v3874 = vrot.slane %v3873, 2
        %v3875 = vadd.f32 %v3873, %v3874
        %v3876 = vrot.slane %v3875, 1
        %v3877 = vadd.f32 %v3875, %v3876
        %v3878 = vadd.f32 %v3844, %v3852
        %v3879 = vrot.slane %v3878, 4
        %v3880 = vadd.f32 %v3878, %v3879
        %v3881 = vrot.slane %v3880, 2
        %v3882 = vadd.f32 %v3880, %v3881
        %v3883 = vrot.slane %v3882, 1
        %v3884 = vadd.f32 %v3882, %v3883
        %v3885 = vadd.f32 %v3845, %v3853
        %v3886 = vrot.slane %v3885, 4
        %v3887 = vadd.f32 %v3885, %v3886
        %v3888 = vrot.slane %v3887, 2
        %v3889 = vadd.f32 %v3887, %v3888
        %v3890 = vrot.slane %v3889, 1
        %v3891 = vadd.f32 %v3889, %v3890
        %v3892 = vadd.f32 %v3846, %v3854
        %v3893 = vrot.slane %v3892, 4
        %v3894 = vadd.f32 %v3892, %v3893
        %v3895 = vrot.slane %v3894, 2
        %v3896 = vadd.f32 %v3894, %v3895
        %v3897 = vrot.slane %v3896, 1
        %v3898 = vadd.f32 %v3896, %v3897
        %v3899 = vadd.f32 %v3847, %v3855
        %v3900 = vrot.slane %v3899, 4
        %v3901 = vadd.f32 %v3899, %v3900
        %v3902 = vrot.slane %v3901, 2
        %v3903 = vadd.f32 %v3901, %v3902
        %v3904 = vrot.slane %v3903, 1
        %v3905 = vadd.f32 %v3903, %v3904
        %v3906 = vadd.f32 %v3848, %v3856
        %v3907 = vrot.slane %v3906, 4
        %v3908 = vadd.f32 %v3906, %v3907
        %v3909 = vrot.slane %v3908, 2
        %v3910 = vadd.f32 %v3908, %v3909
        %v3911 = vrot.slane %v3910, 1
        %v3912 = vadd.f32 %v3910, %v3911
        %3914 = vset.pattern.permute.xlu0 0
        %3915 = vperm.xlu0 %3914, %v362
        %v3916 = vpop.permute.xlu0 %3915
        %v3918 = vadd.f32 %v3863, %v3916
        %v3919 = vadd.f32 %v3870, %v3916
        %v3920 = vadd.f32 %v3877, %v3916
        %v3921 = vadd.f32 %v3884, %v3916
        %v3922 = vadd.f32 %v3891, %v3916
        %v3923 = vadd.f32 %v3898, %v3916
        %v3924 = vadd.f32 %v3905, %v3916
        %v3925 = vadd.f32 %v3912, %v3916
        %v3934 = vrot.slane %v3919, 7
        %v3935 = vrot.slane %v3920, 6
        %v3936 = vrot.slane %v3921, 5
        %v3937 = vrot.slane %v3922, 4
        %v3938 = vrot.slane %v3923, 3
        %v3939 = vrot.slane %v3924, 2
        %v3940 = vrot.slane %v3925, 1
        %vm3941 = vcmask 1040384
        %v3942 = vsel %vm3941, %v3918, %v3934
        %vm3943 = vcmask 1042434
        %v3944 = vsel %vm3943, %v3935, %v3936
        %vm3945 = vcmask 1041408
        %v3946 = vsel %vm3945, %v3942, %v3944
        %vm3947 = vcmask 1044484
        %v3948 = vsel %vm3947, %v3937, %v3938
        %vm3949 = vcmask 1046534
        %v3950 = vsel %vm3949, %v3939, %v3940
        %vm3951 = vcmask 1045508
        %v3952 = vsel %vm3951, %v3948, %v3950
        %v3953 = vsel %vm397, %v3946, %v3952
        %3955 = vst [vmem:[%s309] sm:$0xff] %v3953
        %s3956 = smul.u32 8, %s16
        %p3957 = scmp.lt.s32.totalorder %s3956, 15
        %s3958 = scalar_select %p3957, %s3956, 15
        %s3959 = scalar_lea.vmem %s5, %s3958
        // Predicated region
        $region79: #{eam_forward.1} parent=73 // pred_check
          %p3960 = pneg %p149
        $region80: #{eam_forward.1} parent=73 // pred_check_branch
          %3962 = sbr.rel (%p3960) target = $region82
        $region81: #{eam_forward.1} parent=73 // pred_region
          %s3963 = smul.u32 8, %s16
        $region82: #{eam_forward.1} parent=73 // pred_fallthru
          _
      $region74: #{eam_forward.1} parent=5 // pred_fallthru
        _
      %p3964 = scmp.le.s32.totalorder 2, %s11
      // Predicated region
      $region83: #{eam_forward.1} parent=5 // pred_check
        %p3965 = pneg %p3964
      $region84: #{eam_forward.1} parent=5 // pred_check_branch
        %3967 = sbr.rel (%p3965) target = $region86
      $region85: #{eam_forward.1} parent=5 // pred_region
        %s3968 = ssub.s32 %s11, 2
        // Predicated region
        $region87: #{eam_forward.1} parent=85 // pred_check
          %p3969 = pneg %p155
        $region88: #{eam_forward.1} parent=85 // pred_check_branch
          %3971 = sbr.rel (%p3969) target = $region90
        $region89: #{eam_forward.1} parent=85 // pred_region
          %s3972 = smul.u32 8, %s17
          %p3973 = scmp.lt.s32.totalorder %s3972, 15
          %s3974 = scalar_select %p3973, %s3972, 15
          %s3975 = scalar_lea.vmem %s5, %s3974
        $region90: #{eam_forward.1} parent=85 // pred_fallthru
          _
      $region86: #{eam_forward.1} parent=5 // pred_fallthru
        _
    $region6: #{eam_forward.1} parent=1 // loop_footer
      %s15 = sadd.s32 1, %s11
    $region7: #{eam_forward.1} parent=1 // loop_footer_branch
      %10 = sbr.rel target = $region3
    $region8: #{eam_forward.1} parent=1 // loop_exit
      _

</llo_original>
